<compile_context>
chip_gen: v6e
topology: v6e:2x2x1
jax: 0.10.0
libtpu: 0.0.40
codegen_flags: <defaults>
</compile_context>

<pallas_src>
import functools
import math

import jax
import jax.numpy as jnp
from jax.experimental import pallas as pl
from jax.experimental.pallas import tpu as pltpu

LN_EPS = 1e-5
BN_EPS = 1e-5
_LANE = 128
_VMEM_LIMIT = 48 * 1024 * 1024            # <= v7x 64 MiB/TC; ample headroom on v5e/v6e
_G_RESIDENT_MAX_BYTES = 8 * 1024 * 1024   # VMEM-resident g slab cap (v7x-safe incl. buffering)


# ----------------------------- kernels --------------------------------------


def encode_kernel(x_ref, w_in_ref, b_in_ref, ln0_g_ref, ln0_b_ref,
                  w_qkv_ref, b_qkv_ref,
                  z0_ref, q_ref, v_ref, g0_ref, kvs_ref, stats_ref,
                  *, hidden, n_true, tm):
    """Row-tiled input projections + per-row-tile partial attention reductions.

    The global reductions (k^T v, sum_k, ||q||^2, ||k||^2) are emitted as per-row-tile
    partial sums so the row axis stays "parallel" (both v7x TensorCores can run it);
    the tiny cross-tile reduce happens in JAX glue.
    """
    i = pl.program_id(0)

    # rows >= n_true are zero padding: mask them out of every global reduction
    # and out of the rows that later feed the A @ g contraction.
    rows = i * tm + jax.lax.broadcasted_iota(jnp.int32, (tm, 1), 0)
    valid = (rows < n_true).astype(jnp.float32)

    x = x_ref[...]                                                     # bf16 [tm, cin]
    hg = jnp.dot(x, w_in_ref[...], preferred_element_type=jnp.float32) + b_in_ref[...]
    h = hg[:, :hidden]                                                 # TransConv fc
    g = hg[:, hidden:]                                                 # GraphConv fc (BN folded)

    # --- TransConv input block: LayerNorm -> ReLU (f32 math, bf16 storage) ---
    mu = jnp.mean(h, axis=-1, keepdims=True)
    d = h - mu
    var = jnp.mean(d * d, axis=-1, keepdims=True)
    h = d * jax.lax.rsqrt(var + LN_EPS) * ln0_g_ref[...] + ln0_b_ref[...]
    h = jnp.maximum(h, 0.0)
    h_bf = h.astype(jnp.bfloat16)
    z0_ref[...] = h_bf

    # --- fused q/k/v projection ----------------------------------------------
    qkv = jnp.dot(h_bf, w_qkv_ref[...],
                  preferred_element_type=jnp.float32) + b_qkv_ref[...]
    q = qkv[:, :hidden] * valid
    k = qkv[:, hidden:2 * hidden] * valid
    v = qkv[:, 2 * hidden:] * valid
    q_ref[...] = q.astype(jnp.bfloat16)
    v_ref[...] = v.astype(jnp.bfloat16)

    # --- GraphConv input block: (folded BN) -> ReLU ---------------------------
    g0_ref[...] = (jnp.maximum(g, 0.0) * valid).astype(jnp.bfloat16)

    # --- per-row-tile partial attention reductions -----------------------------
    kvs_ref[0] = jax.lax.dot_general(               # k^T v without materializing k.T
        k.astype(jnp.bfloat16), v.astype(jnp.bfloat16),
        dimension_numbers=(((0,), (0,)), ((), ())),
        preferred_element_type=jnp.float32)
    ksum = jnp.sum(k, axis=0, keepdims=True)
    qsq = jnp.sum(q * q, axis=0, keepdims=True)
    ksq = jnp.sum(k * k, axis=0, keepdims=True)
    stats_ref[0] = jnp.concatenate([ksum, qsq, ksq], axis=0)


def trans_graph1_kernel(a0_ref, g0k_ref, z0_ref, q_ref, v_ref, g0i_ref,
                        kvs_ref, ksum_ref, w1_ref, b1_ref, ln1_g_ref, ln1_b_ref,
                        xt_ref, g1_ref, acc_ref, *, n_nodes, alpha, tk, g_resident):
    """A0 @ g0 (tiled contraction) + attention finalize + graph layer 1."""
    k = pl.program_id(1)
    nk = pl.num_programs(1)

    @pl.when(k == 0)
    def _init():
        acc_ref[...] = jnp.zeros_like(acc_ref)

    if g_resident:   # whole g0 slab lives in VMEM; slice the contraction rows locally
        g_blk = g0k_ref[pl.ds(pl.multiple_of(k * tk, tk), tk), :]
    else:            # streamed (tk, hidden) block per k step
        g_blk = g0k_ref[...]
    acc_ref[...] += jnp.dot(a0_ref[...], g_blk, preferred_element_type=jnp.float32)

    @pl.when(k == nk - 1)
    def _finalize():
        # ---- TransConv layer: global linear attention + residual + LN + ReLU
        q = q_ref[...].astype(jnp.float32)       # bf16 storage -> f32 elementwise math
        v = v_ref[...].astype(jnp.float32)
        att_num = jnp.dot(q_ref[...], kvs_ref[...],
                          preferred_element_type=jnp.float32) + n_nodes * v
        att_den = jnp.sum(q * ksum_ref[...], axis=-1, keepdims=True) + n_nodes
        attn = att_num * pl.reciprocal(att_den, approx=True)
        h = alpha * attn + (1.0 - alpha) * z0_ref[...].astype(jnp.float32)
        mu = jnp.mean(h, axis=-1, keepdims=True)
        d = h - mu
        var = jnp.mean(d * d, axis=-1, keepdims=True)
        h = d * jax.lax.rsqrt(var + LN_EPS) * ln1_g_ref[...] + ln1_b_ref[...]
        xt_ref[...] = jnp.maximum(h, 0.0).astype(xt_ref.dtype)

        # ---- GraphConv layer 1: W (BN folded) -> ReLU -> residual
        t = jnp.dot(acc_ref[...].astype(jnp.bfloat16), w1_ref[...],
                    preferred_element_type=jnp.float32) + b1_ref[...]
        t = jnp.maximum(t, 0.0) + g0i_ref[...].astype(jnp.float32)
        g1_ref[...] = t.astype(jnp.bfloat16)


def graph2_fc_kernel(a1_ref, g1k_ref, g1i_ref, xt_ref, w2_ref, b2_ref,
                     wf_t_ref, wf_g_ref, b_fc_ref, out_ref, acc_ref,
                     *, tk, g_resident):
    """A1 @ g1 (tiled contraction) + graph layer 2 + split final fc + tanh."""
    k = pl.program_id(1)
    nk = pl.num_programs(1)

    @pl.when(k == 0)
    def _init():
        acc_ref[...] = jnp.zeros_like(acc_ref)

    if g_resident:
        g_blk = g1k_ref[pl.ds(pl.multiple_of(k * tk, tk), tk), :]
    else:
        g_blk = g1k_ref[...]
    acc_ref[...] += jnp.dot(a1_ref[...], g_blk, preferred_element_type=jnp.float32)

    @pl.when(k == nk - 1)
    def _finalize():
        t = jnp.dot(acc_ref[...].astype(jnp.bfloat16), w2_ref[...],
                    preferred_element_type=jnp.float32) + b2_ref[...]
        g2 = jnp.maximum(t, 0.0) + g1i_ref[...].astype(jnp.float32)
        # fc on concat([x_trans, x_graph]) expressed as a split matmul (no concat)
        out = (jnp.dot(xt_ref[...], wf_t_ref[...],
                       preferred_element_type=jnp.float32)
               + jnp.dot(g2.astype(jnp.bfloat16), wf_g_ref[...],
                         preferred_element_type=jnp.float32)
               + b_fc_ref[...])
        out_ref[...] = jnp.tanh(out)


# ----------------------------- wrapper ---------------------------------------


def _round_up(x, m):
    return (x + m - 1) // m * m


def _pad2(a, shape):
    return jnp.pad(a, [(0, t - s) for s, t in zip(a.shape, shape)])


def _whole(a):
    nd = a.ndim
    return pl.BlockSpec(a.shape, lambda *_: (0,) * nd)


def sgformer_forward(x, a0, a1, pp, *, alpha=0.5, tm=512, tk=512):
    """Run the SGFormer forward (eval mode) with tiled Pallas kernels."""
    f32, bf16 = jnp.float32, jnp.bfloat16
    n, cin = x.shape
    hidden = pp["ln0_g"].shape[-1]
    out_c = pp["b_fc"].shape[-1]
    assert hidden % _LANE == 0, "hidden_channels must be a multiple of 128"
    assert tm % 8 == 0 and tk % _LANE == 0, "tm multiple of 8, tk multiple of 128"
    assert max(tm, tk) % min(tm, tk) == 0, "tm / tk must divide each other"

    # pad N to one (largest) tile, not lcm -> padding waste bounded by one tile/axis
    n_pad = _round_up(n, max(tm, tk))
    cin_pad = _round_up(cin, _LANE)
    out_pad = _round_up(out_c, _LANE)
    nt, nk = n_pad // tm, n_pad // tk

    # Keep the contraction operand (g0 / g1) fully VMEM-resident when the slab is
    # small enough for v7x's 64 MiB VMEM; otherwise stream (tk, hidden) blocks.
    g_resident = (n_pad * hidden * 2) <= _G_RESIDENT_MAX_BYTES
    if g_resident:
        g_contraction_spec = pl.BlockSpec((n_pad, hidden), lambda i, k: (0, 0))
    else:
        g_contraction_spec = pl.BlockSpec((tk, hidden), lambda i, k: (k, 0))
    # A0/A1 stream: 3-deep buffering hides the long k==nk-1 finalize bubble.
    a_spec = pl.BlockSpec((tm, tk), lambda i, k: (i, k), pipeline_mode=pl.Buffered(3))

    def row_spec2(width):                     # per-row-tile operands in the 2-D grids
        return pl.BlockSpec((tm, width), lambda i, k: (i, 0))

    # -------- pad inputs / params to lane-aligned shapes; bf16 for MXU operands
    x_p = _pad2(x, (n_pad, cin_pad)).astype(bf16)
    a0_p = _pad2(a0, (n_pad, n_pad)).astype(bf16)
    a1_p = _pad2(a1, (n_pad, n_pad)).astype(bf16)
    w_in = _pad2(pp["w_in"], (cin_pad, 2 * hidden))
    w_fc_t = _pad2(pp["w_fc_t"], (hidden, out_pad))
    w_fc_g = _pad2(pp["w_fc_g"], (hidden, out_pad))
    b_fc = _pad2(pp["b_fc"], (1, out_pad))

    # -------- kernel 1: encode + partial attention reductions ------------------
    enc = pl.pallas_call(
        functools.partial(encode_kernel, hidden=hidden, n_true=n, tm=tm),
        grid=(nt,),
        in_specs=[
            pl.BlockSpec((tm, cin_pad), lambda i: (i, 0)),     # x
            _whole(w_in), _whole(pp["b_in"]),
            _whole(pp["ln0_g"]), _whole(pp["ln0_b"]),
            _whole(pp["w_qkv"]), _whole(pp["b_qkv"]),
        ],
        out_specs=[
            pl.BlockSpec((tm, hidden), lambda i: (i, 0)),      # z0 (bf16)
            pl.BlockSpec((tm, hidden), lambda i: (i, 0)),      # q  (bf16)
            pl.BlockSpec((tm, hidden), lambda i: (i, 0)),      # v  (bf16)
            pl.BlockSpec((tm, hidden), lambda i: (i, 0)),      # g0 (bf16)
            pl.BlockSpec((1, hidden, hidden), lambda i: (i, 0, 0)),  # partial k^T v
            pl.BlockSpec((1, 3, hidden), lambda i: (i, 0, 0)),       # partial [ksum;q^2;k^2]
        ],
        out_shape=[
            jax.ShapeDtypeStruct((n_pad, hidden), bf16),
            jax.ShapeDtypeStruct((n_pad, hidden), bf16),
            jax.ShapeDtypeStruct((n_pad, hidden), bf16),
            jax.ShapeDtypeStruct((n_pad, hidden), bf16),
            jax.ShapeDtypeStruct((nt, hidden, hidden), f32),
            jax.ShapeDtypeStruct((nt, 3, hidden), f32),
        ],
        compiler_params=pltpu.CompilerParams(
            dimension_semantics=("parallel",),     # partial sums -> no cross-tile dep
            vmem_limit_bytes=_VMEM_LIMIT),
        cost_estimate=pl.CostEstimate(
            flops=int(2 * n_pad * hidden * (2 * cin_pad + 4 * hidden)),
            transcendentals=int(n_pad),
            bytes_accessed=int(x_p.size * 2 + 4 * n_pad * hidden * 2
                               + nt * (hidden * hidden + 3 * hidden) * 4)),
    )
    z0, q, v, g0, kvs_p, stats_p = enc(
        x_p, w_in, pp["b_in"], pp["ln0_g"], pp["ln0_b"], pp["w_qkv"], pp["b_qkv"])

    # tiny glue: reduce per-tile partials and fold the global 1/(||q||_F*||k||_F)
    # scale into kvs / ksum so the attention kernel only does a bf16 dot + mul.
    kvs = jnp.sum(kvs_p, axis=0)
    stats = jnp.sum(stats_p, axis=0)
    scale = jax.lax.rsqrt(jnp.maximum(jnp.sum(stats[1]) * jnp.sum(stats[2]), 1e-30))
    kvs_s = (kvs * scale).astype(bf16)
    ksum_s = (stats[0:1] * scale).astype(f32)

    # -------- kernel 2: A0 @ g0 + attention finalize + graph layer 1 -----------
    l1 = pl.pallas_call(
        functools.partial(trans_graph1_kernel, n_nodes=float(n), alpha=float(alpha),
                          tk=tk, g_resident=g_resident),
        grid=(nt, nk),
        in_specs=[
            a_spec,                                            # A0 tile (3-buffered)
            g_contraction_spec,                                # g0 contraction rows / slab
            row_spec2(hidden),                                 # z0
            row_spec2(hidden),                                 # q
            row_spec2(hidden),                                 # v
            row_spec2(hidden),                                 # g0 residual rows
            _whole(kvs_s), _whole(ksum_s),
            _whole(pp["w1"]), _whole(pp["b1"]),
            _whole(pp["ln1_g"]), _whole(pp["ln1_b"]),
        ],
        out_specs=[
            row_spec2(hidden),                                 # x_trans (bf16)
            row_spec2(hidden),                                 # g1 (bf16)
        ],
        out_shape=[
            jax.ShapeDtypeStruct((n_pad, hidden), bf16),
            jax.ShapeDtypeStruct((n_pad, hidden), bf16),
        ],
        scratch_shapes=[pltpu.VMEM((tm, hidden), f32)],
        compiler_params=pltpu.CompilerParams(
            dimension_semantics=("parallel", "arbitrary"),
            vmem_limit_bytes=_VMEM_LIMIT),
        cost_estimate=pl.CostEstimate(
            flops=int(2 * n_pad * n_pad * hidden + 4 * n_pad * hidden * hidden),
            transcendentals=int(2 * n_pad),
            bytes_accessed=int(a0_p.size * 2
                               + (1 if g_resident else nt) * n_pad * hidden * 2
                               + 6 * n_pad * hidden * 2)),
    )
    x_trans, g1 = l1(a0_p, g0, z0, q, v, g0, kvs_s, ksum_s,
                     pp["w1"], pp["b1"], pp["ln1_g"], pp["ln1_b"])

    # -------- kernel 3: A1 @ g1 + graph layer 2 + final fc + tanh ---------------
    l2 = pl.pallas_call(
        functools.partial(graph2_fc_kernel, tk=tk, g_resident=g_resident),
        grid=(nt, nk),
        in_specs=[
            a_spec,                                            # A1 tile (3-buffered)
            g_contraction_spec,                                # g1 contraction rows / slab
            row_spec2(hidden),                                 # g1 residual rows
            row_spec2(hidden),                                 # x_trans
            _whole(pp["w2"]), _whole(pp["b2"]),
            _whole(w_fc_t), _whole(w_fc_g), _whole(b_fc),
        ],
        out_specs=pl.BlockSpec((tm, out_pad), lambda i, k: (i, 0)),   # lane-dense output
        out_shape=jax.ShapeDtypeStruct((n_pad, out_pad), f32),
        scratch_shapes=[pltpu.VMEM((tm, hidden), f32)],
        compiler_params=pltpu.CompilerParams(
            dimension_semantics=("parallel", "arbitrary"),
            vmem_limit_bytes=_VMEM_LIMIT),
        cost_estimate=pl.CostEstimate(
            flops=int(2 * n_pad * n_pad * hidden
                      + 2 * n_pad * hidden * (hidden + 2 * out_pad)),
            transcendentals=int(n_pad * out_pad),
            bytes_accessed=int(a1_p.size * 2
                               + (1 if g_resident else nt) * n_pad * hidden * 2
                               + 2 * n_pad * hidden * 2 + n_pad * out_pad * 4)),
    )
    out = l2(a1_p, g1, g1, x_trans, pp["w2"], pp["b2"], w_fc_t, w_fc_g, b_fc)
    return out[:n, :out_c]


# ----------------------------- glue / params ---------------------------------


def build_adj_for_type(edge_index, edge_weight, edge_type, t, n):
    """Dense normalized adjacency for edges of type t (matches HeteroGraphConvLayer:
    the SAME in-degree vector indexed at col and row, literal to the PyTorch code)."""
    row, col = edge_index[0], edge_index[1]
    mask = (edge_type == t)
    deg = jnp.zeros((n,), jnp.float32).at[col].add(mask.astype(jnp.float32))
    d_norm_in = jnp.sqrt(1.0 / deg[col])
    d_norm_out = jnp.sqrt(1.0 / deg[row])
    value = edge_weight * d_norm_in * d_norm_out
    value = jnp.nan_to_num(value, nan=0.0, posinf=0.0, neginf=0.0)
    value = jnp.where(mask, value, 0.0)
    # SparseTensor(row=col, col=row, value) @ x  ->  A[col_e, row_e] += value_e
    return jnp.zeros((n, n), jnp.float32).at[col, row].add(value)


def make_raw_params(key, in_c, hidden, out_c):
    """PyTorch-style parameters for SGFormer (trans_layers=1, heads=1, gnn_layers=2)."""
    ks = jax.random.split(key, 16)

    def linear(k, fan_in, fan_out):
        k1, k2 = jax.random.split(k)
        bound = 1.0 / math.sqrt(fan_in)
        w = jax.random.uniform(k1, (fan_in, fan_out), jnp.float32, -bound, bound)
        b = jax.random.uniform(k2, (fan_out,), jnp.float32, -bound, bound)
        return w, b

    def bn(k, dim):
        k1, k2, k3, k4 = jax.random.split(k, 4)
        return dict(g=jax.random.uniform(k1, (dim,), jnp.float32, 0.5, 1.5),
                    b=0.1 * jax.random.normal(k2, (dim,), jnp.float32),
                    m=0.1 * jax.random.normal(k3, (dim,), jnp.float32),
                    v=jax.random.uniform(k4, (dim,), jnp.float32, 0.5, 1.5))

    p = {}
    p["tfc_w"], p["tfc_b"] = linear(ks[0], in_c, hidden)
    p["ln0_g"] = 1.0 + 0.05 * jax.random.normal(ks[1], (hidden,), jnp.float32)
    p["ln0_b"] = 0.05 * jax.random.normal(ks[2], (hidden,), jnp.float32)
    p["wq_w"], p["wq_b"] = linear(ks[3], hidden, hidden)
    p["wk_w"], p["wk_b"] = linear(ks[4], hidden, hidden)
    p["wv_w"], p["wv_b"] = linear(ks[5], hidden, hidden)
    p["ln1_g"] = 1.0 + 0.05 * jax.random.normal(ks[6], (hidden,), jnp.float32)
    p["ln1_b"] = 0.05 * jax.random.normal(ks[7], (hidden,), jnp.float32)
    p["gfc_w"], p["gfc_b"] = linear(ks[8], in_c, hidden)
    p["bn0"] = bn(ks[9], hidden)
    p["gw1_w"], p["gw1_b"] = linear(ks[10], hidden, hidden)
    p["bn1"] = bn(ks[11], hidden)
    p["gw2_w"], p["gw2_b"] = linear(ks[12], hidden, hidden)
    p["bn2"] = bn(ks[13], hidden)
    p["fc_w"], p["fc_b"] = linear(ks[14], 2 * hidden, out_c)
    return p


def prepare_params(raw):
    """Fold eval-mode BatchNorm into the preceding Linear, fuse/pack weights, cast
    every MXU operand to bf16 (biases / LN params stay f32)."""
    f32, bf16 = jnp.float32, jnp.bfloat16
    hidden = raw["ln0_g"].shape[0]

    def fold_bn(w, b, bn):
        s = bn["g"] / jnp.sqrt(bn["v"] + BN_EPS)
        return w * s[None, :], (b - bn["m"]) * s + bn["b"]

    gfc_w, gfc_b = fold_bn(raw["gfc_w"], raw["gfc_b"], raw["bn0"])
    w1, b1 = fold_bn(raw["gw1_w"], raw["gw1_b"], raw["bn1"])
    w2, b2 = fold_bn(raw["gw2_w"], raw["gw2_b"], raw["bn2"])

    row = lambda a: a[None, :].astype(f32)
    return dict(
        w_in=jnp.concatenate([raw["tfc_w"], gfc_w], axis=1).astype(bf16),
        b_in=row(jnp.concatenate([raw["tfc_b"], gfc_b])),
        ln0_g=row(raw["ln0_g"]), ln0_b=row(raw["ln0_b"]),
        w_qkv=jnp.concatenate([raw["wq_w"], raw["wk_w"], raw["wv_w"]], axis=1).astype(bf16),
        b_qkv=row(jnp.concatenate([raw["wq_b"], raw["wk_b"], raw["wv_b"]])),
        ln1_g=row(raw["ln1_g"]), ln1_b=row(raw["ln1_b"]),
        w1=w1.astype(bf16), b1=row(b1),
        w2=w2.astype(bf16), b2=row(b2),
        w_fc_t=raw["fc_w"][:hidden].astype(bf16),
        w_fc_g=raw["fc_w"][hidden:].astype(bf16),
        b_fc=row(raw["fc_b"]),
    )


def sgformer_reference(x, a0, a1, pp, *, alpha=0.5):
    """Pure-JAX eval-mode reference (literal module math) on the same folded / bf16-cast
    parameters, mirroring the kernels' bf16 activation-storage points."""
    f32, bf16 = jnp.float32, jnp.bfloat16
    n = x.shape[0]
    hidden = pp["ln0_g"].shape[-1]

    def dot(a, b):
        return jnp.dot(a.astype(bf16), b.astype(bf16), preferred_element_type=f32)

    def ln(v, g, b):
        mu = v.mean(-1, keepdims=True)
        var = ((v - mu) ** 2).mean(-1, keepdims=True)
        return (v - mu) * jax.lax.rsqrt(var + LN_EPS) * g + b

    hg = dot(x, pp["w_in"]) + pp["b_in"]
    h = hg[:, :hidden]
    g0 = jnp.maximum(hg[:, hidden:], 0.0).astype(bf16)

    # --- TransConv branch ---
    z0 = jnp.maximum(ln(h, pp["ln0_g"], pp["ln0_b"]), 0.0).astype(bf16)
    qkv = dot(z0, pp["w_qkv"]) + pp["b_qkv"]
    q, k, v = qkv[:, :hidden], qkv[:, hidden:2 * hidden], qkv[:, 2 * hidden:]
    q_s = q.astype(bf16).astype(f32)      # kernels store q / v in bf16
    v_s = v.astype(bf16).astype(f32)
    qn = q_s / jnp.sqrt(jnp.sum(q * q))
    kn = k / jnp.sqrt(jnp.sum(k * k))
    kvs = dot(kn.T, v)
    num = dot(qn, kvs) + n * v_s
    den = jnp.sum(qn * jnp.sum(kn, axis=0, keepdims=True), axis=-1, keepdims=True) + n
    h = alpha * (num / den) + (1.0 - alpha) * z0.astype(f32)
    x_trans = jnp.maximum(ln(h, pp["ln1_g"], pp["ln1_b"]), 0.0).astype(bf16)

    # --- AlternatingGraphConv branch ---
    ag = dot(a0, g0)
    g1 = (jnp.maximum(dot(ag, pp["w1"]) + pp["b1"], 0.0) + g0.astype(f32)).astype(bf16)
    ag = dot(a1, g1)
    g2 = jnp.maximum(dot(ag, pp["w2"]) + pp["b2"], 0.0) + g1.astype(f32)

    out = dot(x_trans, pp["w_fc_t"]) + dot(g2, pp["w_fc_g"]) + pp["b_fc"]
    return jnp.tanh(out)


# ----------------------------- demo ------------------------------------------


if __name__ == "__main__":
    # small demo: N=600 -> n_pad=1024 with default tm=tk=512 (2 row tiles, 2x2 layer grid),
    # hidden=128 (lane-dense)
    N, IN_C, HID, OUT_C, E = 600, 12, 128, 4, 2400

    key = jax.random.PRNGKey(0)
    k_x, k_row, k_col, k_w, k_p = jax.random.split(key, 5)

    x = jax.random.normal(k_x, (N, IN_C), jnp.float32)
    row = jax.random.randint(k_row, (E,), 0, N)
    col = jax.random.randint(k_col, (E,), 0, N)
    edge_index = jnp.stack([row, col])
    edge_type = jnp.arange(E, dtype=jnp.int32) % 2
    edge_weight = jax.random.uniform(k_w, (E,), jnp.float32, 0.5, 1.5)

    a0 = build_adj_for_type(edge_index, edge_weight, edge_type, 0, N)
    a1 = build_adj_for_type(edge_index, edge_weight, edge_type, 1, N)

    raw = make_raw_params(k_p, IN_C, HID, OUT_C)
    pp = prepare_params(raw)

    out = sgformer_forward(x, a0, a1, pp, alpha=0.5)
    out = jax.block_until_ready(out)

    ref = sgformer_reference(x, a0, a1, pp, alpha=0.5)
    assert out.shape == (N, OUT_C)
    assert bool(jnp.all(jnp.isfinite(out)))
    err = float(jnp.max(jnp.abs(out - ref)))
    assert err < 2e-2, f"kernel != reference (max abs err {err})"
    print("KERNEL_OK")
</pallas_src>

<mosaic_0001>
module attributes {stable_mosaic.version = 11 : i64} {
  func.func @encode_kernel(%arg0: i32, %arg1: memref<512x128xbf16, #tpu.memory_space<vmem>>, %arg2: memref<128x256xbf16, #tpu.memory_space<vmem>>, %arg3: memref<1x256xf32, #tpu.memory_space<vmem>>, %arg4: memref<1x128xf32, #tpu.memory_space<vmem>>, %arg5: memref<1x128xf32, #tpu.memory_space<vmem>>, %arg6: memref<128x384xbf16, #tpu.memory_space<vmem>>, %arg7: memref<1x384xf32, #tpu.memory_space<vmem>>, %arg8: memref<512x128xbf16, #tpu.memory_space<vmem>>, %arg9: memref<512x128xbf16, #tpu.memory_space<vmem>>, %arg10: memref<512x128xbf16, #tpu.memory_space<vmem>>, %arg11: memref<512x128xbf16, #tpu.memory_space<vmem>>, %arg12: memref<1x128x128xf32, #tpu.memory_space<vmem>>, %arg13: memref<1x3x128xf32, #tpu.memory_space<vmem>>) attributes {dimension_semantics = [#tpu.dimension_semantics<parallel>], iteration_bounds = array<i64: 2>, scalar_prefetch = 0 : i64, scratch_operands = 0 : i64, tpu.core_type = #tpu.core_type<tc>, window_params = [{transform_indices = @transform_0, window_bounds = array<i64: 512, 128>}, {pipeline_mode = #tpu.pipeline_mode<synchronous>, transform_indices = @transform_1, window_bounds = array<i64: 128, 256>}, {pipeline_mode = #tpu.pipeline_mode<synchronous>, transform_indices = @transform_2, window_bounds = array<i64: 1, 256>}, {pipeline_mode = #tpu.pipeline_mode<synchronous>, transform_indices = @transform_3, window_bounds = array<i64: 1, 128>}, {pipeline_mode = #tpu.pipeline_mode<synchronous>, transform_indices = @transform_4, window_bounds = array<i64: 1, 128>}, {pipeline_mode = #tpu.pipeline_mode<synchronous>, transform_indices = @transform_5, window_bounds = array<i64: 128, 384>}, {pipeline_mode = #tpu.pipeline_mode<synchronous>, transform_indices = @transform_6, window_bounds = array<i64: 1, 384>}, {transform_indices = @transform_7, window_bounds = array<i64: 512, 128>}, {transform_indices = @transform_8, window_bounds = array<i64: 512, 128>}, {transform_indices = @transform_9, window_bounds = array<i64: 512, 128>}, {transform_indices = @transform_10, window_bounds = array<i64: 512, 128>}, {transform_indices = @transform_11, window_bounds = array<i64: 1, 128, 128>}, {transform_indices = @transform_12, window_bounds = array<i64: 1, 3, 128>}]} {
    %c512_i32 = arith.constant 512 : i32
    %0 = arith.muli %arg0, %c512_i32 : i32
    %1 = tpu.iota {dimensions = array<i32: 0>} : vector<512x1xi32>
    %2 = vector.broadcast %0 : i32 to vector<512x1xi32>
    %3 = arith.addi %2, %1 : vector<512x1xi32>
    %c600_i32 = arith.constant 600 : i32
    %4 = vector.broadcast %c600_i32 : i32 to vector<512x1xi32>
    %5 = arith.cmpi slt, %3, %4 : vector<512x1xi32>
    %6 = arith.extui %5 : vector<512x1xi1> to vector<512x1xi32>
    %7 = arith.sitofp %6 : vector<512x1xi32> to vector<512x1xf32>
    %c0 = arith.constant 0 : index
    %c0_0 = arith.constant 0 : index
    %8 = vector.load %arg1[%c0, %c0_0] : memref<512x128xbf16, #tpu.memory_space<vmem>>, vector<512x128xbf16>
    %c0_1 = arith.constant 0 : index
    %c0_2 = arith.constant 0 : index
    %9 = vector.load %arg2[%c0_1, %c0_2] : memref<128x256xbf16, #tpu.memory_space<vmem>>, vector<128x256xbf16>
    %cst = arith.constant dense<0.000000e+00> : vector<512x256xf32>
    %10 = tpu.matmul %8, %9, %cst {dimension_numbers = #tpu.dot_dimension_numbers<[1], [0], [0], [1], [0, 0, 1, 1], [], []>} : vector<512x128xbf16>, vector<128x256xbf16>, vector<512x256xf32> -> vector<512x256xf32>
    %c0_3 = arith.constant 0 : index
    %c0_4 = arith.constant 0 : index
    %11 = vector.load %arg3[%c0_3, %c0_4] : memref<1x256xf32, #tpu.memory_space<vmem>>, vector<1x256xf32>
    %12 = vector.broadcast %11 : vector<1x256xf32> to vector<512x256xf32>
    %13 = arith.addf %10, %12 : vector<512x256xf32>
    %14 = vector.extract_strided_slice %13 {offsets = [0, 0], sizes = [512, 128], strides = [1, 1]} : vector<512x256xf32> to vector<512x128xf32>
    %15 = vector.extract_strided_slice %13 {offsets = [0, 128], sizes = [512, 128], strides = [1, 1]} : vector<512x256xf32> to vector<512x128xf32>
    %cst_5 = arith.constant dense<0.000000e+00> : vector<512xf32>
    %16 = vector.multi_reduction <add>, %14, %cst_5 [1] : vector<512x128xf32> to vector<512xf32>
    %17 = vector.shape_cast %16 : vector<512xf32> to vector<512x1xf32>
    %cst_6 = arith.constant 1.280000e+02 : f32
    %18 = vector.broadcast %cst_6 : f32 to vector<512x1xf32>
    %19 = arith.divf %17, %18 : vector<512x1xf32>
    %20 = vector.broadcast %19 : vector<512x1xf32> to vector<512x128xf32>
    %21 = arith.subf %14, %20 : vector<512x128xf32>
    %22 = arith.mulf %21, %21 : vector<512x128xf32>
    %cst_7 = arith.constant dense<0.000000e+00> : vector<512xf32>
    %23 = vector.multi_reduction <add>, %22, %cst_7 [1] : vector<512x128xf32> to vector<512xf32>
    %24 = vector.shape_cast %23 : vector<512xf32> to vector<512x1xf32>
    %cst_8 = arith.constant 1.280000e+02 : f32
    %25 = vector.broadcast %cst_8 : f32 to vector<512x1xf32>
    %26 = arith.divf %24, %25 : vector<512x1xf32>
    %cst_9 = arith.constant 9.99999974E-6 : f32
    %27 = vector.broadcast %cst_9 : f32 to vector<512x1xf32>
    %28 = arith.addf %26, %27 : vector<512x1xf32>
    %29 = math.rsqrt %28 : vector<512x1xf32>
    %30 = vector.broadcast %29 : vector<512x1xf32> to vector<512x128xf32>
    %31 = arith.mulf %21, %30 : vector<512x128xf32>
    %c0_10 = arith.constant 0 : index
    %c0_11 = arith.constant 0 : index
    %32 = vector.load %arg4[%c0_10, %c0_11] : memref<1x128xf32, #tpu.memory_space<vmem>>, vector<1x128xf32>
    %33 = vector.broadcast %32 : vector<1x128xf32> to vector<512x128xf32>
    %34 = arith.mulf %31, %33 : vector<512x128xf32>
    %c0_12 = arith.constant 0 : index
    %c0_13 = arith.constant 0 : index
    %35 = vector.load %arg5[%c0_12, %c0_13] : memref<1x128xf32, #tpu.memory_space<vmem>>, vector<1x128xf32>
    %36 = vector.broadcast %35 : vector<1x128xf32> to vector<512x128xf32>
    %37 = arith.addf %34, %36 : vector<512x128xf32>
    %cst_14 = arith.constant 0.000000e+00 : f32
    %38 = vector.broadcast %cst_14 : f32 to vector<512x128xf32>
    %39 = arith.maximumf %37, %38 : vector<512x128xf32>
    %40 = arith.truncf %39 : vector<512x128xf32> to vector<512x128xbf16>
    %c0_15 = arith.constant 0 : index
    %c0_16 = arith.constant 0 : index
    %41 = vector.load %arg8[%c0_15, %c0_16] : memref<512x128xbf16, #tpu.memory_space<vmem>>, vector<512x128xbf16>
    tpu.vector_store %arg8[%c0_15, %c0_16], %40 {strides = array<i32>} : memref<512x128xbf16, #tpu.memory_space<vmem>>, vector<512x128xbf16>,
    %c0_17 = arith.constant 0 : index
    %c0_18 = arith.constant 0 : index
    %42 = vector.load %arg6[%c0_17, %c0_18] : memref<128x384xbf16, #tpu.memory_space<vmem>>, vector<128x384xbf16>
    %cst_19 = arith.constant dense<0.000000e+00> : vector<512x384xf32>
    %43 = tpu.matmul %40, %42, %cst_19 {dimension_numbers = #tpu.dot_dimension_numbers<[1], [0], [0], [1], [0, 0, 1, 1], [], []>} : vector<512x128xbf16>, vector<128x384xbf16>, vector<512x384xf32> -> vector<512x384xf32>
    %c0_20 = arith.constant 0 : index
    %c0_21 = arith.constant 0 : index
    %44 = vector.load %arg7[%c0_20, %c0_21] : memref<1x384xf32, #tpu.memory_space<vmem>>, vector<1x384xf32>
    %45 = vector.broadcast %44 : vector<1x384xf32> to vector<512x384xf32>
    %46 = arith.addf %43, %45 : vector<512x384xf32>
    %47 = vector.extract_strided_slice %46 {offsets = [0, 0], sizes = [512, 128], strides = [1, 1]} : vector<512x384xf32> to vector<512x128xf32>
    %48 = vector.broadcast %7 : vector<512x1xf32> to vector<512x128xf32>
    %49 = arith.mulf %47, %48 : vector<512x128xf32>
    %50 = vector.extract_strided_slice %46 {offsets = [0, 128], sizes = [512, 128], strides = [1, 1]} : vector<512x384xf32> to vector<512x128xf32>
    %51 = vector.broadcast %7 : vector<512x1xf32> to vector<512x128xf32>
    %52 = arith.mulf %50, %51 : vector<512x128xf32>
    %53 = vector.extract_strided_slice %46 {offsets = [0, 256], sizes = [512, 128], strides = [1, 1]} : vector<512x384xf32> to vector<512x128xf32>
    %54 = vector.broadcast %7 : vector<512x1xf32> to vector<512x128xf32>
    %55 = arith.mulf %53, %54 : vector<512x128xf32>
    %56 = arith.truncf %49 : vector<512x128xf32> to vector<512x128xbf16>
    %c0_22 = arith.constant 0 : index
    %c0_23 = arith.constant 0 : index
    %57 = vector.load %arg9[%c0_22, %c0_23] : memref<512x128xbf16, #tpu.memory_space<vmem>>, vector<512x128xbf16>
    tpu.vector_store %arg9[%c0_22, %c0_23], %56 {strides = array<i32>} : memref<512x128xbf16, #tpu.memory_space<vmem>>, vector<512x128xbf16>,
    %58 = arith.truncf %55 : vector<512x128xf32> to vector<512x128xbf16>
    %c0_24 = arith.constant 0 : index
    %c0_25 = arith.constant 0 : index
    %59 = vector.load %arg10[%c0_24, %c0_25] : memref<512x128xbf16, #tpu.memory_space<vmem>>, vector<512x128xbf16>
    tpu.vector_store %arg10[%c0_24, %c0_25], %58 {strides = array<i32>} : memref<512x128xbf16, #tpu.memory_space<vmem>>, vector<512x128xbf16>,
    %cst_26 = arith.constant 0.000000e+00 : f32
    %60 = vector.broadcast %cst_26 : f32 to vector<512x128xf32>
    %61 = arith.maximumf %15, %60 : vector<512x128xf32>
    %62 = vector.broadcast %7 : vector<512x1xf32> to vector<512x128xf32>
    %63 = arith.mulf %61, %62 : vector<512x128xf32>
    %64 = arith.truncf %63 : vector<512x128xf32> to vector<512x128xbf16>
    %c0_27 = arith.constant 0 : index
    %c0_28 = arith.constant 0 : index
    %65 = vector.load %arg11[%c0_27, %c0_28] : memref<512x128xbf16, #tpu.memory_space<vmem>>, vector<512x128xbf16>
    tpu.vector_store %arg11[%c0_27, %c0_28], %64 {strides = array<i32>} : memref<512x128xbf16, #tpu.memory_space<vmem>>, vector<512x128xbf16>,
    %66 = arith.truncf %52 : vector<512x128xf32> to vector<512x128xbf16>
    %67 = arith.truncf %55 : vector<512x128xf32> to vector<512x128xbf16>
    %cst_29 = arith.constant dense<0.000000e+00> : vector<128x128xf32>
    %68 = tpu.matmul %66, %67, %cst_29 {dimension_numbers = #tpu.dot_dimension_numbers<[0], [0], [1], [1], [0, 1, 1, 1], [], []>} : vector<512x128xbf16>, vector<512x128xbf16>, vector<128x128xf32> -> vector<128x128xf32>
    %c0_30 = arith.constant 0 : index
    %c0_31 = arith.constant 0 : index
    %c0_32 = arith.constant 0 : index
    %69 = vector.load %arg12[%c0_30, %c0_31, %c0_32] : memref<1x128x128xf32, #tpu.memory_space<vmem>>, vector<1x128x128xf32>
    %70 = vector.shape_cast %69 : vector<1x128x128xf32> to vector<128x128xf32>
    %71 = vector.shape_cast %68 : vector<128x128xf32> to vector<1x128x128xf32>
    tpu.vector_store %arg12[%c0_30, %c0_31, %c0_32], %71 {strides = array<i32>} : memref<1x128x128xf32, #tpu.memory_space<vmem>>, vector<1x128x128xf32>,
    %cst_33 = arith.constant dense<0.000000e+00> : vector<128xf32>
    %72 = vector.multi_reduction <add>, %52, %cst_33 [0] : vector<512x128xf32> to vector<128xf32>
    %73 = vector.shape_cast %72 : vector<128xf32> to vector<1x128xf32>
    %74 = arith.mulf %49, %49 : vector<512x128xf32>
    %cst_34 = arith.constant dense<0.000000e+00> : vector<128xf32>
    %75 = vector.multi_reduction <add>, %74, %cst_34 [0] : vector<512x128xf32> to vector<128xf32>
    %76 = vector.shape_cast %75 : vector<128xf32> to vector<1x128xf32>
    %77 = arith.mulf %52, %52 : vector<512x128xf32>
    %cst_35 = arith.constant dense<0.000000e+00> : vector<128xf32>
    %78 = vector.multi_reduction <add>, %77, %cst_35 [0] : vector<512x128xf32> to vector<128xf32>
    %79 = vector.shape_cast %78 : vector<128xf32> to vector<1x128xf32>
    %80 = tpu.concatenate %73, %76, %79 in 0 : vector<1x128xf32>, vector<1x128xf32>, vector<1x128xf32> -> vector<3x128xf32>
    %c0_36 = arith.constant 0 : index
    %c0_37 = arith.constant 0 : index
    %c0_38 = arith.constant 0 : index
    %81 = vector.load %arg13[%c0_36, %c0_37, %c0_38] : memref<1x3x128xf32, #tpu.memory_space<vmem>>, vector<1x3x128xf32>
    %82 = vector.shape_cast %81 : vector<1x3x128xf32> to vector<3x128xf32>
    %83 = vector.shape_cast %80 : vector<3x128xf32> to vector<1x3x128xf32>
    tpu.vector_store %arg13[%c0_36, %c0_37, %c0_38], %83 {strides = array<i32>} : memref<1x3x128xf32, #tpu.memory_space<vmem>>, vector<1x3x128xf32>,
    return
  }
  func.func @transform_0(%arg0: i32) -> (i32, i32) {
    %c0_i32 = arith.constant 0 : i32
    %c0_i32_0 = arith.constant 0 : i32
    return %arg0, %c0_i32 : i32, i32
  }
  func.func @transform_1(%arg0: i32) -> (i32, i32) {
    %c0_i32 = arith.constant 0 : i32
    %c0_i32_0 = arith.constant 0 : i32
    %c0_i32_1 = arith.constant 0 : i32
    return %c0_i32, %c0_i32_0 : i32, i32
  }
  func.func @transform_2(%arg0: i32) -> (i32, i32) {
    %c0_i32 = arith.constant 0 : i32
    %c0_i32_0 = arith.constant 0 : i32
    %c0_i32_1 = arith.constant 0 : i32
    return %c0_i32, %c0_i32_0 : i32, i32
  }
  func.func @transform_3(%arg0: i32) -> (i32, i32) {
    %c0_i32 = arith.constant 0 : i32
    %c0_i32_0 = arith.constant 0 : i32
    %c0_i32_1 = arith.constant 0 : i32
    return %c0_i32, %c0_i32_0 : i32, i32
  }
  func.func @transform_4(%arg0: i32) -> (i32, i32) {
    %c0_i32 = arith.constant 0 : i32
    %c0_i32_0 = arith.constant 0 : i32
    %c0_i32_1 = arith.constant 0 : i32
    return %c0_i32, %c0_i32_0 : i32, i32
  }
  func.func @transform_5(%arg0: i32) -> (i32, i32) {
    %c0_i32 = arith.constant 0 : i32
    %c0_i32_0 = arith.constant 0 : i32
    %c0_i32_1 = arith.constant 0 : i32
    return %c0_i32, %c0_i32_0 : i32, i32
  }
  func.func @transform_6(%arg0: i32) -> (i32, i32) {
    %c0_i32 = arith.constant 0 : i32
    %c0_i32_0 = arith.constant 0 : i32
    %c0_i32_1 = arith.constant 0 : i32
    return %c0_i32, %c0_i32_0 : i32, i32
  }
  func.func @transform_7(%arg0: i32) -> (i32, i32) {
    %c0_i32 = arith.constant 0 : i32
    %c0_i32_0 = arith.constant 0 : i32
    return %arg0, %c0_i32 : i32, i32
  }
  func.func @transform_8(%arg0: i32) -> (i32, i32) {
    %c0_i32 = arith.constant 0 : i32
    %c0_i32_0 = arith.constant 0 : i32
    return %arg0, %c0_i32 : i32, i32
  }
  func.func @transform_9(%arg0: i32) -> (i32, i32) {
    %c0_i32 = arith.constant 0 : i32
    %c0_i32_0 = arith.constant 0 : i32
    return %arg0, %c0_i32 : i32, i32
  }
  func.func @transform_10(%arg0: i32) -> (i32, i32) {
    %c0_i32 = arith.constant 0 : i32
    %c0_i32_0 = arith.constant 0 : i32
    return %arg0, %c0_i32 : i32, i32
  }
  func.func @transform_11(%arg0: i32) -> (i32, i32, i32) {
    %c0_i32 = arith.constant 0 : i32
    %c0_i32_0 = arith.constant 0 : i32
    %c0_i32_1 = arith.constant 0 : i32
    return %arg0, %c0_i32, %c0_i32_0 : i32, i32, i32
  }
  func.func @transform_12(%arg0: i32) -> (i32, i32, i32) {
    %c0_i32 = arith.constant 0 : i32
    %c0_i32_0 = arith.constant 0 : i32
    %c0_i32_1 = arith.constant 0 : i32
    return %arg0, %c0_i32, %c0_i32_0 : i32, i32, i32
  }
}

</mosaic_0001>

<llo_original>
// kernel: tpu_custom_call.1
$region0: #{tpu_custom_call.1}
  #allocation0 [shape = 'u32[]', space=smem, size = 0x4, offset = 0x4, fixed_abs, tag = 'smem constant byte address 0x4 - core index']
  #allocation1 [shape = 'u32[144,128]{1,0:T(1,128)}', space=vmem, size = 0x12000, scoped, tag = 'internal scratch']
  %s0 = inlined_call_operand.hbm [shape: bf16[1024,128], index: 0, kind: input, shape index: {}]
  %s1 = inlined_call_operand.hbm [shape: bf16[128,256], index: 1, kind: input, shape index: {}]
  %s2 = inlined_call_operand.vmem [shape: f32[1,256], index: 2, kind: input, shape index: {}]
  %s3 = inlined_call_operand.hbm [shape: f32[1,128], index: 3, kind: input, shape index: {}]
  %s4 = inlined_call_operand.vmem [shape: f32[1,128], index: 4, kind: input, shape index: {}]
  %s5 = inlined_call_operand.hbm [shape: bf16[128,384], index: 5, kind: input, shape index: {}]
  %s6 = inlined_call_operand.vmem [shape: f32[1,384], index: 6, kind: input, shape index: {}]
  %s7 = inlined_call_operand.hbm [shape: bf16[1024,128], index: 7, kind: output, shape index: {0}]
  %s8 = inlined_call_operand.hbm [shape: bf16[1024,128], index: 8, kind: output, shape index: {1}]
  %s9 = inlined_call_operand.hbm [shape: bf16[1024,128], index: 9, kind: output, shape index: {2}]
  %s10 = inlined_call_operand.hbm [shape: bf16[1024,128], index: 10, kind: output, shape index: {3}]
  %s11 = inlined_call_operand.hbm [shape: f32[2,128,128], index: 11, kind: output, shape index: {4}]
  %s12 = inlined_call_operand.vmem [shape: f32[2,3,128], index: 12, kind: output, shape index: {5}]
  %13 = xla_tuple %s7, %s8, %s9, %s10, %s11, %s12
  %s14 = sld [smem:[#allocation0]]
  $region117: #{tpu_custom_call.1} parent=0
    _
  %s16 = ssub.s32 1, %s14
  %s17 = scalar_select 0, %s16, %s14
  $region1: #{tpu_custom_call.1} parent=0
    #allocation2 [shape = 'u8[262144]{0}', space=vmem, size = 0x40000, scoped, tag = 'input window, operand 0']
    #allocation3 [shape = 's32[2]{0}', space=sflag, size = 0x8, scoped, tag = 'scoped memory for tpu_custom_call.1']
    #allocation4 [shape = 's32[2]{0}', space=sflag, size = 0x8, scoped, tag = 'scoped memory for tpu_custom_call.1']
    #allocation5 [shape = 'u8[65536]{0}', space=vmem, size = 0x10000, scoped, tag = 'input window, operand 1, single buffered']
    #allocation6 [shape = 's32[1]{0}', space=sflag, size = 0x4, scoped, tag = 'scoped memory for tpu_custom_call.1']
    #allocation7 [shape = 'u8[512]{0}', space=vmem, size = 0x400, scoped, tag = 'input window, operand 3, single buffered']
    #allocation8 [shape = 'u8[98304]{0}', space=vmem, size = 0x18000, scoped, tag = 'input window, operand 5, single buffered']
    #allocation9 [shape = 's32[1]{0}', space=sflag, size = 0x4, scoped, tag = 'scoped memory for tpu_custom_call.1']
    #allocation10 [shape = 'u8[262144]{0}', space=vmem, size = 0x40000, scoped, tag = 'output window, operand 0']
    #allocation11 [shape = 'u8[262144]{0}', space=vmem, size = 0x40000, scoped, tag = 'output window, operand 1']
    #allocation12 [shape = 's32[2]{0}', space=sflag, size = 0x8, scoped, tag = 'scoped memory for tpu_custom_call.1']
    #allocation13 [shape = 'u8[262144]{0}', space=vmem, size = 0x40000, scoped, tag = 'output window, operand 2']
    #allocation14 [shape = 'u8[262144]{0}', space=vmem, size = 0x40000, scoped, tag = 'output window, operand 3']
    #allocation15 [shape = 's32[2]{0}', space=sflag, size = 0x8, scoped, tag = 'scoped memory for tpu_custom_call.1']
    #allocation16 [shape = 'u8[131072]{0}', space=vmem, size = 0x20000, scoped, tag = 'output window, operand 4']
    %18 = vsyncpa [#allocation3], 0
    %s19 = scalar_lea.sflag [#allocation3], 1
    %20 = vsyncpa %s19, 0
    %21 = vsyncpa [#allocation6], 0
    %22 = vsyncpa [#allocation9], 0
    %23 = vsyncpa [#allocation4], 0
    %s24 = scalar_lea.sflag [#allocation4], 1
    %25 = vsyncpa %s24, 0
    %26 = vsyncpa [#allocation12], 0
    %s27 = scalar_lea.sflag [#allocation12], 1
    %28 = vsyncpa %s27, 0
    %29 = vsyncpa [#allocation15], 0
    %s30 = scalar_lea.sflag [#allocation15], 1
    %31 = vsyncpa %s30, 0
    loop: start=0, step=1, limit=4
    $region2: #{tpu_custom_call.1} parent=1 // loop_pre_header
      _
    $region3: #{tpu_custom_call.1} parent=1 // loop_header
      %s33 = sphi 0, %s37
      %p34 = scmp.ge.s32.totalorder %s33, 4
      %s43 = sphi 0, %s45
      %s46 = sphi 0, %s43
      %s47 = sphi 0, %s46
      %s63 = sphi 0, %s47
      %s67 = sphi 0, %s67
      %s69 = sphi 0, %s67
      %s70 = sphi 0, %s69
      %s84 = sphi 0, %s70
      %s88 = sphi 0, %s88
      %s90 = sphi 0, %s88
      %s91 = sphi 0, %s90
      %s105 = sphi 0, %s91
      %s109 = sphi 0, %s109
      %s111 = sphi 0, %s109
      %s112 = sphi 0, %s111
      %s126 = sphi 0, %s112
      %s130 = sphi 0, %s130
      %s132 = sphi 0, %s130
      %s133 = sphi 0, %s132
      %s147 = sphi 0, %s133
      %s151 = sphi 0, %s151
      %s153 = sphi 0, %s151
      %s154 = sphi 0, %s153
      %s168 = sphi 0, %s154
      %s172 = sphi 0, %s172
      %s174 = sphi 0, %s172
      %s175 = sphi 0, %s174
      %s189 = sphi 0, %s175
      %s195 = sphi 0, %s197
      %s198 = sphi 0, %s195
      %s199 = sphi 0, %s198
      %s215 = sphi 0, %s199
      %s221 = sphi 0, %s223
      %s224 = sphi 0, %s221
      %s225 = sphi 0, %s224
      %s241 = sphi 0, %s225
      %s247 = sphi 0, %s249
      %s250 = sphi 0, %s247
      %s251 = sphi 0, %s250
      %s267 = sphi 0, %s251
      %s273 = sphi 0, %s275
      %s276 = sphi 0, %s273
      %s277 = sphi 0, %s276
      %s293 = sphi 0, %s277
      %s299 = sphi 0, %s301
      %s302 = sphi 0, %s299
      %s303 = sphi 0, %s302
      %s319 = sphi 0, %s303
      %s325 = sphi 0, %s327
      %s328 = sphi 0, %s325
      %s329 = sphi 0, %s328
      %s345 = sphi 0, %s329
    $region4: #{tpu_custom_call.1} parent=1 // loop_header_branch
      %36 = sbr.rel (%p34) target = $region8
    $region5: #{tpu_custom_call.1} parent=1 // loop_body
      %s38 = ssub.s32 %s33, 1
      %s39 = ssub.s32 %s33, 2
      %s40 = sadd.s32 %s33, 1
      %s41 = ssub.s32 %s33, %s40
      %p42 = scmp.eq.s32.totalorder %s41, 0
      %s44 = sadd.s32 %s43, 1
      %s45 = scalar_select %p42, %s43, %s44
      %p48 = pneg %p42
      %p49 = scmp.eq.s32.totalorder %s33, 1
      %p50 = por %p48, %p49
      %p51 = scmp.ne.s32.totalorder %s43, %s46
      %p52 = scmp.eq.s32.totalorder %s33, 0
      %p53 = por %p51, %p52
      %p54 = scmp.ne.s32.totalorder %s43, %s46
      %p55 = scmp.eq.s32.totalorder %s38, 1
      %p56 = por %p54, %p55
      %p57 = scmp.ne.s32.totalorder %s46, %s47
      %p58 = scmp.eq.s32.totalorder %s38, 0
      %p59 = por %p57, %p58
      %p60 = scmp.ne.s32.totalorder %s46, %s47
      %p61 = scmp.eq.s32.totalorder %s39, 1
      %p62 = por %p60, %p61
      %p64 = scmp.ne.s32.totalorder %s47, %s63
      %p65 = scmp.eq.s32.totalorder %s39, 0
      %p66 = por %p64, %p65
      %s68 = sadd.s32 %s67, 1
      %p71 = scmp.eq.s32.totalorder %s33, 1
      %p72 = scmp.ne.s32.totalorder %s67, %s69
      %p73 = scmp.eq.s32.totalorder %s33, 0
      %p74 = por %p72, %p73
      %p75 = scmp.ne.s32.totalorder %s67, %s69
      %p76 = scmp.eq.s32.totalorder %s38, 1
      %p77 = por %p75, %p76
      %p78 = scmp.ne.s32.totalorder %s69, %s70
      %p79 = scmp.eq.s32.totalorder %s38, 0
      %p80 = por %p78, %p79
      %p81 = scmp.ne.s32.totalorder %s69, %s70
      %p82 = scmp.eq.s32.totalorder %s39, 1
      %p83 = por %p81, %p82
      %p85 = scmp.ne.s32.totalorder %s70, %s84
      %p86 = scmp.eq.s32.totalorder %s39, 0
      %p87 = por %p85, %p86
      %s89 = sadd.s32 %s88, 1
      %p92 = scmp.eq.s32.totalorder %s33, 1
      %p93 = scmp.ne.s32.totalorder %s88, %s90
      %p94 = scmp.eq.s32.totalorder %s33, 0
      %p95 = por %p93, %p94
      %p96 = scmp.ne.s32.totalorder %s88, %s90
      %p97 = scmp.eq.s32.totalorder %s38, 1
      %p98 = por %p96, %p97
      %p99 = scmp.ne.s32.totalorder %s90, %s91
      %p100 = scmp.eq.s32.totalorder %s38, 0
      %p101 = por %p99, %p100
      %p102 = scmp.ne.s32.totalorder %s90, %s91
      %p103 = scmp.eq.s32.totalorder %s39, 1
      %p104 = por %p102, %p103
      %p106 = scmp.ne.s32.totalorder %s91, %s105
      %p107 = scmp.eq.s32.totalorder %s39, 0
      %p108 = por %p106, %p107
      %s110 = sadd.s32 %s109, 1
      %p113 = scmp.eq.s32.totalorder %s33, 1
      %p114 = scmp.ne.s32.totalorder %s109, %s111
      %p115 = scmp.eq.s32.totalorder %s33, 0
      %p116 = por %p114, %p115
      %p117 = scmp.ne.s32.totalorder %s109, %s111
      %p118 = scmp.eq.s32.totalorder %s38, 1
      %p119 = por %p117, %p118
      %p120 = scmp.ne.s32.totalorder %s111, %s112
      %p121 = scmp.eq.s32.totalorder %s38, 0
      %p122 = por %p120, %p121
      %p123 = scmp.ne.s32.totalorder %s111, %s112
      %p124 = scmp.eq.s32.totalorder %s39, 1
      %p125 = por %p123, %p124
      %p127 = scmp.ne.s32.totalorder %s112, %s126
      %p128 = scmp.eq.s32.totalorder %s39, 0
      %p129 = por %p127, %p128
      %s131 = sadd.s32 %s130, 1
      %p134 = scmp.eq.s32.totalorder %s33, 1
      %p135 = scmp.ne.s32.totalorder %s130, %s132
      %p136 = scmp.eq.s32.totalorder %s33, 0
      %p137 = por %p135, %p136
      %p138 = scmp.ne.s32.totalorder %s130, %s132
      %p139 = scmp.eq.s32.totalorder %s38, 1
      %p140 = por %p138, %p139
      %p141 = scmp.ne.s32.totalorder %s132, %s133
      %p142 = scmp.eq.s32.totalorder %s38, 0
      %p143 = por %p141, %p142
      %p144 = scmp.ne.s32.totalorder %s132, %s133
      %p145 = scmp.eq.s32.totalorder %s39, 1
      %p146 = por %p144, %p145
      %p148 = scmp.ne.s32.totalorder %s133, %s147
      %p149 = scmp.eq.s32.totalorder %s39, 0
      %p150 = por %p148, %p149
      %s152 = sadd.s32 %s151, 1
      %p155 = scmp.eq.s32.totalorder %s33, 1
      %p156 = scmp.ne.s32.totalorder %s151, %s153
      %p157 = scmp.eq.s32.totalorder %s33, 0
      %p158 = por %p156, %p157
      %p159 = scmp.ne.s32.totalorder %s151, %s153
      %p160 = scmp.eq.s32.totalorder %s38, 1
      %p161 = por %p159, %p160
      %p162 = scmp.ne.s32.totalorder %s153, %s154
      %p163 = scmp.eq.s32.totalorder %s38, 0
      %p164 = por %p162, %p163
      %p165 = scmp.ne.s32.totalorder %s153, %s154
      %p166 = scmp.eq.s32.totalorder %s39, 1
      %p167 = por %p165, %p166
      %p169 = scmp.ne.s32.totalorder %s154, %s168
      %p170 = scmp.eq.s32.totalorder %s39, 0
      %p171 = por %p169, %p170
      %s173 = sadd.s32 %s172, 1
      %p176 = scmp.eq.s32.totalorder %s33, 1
      %p177 = scmp.ne.s32.totalorder %s172, %s174
      %p178 = scmp.eq.s32.totalorder %s33, 0
      %p179 = por %p177, %p178
      %p180 = scmp.ne.s32.totalorder %s172, %s174
      %p181 = scmp.eq.s32.totalorder %s38, 1
      %p182 = por %p180, %p181
      %p183 = scmp.ne.s32.totalorder %s174, %s175
      %p184 = scmp.eq.s32.totalorder %s38, 0
      %p185 = por %p183, %p184
      %p186 = scmp.ne.s32.totalorder %s174, %s175
      %p187 = scmp.eq.s32.totalorder %s39, 1
      %p188 = por %p186, %p187
      %p190 = scmp.ne.s32.totalorder %s175, %s189
      %p191 = scmp.eq.s32.totalorder %s39, 0
      %p192 = por %p190, %p191
      %s193 = ssub.s32 %s33, %s40
      %p194 = scmp.eq.s32.totalorder %s193, 0
      %s196 = sadd.s32 %s195, 1
      %s197 = scalar_select %p194, %s195, %s196
      %p200 = pneg %p194
      %p201 = scmp.eq.s32.totalorder %s33, 1
      %p202 = por %p200, %p201
      %p203 = scmp.ne.s32.totalorder %s195, %s198
      %p204 = scmp.eq.s32.totalorder %s33, 0
      %p205 = por %p203, %p204
      %p206 = scmp.ne.s32.totalorder %s195, %s198
      %p207 = scmp.eq.s32.totalorder %s38, 1
      %p208 = por %p206, %p207
      %p209 = scmp.ne.s32.totalorder %s198, %s199
      %p210 = scmp.eq.s32.totalorder %s38, 0
      %p211 = por %p209, %p210
      %p212 = scmp.ne.s32.totalorder %s198, %s199
      %p213 = scmp.eq.s32.totalorder %s39, 1
      %p214 = por %p212, %p213
      %p216 = scmp.ne.s32.totalorder %s199, %s215
      %p217 = scmp.eq.s32.totalorder %s39, 0
      %p218 = por %p216, %p217
      %s219 = ssub.s32 %s33, %s40
      %p220 = scmp.eq.s32.totalorder %s219, 0
      %s222 = sadd.s32 %s221, 1
      %s223 = scalar_select %p220, %s221, %s222
      %p226 = pneg %p220
      %p227 = scmp.eq.s32.totalorder %s33, 1
      %p228 = por %p226, %p227
      %p229 = scmp.ne.s32.totalorder %s221, %s224
      %p230 = scmp.eq.s32.totalorder %s33, 0
      %p231 = por %p229, %p230
      %p232 = scmp.ne.s32.totalorder %s221, %s224
      %p233 = scmp.eq.s32.totalorder %s38, 1
      %p234 = por %p232, %p233
      %p235 = scmp.ne.s32.totalorder %s224, %s225
      %p236 = scmp.eq.s32.totalorder %s38, 0
      %p237 = por %p235, %p236
      %p238 = scmp.ne.s32.totalorder %s224, %s225
      %p239 = scmp.eq.s32.totalorder %s39, 1
      %p240 = por %p238, %p239
      %p242 = scmp.ne.s32.totalorder %s225, %s241
      %p243 = scmp.eq.s32.totalorder %s39, 0
      %p244 = por %p242, %p243
      %s245 = ssub.s32 %s33, %s40
      %p246 = scmp.eq.s32.totalorder %s245, 0
      %s248 = sadd.s32 %s247, 1
      %s249 = scalar_select %p246, %s247, %s248
      %p252 = pneg %p246
      %p253 = scmp.eq.s32.totalorder %s33, 1
      %p254 = por %p252, %p253
      %p255 = scmp.ne.s32.totalorder %s247, %s250
      %p256 = scmp.eq.s32.totalorder %s33, 0
      %p257 = por %p255, %p256
      %p258 = scmp.ne.s32.totalorder %s247, %s250
      %p259 = scmp.eq.s32.totalorder %s38, 1
      %p260 = por %p258, %p259
      %p261 = scmp.ne.s32.totalorder %s250, %s251
      %p262 = scmp.eq.s32.totalorder %s38, 0
      %p263 = por %p261, %p262
      %p264 = scmp.ne.s32.totalorder %s250, %s251
      %p265 = scmp.eq.s32.totalorder %s39, 1
      %p266 = por %p264, %p265
      %p268 = scmp.ne.s32.totalorder %s251, %s267
      %p269 = scmp.eq.s32.totalorder %s39, 0
      %p270 = por %p268, %p269
      %s271 = ssub.s32 %s33, %s40
      %p272 = scmp.eq.s32.totalorder %s271, 0
      %s274 = sadd.s32 %s273, 1
      %s275 = scalar_select %p272, %s273, %s274
      %p278 = pneg %p272
      %p279 = scmp.eq.s32.totalorder %s33, 1
      %p280 = por %p278, %p279
      %p281 = scmp.ne.s32.totalorder %s273, %s276
      %p282 = scmp.eq.s32.totalorder %s33, 0
      %p283 = por %p281, %p282
      %p284 = scmp.ne.s32.totalorder %s273, %s276
      %p285 = scmp.eq.s32.totalorder %s38, 1
      %p286 = por %p284, %p285
      %p287 = scmp.ne.s32.totalorder %s276, %s277
      %p288 = scmp.eq.s32.totalorder %s38, 0
      %p289 = por %p287, %p288
      %p290 = scmp.ne.s32.totalorder %s276, %s277
      %p291 = scmp.eq.s32.totalorder %s39, 1
      %p292 = por %p290, %p291
      %p294 = scmp.ne.s32.totalorder %s277, %s293
      %p295 = scmp.eq.s32.totalorder %s39, 0
      %p296 = por %p294, %p295
      %s297 = ssub.s32 %s33, %s40
      %p298 = scmp.eq.s32.totalorder %s297, 0
      %s300 = sadd.s32 %s299, 1
      %s301 = scalar_select %p298, %s299, %s300
      %p304 = pneg %p298
      %p305 = scmp.eq.s32.totalorder %s33, 1
      %p306 = por %p304, %p305
      %p307 = scmp.ne.s32.totalorder %s299, %s302
      %p308 = scmp.eq.s32.totalorder %s33, 0
      %p309 = por %p307, %p308
      %p310 = scmp.ne.s32.totalorder %s299, %s302
      %p311 = scmp.eq.s32.totalorder %s38, 1
      %p312 = por %p310, %p311
      %p313 = scmp.ne.s32.totalorder %s302, %s303
      %p314 = scmp.eq.s32.totalorder %s38, 0
      %p315 = por %p313, %p314
      %p316 = scmp.ne.s32.totalorder %s302, %s303
      %p317 = scmp.eq.s32.totalorder %s39, 1
      %p318 = por %p316, %p317
      %p320 = scmp.ne.s32.totalorder %s303, %s319
      %p321 = scmp.eq.s32.totalorder %s39, 0
      %p322 = por %p320, %p321
      %s323 = ssub.s32 %s33, %s40
      %p324 = scmp.eq.s32.totalorder %s323, 0
      %s326 = sadd.s32 %s325, 1
      %s327 = scalar_select %p324, %s325, %s326
      %p330 = pneg %p324
      %p331 = scmp.eq.s32.totalorder %s33, 1
      %p332 = por %p330, %p331
      %p333 = scmp.ne.s32.totalorder %s325, %s328
      %p334 = scmp.eq.s32.totalorder %s33, 0
      %p335 = por %p333, %p334
      %p336 = scmp.ne.s32.totalorder %s325, %s328
      %p337 = scmp.eq.s32.totalorder %s38, 1
      %p338 = por %p336, %p337
      %p339 = scmp.ne.s32.totalorder %s328, %s329
      %p340 = scmp.eq.s32.totalorder %s38, 0
      %p341 = por %p339, %p340
      %p342 = scmp.ne.s32.totalorder %s328, %s329
      %p343 = scmp.eq.s32.totalorder %s39, 1
      %p344 = por %p342, %p343
      %p346 = scmp.ne.s32.totalorder %s329, %s345
      %p347 = scmp.eq.s32.totalorder %s39, 0
      %p348 = por %p346, %p347
      %p349 = scmp.le.s32.totalorder 1, %s33
      %p350 = scmp.lt.s32.totalorder %s33, 3
      %p351 = pnand %p349, %p350
      %p352 = pneg %p351
      // Predicated region
      $region9: #{tpu_custom_call.1} parent=5 // pred_check
        _
      $region10: #{tpu_custom_call.1} parent=5 // pred_check_branch
        %354 = sbr.rel (%p351) target = $region12
      $region11: #{tpu_custom_call.1} parent=5 // pred_region
        %s355 = ssub.s32 %s33, 1
        // Predicated region
        $region13: #{tpu_custom_call.1} parent=11 // pred_check
          %p356 = pneg %p80
        $region14: #{tpu_custom_call.1} parent=11 // pred_check_branch
          %358 = sbr.rel (%p356) target = $region16
        $region15: #{tpu_custom_call.1} parent=11 // pred_region
          %s360 = ssub.s32 2048, 2048
          %361 = vsyncadd [#allocation6], %s360
          %s362 = sshll.u32 [#allocation5], 4
          %s363 = int_to_ptr.vmem [resolvable:$true] %s362
          %368 = dma.hbm_to_vmem [thread:$0]  %s1, 2048, %s363, [#allocation6], 128, 128, 8
        $region16: #{tpu_custom_call.1} parent=11 // pred_fallthru
          _
        // Predicated region
        $region17: #{tpu_custom_call.1} parent=11 // pred_check
          %p369 = pneg %p101
        $region18: #{tpu_custom_call.1} parent=11 // pred_check_branch
          %371 = sbr.rel (%p369) target = $region20
        $region19: #{tpu_custom_call.1} parent=11 // pred_region
          _
        $region20: #{tpu_custom_call.1} parent=11 // pred_fallthru
          _
        // Predicated region
        $region21: #{tpu_custom_call.1} parent=11 // pred_check
          %p372 = pneg %p122
        $region22: #{tpu_custom_call.1} parent=11 // pred_check_branch
          %374 = sbr.rel (%p372) target = $region24
        $region23: #{tpu_custom_call.1} parent=11 // pred_region
          %s376 = ssub.s32 16, 16
          %377 = vsyncadd [#allocation6], %s376
          %s379 = sshll.u32 [#allocation7], 4
          %s380 = int_to_ptr.vmem [resolvable:$true] %s379
          %382 = dma.hbm_to_vmem [thread:$0]  %s3, 16, %s380, [#allocation6]
        $region24: #{tpu_custom_call.1} parent=11 // pred_fallthru
          _
        // Predicated region
        $region25: #{tpu_custom_call.1} parent=11 // pred_check
          %p383 = pneg %p143
        $region26: #{tpu_custom_call.1} parent=11 // pred_check_branch
          %385 = sbr.rel (%p383) target = $region28
        $region27: #{tpu_custom_call.1} parent=11 // pred_region
          _
        $region28: #{tpu_custom_call.1} parent=11 // pred_fallthru
          _
        // Predicated region
        $region29: #{tpu_custom_call.1} parent=11 // pred_check
          %p386 = pneg %p164
        $region30: #{tpu_custom_call.1} parent=11 // pred_check_branch
          %388 = sbr.rel (%p386) target = $region32
        $region31: #{tpu_custom_call.1} parent=11 // pred_region
          %s390 = ssub.s32 3072, 3072
          %391 = vsyncadd [#allocation9], %s390
          %s392 = sshll.u32 [#allocation8], 4
          %s393 = int_to_ptr.vmem [resolvable:$true] %s392
          %398 = dma.hbm_to_vmem [thread:$0]  %s5, 3072, %s393, [#allocation9], 192, 192, 12
        $region32: #{tpu_custom_call.1} parent=11 // pred_fallthru
          _
        // Predicated region
        $region33: #{tpu_custom_call.1} parent=11 // pred_check
          %p399 = pneg %p185
        $region34: #{tpu_custom_call.1} parent=11 // pred_check_branch
          %401 = sbr.rel (%p399) target = $region36
        $region35: #{tpu_custom_call.1} parent=11 // pred_region
          _
        $region36: #{tpu_custom_call.1} parent=11 // pred_fallthru
          _
      $region12: #{tpu_custom_call.1} parent=5 // pred_fallthru
        _
      %p402 = scmp.lt.s32.totalorder %s33, 2
      // Predicated region
      $region37: #{tpu_custom_call.1} parent=5 // pred_check
        %p403 = pneg %p402
      $region38: #{tpu_custom_call.1} parent=5 // pred_check_branch
        %405 = sbr.rel (%p403) target = $region40
      $region39: #{tpu_custom_call.1} parent=5 // pred_region
        // Predicated region
        $region41: #{tpu_custom_call.1} parent=39 // pred_check
          %p406 = pneg %p53
        $region42: #{tpu_custom_call.1} parent=39 // pred_check_branch
          %408 = sbr.rel (%p406) target = $region44
        $region43: #{tpu_custom_call.1} parent=39 // pred_region
          %s409 = sand.u32 %s43, 1
          %s410 = scalar_lea.sflag [#allocation3], %s409
          %s411 = sand.u32 %s43, 1
          %s412 = smul.addr %s411, 256
          %s413 = scalar_lea.vmem [#allocation2], %s412
          %s414 = smul.u32 64, %s33
          %s416 = ssub.s32 4096, 4096
          %417 = vsyncadd %s410, %s416
          %s418 = smul.addr %s414, 64
          %s419 = scalar_lea.hbm %s0, %s418
          %s420 = sshll.u32 %s413, 4
          %s421 = int_to_ptr.vmem [resolvable:$true] %s420
          %426 = dma.hbm_to_vmem [thread:$0]  %s419, 4096, %s421, %s410, 64, 64, 4
        $region44: #{tpu_custom_call.1} parent=39 // pred_fallthru
          _
      $region40: #{tpu_custom_call.1} parent=5 // pred_fallthru
        _
      %p427 = scmp.le.s32.totalorder 1, %s33
      %p428 = scmp.lt.s32.totalorder %s33, 3
      %p429 = pnand %p427, %p428
      %p430 = pneg %p429
      // Predicated region
      $region45: #{tpu_custom_call.1} parent=5 // pred_check
        _
      $region46: #{tpu_custom_call.1} parent=5 // pred_check_branch
        %432 = sbr.rel (%p429) target = $region48
      $region47: #{tpu_custom_call.1} parent=5 // pred_region
        %s433 = ssub.s32 %s33, 1
        %s434 = sand.u32 %s46, 1
        %s435 = scalar_lea.sflag [#allocation3], %s434
        %s436 = sand.u32 %s46, 1
        %s437 = smul.addr %s436, 256
        %s438 = scalar_lea.vmem [#allocation2], %s437
        // Predicated region
        $region49: #{tpu_custom_call.1} parent=47 // pred_check
          %p439 = pneg %p59
        $region50: #{tpu_custom_call.1} parent=47 // pred_check_branch
          %441 = sbr.rel (%p439) target = $region52
        $region51: #{tpu_custom_call.1} parent=47 // pred_region
          %442 = dma.done %s435, 4096
        $region52: #{tpu_custom_call.1} parent=47 // pred_fallthru
          _
        // Predicated region
        $region53: #{tpu_custom_call.1} parent=47 // pred_check
          %p443 = pneg %p80
        $region54: #{tpu_custom_call.1} parent=47 // pred_check_branch
          %445 = sbr.rel (%p443) target = $region56
        $region55: #{tpu_custom_call.1} parent=47 // pred_region
          %446 = dma.done [#allocation6], 2048
        $region56: #{tpu_custom_call.1} parent=47 // pred_fallthru
          _
        // Predicated region
        $region57: #{tpu_custom_call.1} parent=47 // pred_check
          %p447 = pneg %p122
        $region58: #{tpu_custom_call.1} parent=47 // pred_check_branch
          %449 = sbr.rel (%p447) target = $region60
        $region59: #{tpu_custom_call.1} parent=47 // pred_region
          %450 = dma.done [#allocation6], 16
        $region60: #{tpu_custom_call.1} parent=47 // pred_fallthru
          _
        // Predicated region
        $region61: #{tpu_custom_call.1} parent=47 // pred_check
          %p451 = pneg %p164
        $region62: #{tpu_custom_call.1} parent=47 // pred_check_branch
          %453 = sbr.rel (%p451) target = $region64
        $region63: #{tpu_custom_call.1} parent=47 // pred_region
          %454 = dma.done [#allocation9], 3072
        $region64: #{tpu_custom_call.1} parent=47 // pred_fallthru
          _
        %s455 = sand.u32 %s46, 1
        %s456 = scalar_lea.sflag [#allocation3], %s455
        %s457 = sand.u32 %s46, 1
        %s458 = smul.addr %s457, 256
        %s459 = scalar_lea.vmem [#allocation2], %s458
        %p460 = pneg %p59
        %p461 = pneg %p56
        %p462 = pneg %p80
        %p463 = pneg %p77
        %p464 = pneg %p101
        %p465 = pneg %p98
        %p466 = pneg %p122
        %p467 = pneg %p119
        %p468 = pneg %p143
        %p469 = pneg %p140
        %p470 = pneg %p164
        %p471 = pneg %p161
        %p472 = pneg %p185
        %p473 = pneg %p182
        %p474 = pneg %p211
        %p475 = pneg %p208
        %s476 = sand.u32 %s198, 1
        %s477 = scalar_lea.sflag [#allocation4], %s476
        %s478 = sand.u32 %s198, 1
        %s479 = smul.addr %s478, 256
        %s480 = scalar_lea.vmem [#allocation10], %s479
        %p481 = pneg %p237
        %p482 = pneg %p234
        %s483 = sand.u32 %s38, 1
        %s484 = scalar_lea.sflag [#allocation12], %s483
        %s485 = sand.u32 %s224, 1
        %s486 = smul.addr %s485, 256
        %s487 = scalar_lea.vmem [#allocation11], %s486
        %p488 = pneg %p263
        %p489 = pneg %p260
        %s490 = sand.u32 %s38, 1
        %s491 = scalar_lea.sflag [#allocation12], %s490
        %s492 = sand.u32 %s250, 1
        %s493 = smul.addr %s492, 256
        %s494 = scalar_lea.vmem [#allocation13], %s493
        %p495 = pneg %p289
        %p496 = pneg %p286
        %s497 = sand.u32 %s38, 1
        %s498 = scalar_lea.sflag [#allocation15], %s497
        %s499 = sand.u32 %s276, 1
        %s500 = smul.addr %s499, 256
        %s501 = scalar_lea.vmem [#allocation14], %s500
        %p502 = pneg %p315
        %p503 = pneg %p312
        %s504 = sand.u32 %s38, 1
        %s505 = scalar_lea.sflag [#allocation15], %s504
        %s506 = sand.u32 %s302, 1
        %s507 = smul.addr %s506, 128
        %s508 = scalar_lea.vmem [#allocation16], %s507
        %p509 = pneg %p341
        %p510 = pneg %p338
        %p511 = scmp.lt.s32.totalorder %s38, 1
        %s512 = scalar_select %p511, %s38, 1
        %s513 = smul.addr %s512, 4
        %s514 = scalar_lea.vmem %s12, %s513
        %s515 = smul.u32 64, %s38
        %s516 = smul.u32 64, %s38
        %s517 = smul.u32 64, %s38
        %s518 = smul.u32 64, %s38
        %s519 = smul.u32 64, %s38
        %p520 = scmp.lt.s32.totalorder %s38, 1
        %s521 = scalar_select %p520, %s38, 1
        %s522 = smul.addr %s521, 4
        %s523 = scalar_lea.vmem %s12, %s522
        %s525 = smul.u32 %s38, 512
        %v526 = vlaneseq
        %v527 = vshrl.u32 %v526, 7
        %v528 = vadd.s32 %v527, 8
        %v529 = vadd.s32 %v527, 16
        %v530 = vadd.s32 %v527, 24
        %v531 = vadd.s32 %v527, 32
        %v532 = vadd.s32 %v527, 40
        %v533 = vadd.s32 %v527, 48
        %v534 = vadd.s32 %v527, 56
        %v535 = vadd.s32 %v527, 64
        %v536 = vadd.s32 %v527, 72
        %v537 = vadd.s32 %v527, 80
        %v538 = vadd.s32 %v527, 88
        %v539 = vadd.s32 %v527, 96
        %v540 = vadd.s32 %v527, 104
        %v541 = vadd.s32 %v527, 112
        %v542 = vadd.s32 %v527, 120
        %v543 = vadd.s32 %v527, 128
        %v544 = vadd.s32 %v527, 136
        %v545 = vadd.s32 %v527, 144
        %v546 = vadd.s32 %v527, 152
        %v547 = vadd.s32 %v527, 160
        %v548 = vadd.s32 %v527, 168
        %v549 = vadd.s32 %v527, 176
        %v550 = vadd.s32 %v527, 184
        %v551 = vadd.s32 %v527, 192
        %v552 = vadd.s32 %v527, 200
        %v553 = vadd.s32 %v527, 208
        %v554 = vadd.s32 %v527, 216
        %v555 = vadd.s32 %v527, 224
        %v556 = vadd.s32 %v527, 232
        %v557 = vadd.s32 %v527, 240
        %v558 = vadd.s32 %v527, 248
        %v559 = vadd.s32 %v527, 256
        %v560 = vadd.s32 %v527, 264
        %v561 = vadd.s32 %v527, 272
        %v562 = vadd.s32 %v527, 280
        %v563 = vadd.s32 %v527, 288
        %v564 = vadd.s32 %v527, 296
        %v565 = vadd.s32 %v527, 304
        %v566 = vadd.s32 %v527, 312
        %v567 = vadd.s32 %v527, 320
        %v568 = vadd.s32 %v527, 328
        %v569 = vadd.s32 %v527, 336
        %v570 = vadd.s32 %v527, 344
        %v571 = vadd.s32 %v527, 352
        %v572 = vadd.s32 %v527, 360
        %v573 = vadd.s32 %v527, 368
        %v574 = vadd.s32 %v527, 376
        %v575 = vadd.s32 %v527, 384
        %v576 = vadd.s32 %v527, 392
        %v577 = vadd.s32 %v527, 400
        %v578 = vadd.s32 %v527, 408
        %v579 = vadd.s32 %v527, 416
        %v580 = vadd.s32 %v527, 424
        %v581 = vadd.s32 %v527, 432
        %v582 = vadd.s32 %v527, 440
        %v583 = vadd.s32 %v527, 448
        %v584 = vadd.s32 %v527, 456
        %v585 = vadd.s32 %v527, 464
        %v586 = vadd.s32 %v527, 472
        %v587 = vadd.s32 %v527, 480
        %v588 = vadd.s32 %v527, 488
        %v589 = vadd.s32 %v527, 496
        %v590 = vadd.s32 %v527, 504
        %v591 = vstv %s525
        %v592 = vadd.s32 %v591, %v527
        %v593 = vadd.s32 %v591, %v528
        %v594 = vadd.s32 %v591, %v529
        %v595 = vadd.s32 %v591, %v530
        %v596 = vadd.s32 %v591, %v531
        %v597 = vadd.s32 %v591, %v532
        %v598 = vadd.s32 %v591, %v533
        %v599 = vadd.s32 %v591, %v534
        %v600 = vadd.s32 %v591, %v535
        %v601 = vadd.s32 %v591, %v536
        %v602 = vadd.s32 %v591, %v537
        %v603 = vadd.s32 %v591, %v538
        %v604 = vadd.s32 %v591, %v539
        %v605 = vadd.s32 %v591, %v540
        %v606 = vadd.s32 %v591, %v541
        %v607 = vadd.s32 %v591, %v542
        %v608 = vadd.s32 %v591, %v543
        %v609 = vadd.s32 %v591, %v544
        %v610 = vadd.s32 %v591, %v545
        %v611 = vadd.s32 %v591, %v546
        %v612 = vadd.s32 %v591, %v547
        %v613 = vadd.s32 %v591, %v548
        %v614 = vadd.s32 %v591, %v549
        %v615 = vadd.s32 %v591, %v550
        %v616 = vadd.s32 %v591, %v551
        %v617 = vadd.s32 %v591, %v552
        %v618 = vadd.s32 %v591, %v553
        %v619 = vadd.s32 %v591, %v554
        %v620 = vadd.s32 %v591, %v555
        %v621 = vadd.s32 %v591, %v556
        %v622 = vadd.s32 %v591, %v557
        %v623 = vadd.s32 %v591, %v558
        %v624 = vadd.s32 %v591, %v559
        %v625 = vadd.s32 %v591, %v560
        %v626 = vadd.s32 %v591, %v561
        %v627 = vadd.s32 %v591, %v562
        %v628 = vadd.s32 %v591, %v563
        %v629 = vadd.s32 %v591, %v564
        %v630 = vadd.s32 %v591, %v565
        %v631 = vadd.s32 %v591, %v566
        %v632 = vadd.s32 %v591, %v567
        %v633 = vadd.s32 %v591, %v568
        %v634 = vadd.s32 %v591, %v569
        %v635 = vadd.s32 %v591, %v570
        %v636 = vadd.s32 %v591, %v571
        %v637 = vadd.s32 %v591, %v572
        %v638 = vadd.s32 %v591, %v573
        %v639 = vadd.s32 %v591, %v574
        %v640 = vadd.s32 %v591, %v575
        %v641 = vadd.s32 %v591, %v576
        %v642 = vadd.s32 %v591, %v577
        %v643 = vadd.s32 %v591, %v578
        %v644 = vadd.s32 %v591, %v579
        %v645 = vadd.s32 %v591, %v580
        %v646 = vadd.s32 %v591, %v581
        %v647 = vadd.s32 %v591, %v582
        %v648 = vadd.s32 %v591, %v583
        %v649 = vadd.s32 %v591, %v584
        %v650 = vadd.s32 %v591, %v585
        %v651 = vadd.s32 %v591, %v586
        %v652 = vadd.s32 %v591, %v587
        %v653 = vadd.s32 %v591, %v588
        %v654 = vadd.s32 %v591, %v589
        %v655 = vadd.s32 %v591, %v590
        %vm656 = vcmp.lt.s32.totalorder %v592, 600
        %vm657 = vcmp.lt.s32.totalorder %v593, 600
        %vm658 = vcmp.lt.s32.totalorder %v594, 600
        %vm659 = vcmp.lt.s32.totalorder %v595, 600
        %vm660 = vcmp.lt.s32.totalorder %v596, 600
        %vm661 = vcmp.lt.s32.totalorder %v597, 600
        %vm662 = vcmp.lt.s32.totalorder %v598, 600
        %vm663 = vcmp.lt.s32.totalorder %v599, 600
        %vm664 = vcmp.lt.s32.totalorder %v600, 600
        %vm665 = vcmp.lt.s32.totalorder %v601, 600
        %vm666 = vcmp.lt.s32.totalorder %v602, 600
        %vm667 = vcmp.lt.s32.totalorder %v603, 600
        %vm668 = vcmp.lt.s32.totalorder %v604, 600
        %vm669 = vcmp.lt.s32.totalorder %v605, 600
        %vm670 = vcmp.lt.s32.totalorder %v606, 600
        %vm671 = vcmp.lt.s32.totalorder %v607, 600
        %vm672 = vcmp.lt.s32.totalorder %v608, 600
        %vm673 = vcmp.lt.s32.totalorder %v609, 600
        %vm674 = vcmp.lt.s32.totalorder %v610, 600
        %vm675 = vcmp.lt.s32.totalorder %v611, 600
        %vm676 = vcmp.lt.s32.totalorder %v612, 600
        %vm677 = vcmp.lt.s32.totalorder %v613, 600
        %vm678 = vcmp.lt.s32.totalorder %v614, 600
        %vm679 = vcmp.lt.s32.totalorder %v615, 600
        %vm680 = vcmp.lt.s32.totalorder %v616, 600
        %vm681 = vcmp.lt.s32.totalorder %v617, 600
        %vm682 = vcmp.lt.s32.totalorder %v618, 600
        %vm683 = vcmp.lt.s32.totalorder %v619, 600
        %vm684 = vcmp.lt.s32.totalorder %v620, 600
        %vm685 = vcmp.lt.s32.totalorder %v621, 600
        %vm686 = vcmp.lt.s32.totalorder %v622, 600
        %vm687 = vcmp.lt.s32.totalorder %v623, 600
        %vm688 = vcmp.lt.s32.totalorder %v624, 600
        %vm689 = vcmp.lt.s32.totalorder %v625, 600
        %vm690 = vcmp.lt.s32.totalorder %v626, 600
        %vm691 = vcmp.lt.s32.totalorder %v627, 600
        %vm692 = vcmp.lt.s32.totalorder %v628, 600
        %vm693 = vcmp.lt.s32.totalorder %v629, 600
        %vm694 = vcmp.lt.s32.totalorder %v630, 600
        %vm695 = vcmp.lt.s32.totalorder %v631, 600
        %vm696 = vcmp.lt.s32.totalorder %v632, 600
        %vm697 = vcmp.lt.s32.totalorder %v633, 600
        %vm698 = vcmp.lt.s32.totalorder %v634, 600
        %vm699 = vcmp.lt.s32.totalorder %v635, 600
        %vm700 = vcmp.lt.s32.totalorder %v636, 600
        %vm701 = vcmp.lt.s32.totalorder %v637, 600
        %vm702 = vcmp.lt.s32.totalorder %v638, 600
        %vm703 = vcmp.lt.s32.totalorder %v639, 600
        %vm704 = vcmp.lt.s32.totalorder %v640, 600
        %vm705 = vcmp.lt.s32.totalorder %v641, 600
        %vm706 = vcmp.lt.s32.totalorder %v642, 600
        %vm707 = vcmp.lt.s32.totalorder %v643, 600
        %vm708 = vcmp.lt.s32.totalorder %v644, 600
        %vm709 = vcmp.lt.s32.totalorder %v645, 600
        %vm710 = vcmp.lt.s32.totalorder %v646, 600
        %vm711 = vcmp.lt.s32.totalorder %v647, 600
        %vm712 = vcmp.lt.s32.totalorder %v648, 600
        %vm713 = vcmp.lt.s32.totalorder %v649, 600
        %vm714 = vcmp.lt.s32.totalorder %v650, 600
        %vm715 = vcmp.lt.s32.totalorder %v651, 600
        %vm716 = vcmp.lt.s32.totalorder %v652, 600
        %vm717 = vcmp.lt.s32.totalorder %v653, 600
        %vm718 = vcmp.lt.s32.totalorder %v654, 600
        %vm719 = vcmp.lt.s32.totalorder %v655, 600
        %v720 = vsel %vm656, 1, 0
        %v721 = vsel %vm657, 1, 0
        %v722 = vsel %vm658, 1, 0
        %v723 = vsel %vm659, 1, 0
        %v724 = vsel %vm660, 1, 0
        %v725 = vsel %vm661, 1, 0
        %v726 = vsel %vm662, 1, 0
        %v727 = vsel %vm663, 1, 0
        %v728 = vsel %vm664, 1, 0
        %v729 = vsel %vm665, 1, 0
        %v730 = vsel %vm666, 1, 0
        %v731 = vsel %vm667, 1, 0
        %v732 = vsel %vm668, 1, 0
        %v733 = vsel %vm669, 1, 0
        %v734 = vsel %vm670, 1, 0
        %v735 = vsel %vm671, 1, 0
        %v736 = vsel %vm672, 1, 0
        %v737 = vsel %vm673, 1, 0
        %v738 = vsel %vm674, 1, 0
        %v739 = vsel %vm675, 1, 0
        %v740 = vsel %vm676, 1, 0
        %v741 = vsel %vm677, 1, 0
        %v742 = vsel %vm678, 1, 0
        %v743 = vsel %vm679, 1, 0
        %v744 = vsel %vm680, 1, 0
        %v745 = vsel %vm681, 1, 0
        %v746 = vsel %vm682, 1, 0
        %v747 = vsel %vm683, 1, 0
        %v748 = vsel %vm684, 1, 0
        %v749 = vsel %vm685, 1, 0
        %v750 = vsel %vm686, 1, 0
        %v751 = vsel %vm687, 1, 0
        %v752 = vsel %vm688, 1, 0
        %v753 = vsel %vm689, 1, 0
        %v754 = vsel %vm690, 1, 0
        %v755 = vsel %vm691, 1, 0
        %v756 = vsel %vm692, 1, 0
        %v757 = vsel %vm693, 1, 0
        %v758 = vsel %vm694, 1, 0
        %v759 = vsel %vm695, 1, 0
        %v760 = vsel %vm696, 1, 0
        %v761 = vsel %vm697, 1, 0
        %v762 = vsel %vm698, 1, 0
        %v763 = vsel %vm699, 1, 0
        %v764 = vsel %vm700, 1, 0
        %v765 = vsel %vm701, 1, 0
        %v766 = vsel %vm702, 1, 0
        %v767 = vsel %vm703, 1, 0
        %v768 = vsel %vm704, 1, 0
        %v769 = vsel %vm705, 1, 0
        %v770 = vsel %vm706, 1, 0
        %v771 = vsel %vm707, 1, 0
        %v772 = vsel %vm708, 1, 0
        %v773 = vsel %vm709, 1, 0
        %v774 = vsel %vm710, 1, 0
        %v775 = vsel %vm711, 1, 0
        %v776 = vsel %vm712, 1, 0
        %v777 = vsel %vm713, 1, 0
        %v778 = vsel %vm714, 1, 0
        %v779 = vsel %vm715, 1, 0
        %v780 = vsel %vm716, 1, 0
        %v781 = vsel %vm717, 1, 0
        %v782 = vsel %vm718, 1, 0
        %v783 = vsel %vm719, 1, 0
        %v784 = vcvt.s32.f32 %v720
        %v785 = vcvt.s32.f32 %v721
        %v786 = vcvt.s32.f32 %v722
        %v787 = vcvt.s32.f32 %v723
        %v788 = vcvt.s32.f32 %v724
        %v789 = vcvt.s32.f32 %v725
        %v790 = vcvt.s32.f32 %v726
        %v791 = vcvt.s32.f32 %v727
        %v792 = vcvt.s32.f32 %v728
        %v793 = vcvt.s32.f32 %v729
        %v794 = vcvt.s32.f32 %v730
        %v795 = vcvt.s32.f32 %v731
        %v796 = vcvt.s32.f32 %v732
        %v797 = vcvt.s32.f32 %v733
        %v798 = vcvt.s32.f32 %v734
        %v799 = vcvt.s32.f32 %v735
        %v800 = vcvt.s32.f32 %v736
        %v801 = vcvt.s32.f32 %v737
        %v802 = vcvt.s32.f32 %v738
        %v803 = vcvt.s32.f32 %v739
        %v804 = vcvt.s32.f32 %v740
        %v805 = vcvt.s32.f32 %v741
        %v806 = vcvt.s32.f32 %v742
        %v807 = vcvt.s32.f32 %v743
        %v808 = vcvt.s32.f32 %v744
        %v809 = vcvt.s32.f32 %v745
        %v810 = vcvt.s32.f32 %v746
        %v811 = vcvt.s32.f32 %v747
        %v812 = vcvt.s32.f32 %v748
        %v813 = vcvt.s32.f32 %v749
        %v814 = vcvt.s32.f32 %v750
        %v815 = vcvt.s32.f32 %v751
        %v816 = vcvt.s32.f32 %v752
        %v817 = vcvt.s32.f32 %v753
        %v818 = vcvt.s32.f32 %v754
        %v819 = vcvt.s32.f32 %v755
        %v820 = vcvt.s32.f32 %v756
        %v821 = vcvt.s32.f32 %v757
        %v822 = vcvt.s32.f32 %v758
        %v823 = vcvt.s32.f32 %v759
        %v824 = vcvt.s32.f32 %v760
        %v825 = vcvt.s32.f32 %v761
        %v826 = vcvt.s32.f32 %v762
        %v827 = vcvt.s32.f32 %v763
        %v828 = vcvt.s32.f32 %v764
        %v829 = vcvt.s32.f32 %v765
        %v830 = vcvt.s32.f32 %v766
        %v831 = vcvt.s32.f32 %v767
        %v832 = vcvt.s32.f32 %v768
        %v833 = vcvt.s32.f32 %v769
        %v834 = vcvt.s32.f32 %v770
        %v835 = vcvt.s32.f32 %v771
        %v836 = vcvt.s32.f32 %v772
        %v837 = vcvt.s32.f32 %v773
        %v838 = vcvt.s32.f32 %v774
        %v839 = vcvt.s32.f32 %v775
        %v840 = vcvt.s32.f32 %v776
        %v841 = vcvt.s32.f32 %v777
        %v842 = vcvt.s32.f32 %v778
        %v843 = vcvt.s32.f32 %v779
        %v844 = vcvt.s32.f32 %v780
        %v845 = vcvt.s32.f32 %v781
        %v846 = vcvt.s32.f32 %v782
        %v847 = vcvt.s32.f32 %v783
        %v848 = vld [vmem:[%s438] sm:$0xf]
        %v849 = vld [vmem:[%s438 + $0x4] sm:$0xf]
        %v850 = vld [vmem:[%s438 + $0x8] sm:$0xf]
        %v851 = vld [vmem:[%s438 + $0xc] sm:$0xf]
        %v852 = vld [vmem:[%s438 + $0x10] sm:$0xf]
        %v853 = vld [vmem:[%s438 + $0x14] sm:$0xf]
        %v854 = vld [vmem:[%s438 + $0x18] sm:$0xf]
        %v855 = vld [vmem:[%s438 + $0x1c] sm:$0xf]
        %v856 = vld [vmem:[%s438 + $0x20] sm:$0xf]
        %v857 = vld [vmem:[%s438 + $0x24] sm:$0xf]
        %v858 = vld [vmem:[%s438 + $0x28] sm:$0xf]
        %v859 = vld [vmem:[%s438 + $0x2c] sm:$0xf]
        %v860 = vld [vmem:[%s438 + $0x30] sm:$0xf]
        %v861 = vld [vmem:[%s438 + $0x34] sm:$0xf]
        %v862 = vld [vmem:[%s438 + $0x38] sm:$0xf]
        %v863 = vld [vmem:[%s438 + $0x3c] sm:$0xf]
        %v864 = vld [vmem:[%s438 + $0x40] sm:$0xf]
        %v865 = vld [vmem:[%s438 + $0x44] sm:$0xf]
        %v866 = vld [vmem:[%s438 + $0x48] sm:$0xf]
        %v867 = vld [vmem:[%s438 + $0x4c] sm:$0xf]
        %v868 = vld [vmem:[%s438 + $0x50] sm:$0xf]
        %v869 = vld [vmem:[%s438 + $0x54] sm:$0xf]
        %v870 = vld [vmem:[%s438 + $0x58] sm:$0xf]
        %v871 = vld [vmem:[%s438 + $0x5c] sm:$0xf]
        %v872 = vld [vmem:[%s438 + $0x60] sm:$0xf]
        %v873 = vld [vmem:[%s438 + $0x64] sm:$0xf]
        %v874 = vld [vmem:[%s438 + $0x68] sm:$0xf]
        %v875 = vld [vmem:[%s438 + $0x6c] sm:$0xf]
        %v876 = vld [vmem:[%s438 + $0x70] sm:$0xf]
        %v877 = vld [vmem:[%s438 + $0x74] sm:$0xf]
        %v878 = vld [vmem:[%s438 + $0x78] sm:$0xf]
        %v879 = vld [vmem:[%s438 + $0x7c] sm:$0xf]
        %v880 = vld [vmem:[%s438 + $0x80] sm:$0xf]
        %v881 = vld [vmem:[%s438 + $0x84] sm:$0xf]
        %v882 = vld [vmem:[%s438 + $0x88] sm:$0xf]
        %v883 = vld [vmem:[%s438 + $0x8c] sm:$0xf]
        %v884 = vld [vmem:[%s438 + $0x90] sm:$0xf]
        %v885 = vld [vmem:[%s438 + $0x94] sm:$0xf]
        %v886 = vld [vmem:[%s438 + $0x98] sm:$0xf]
        %v887 = vld [vmem:[%s438 + $0x9c] sm:$0xf]
        %v888 = vld [vmem:[%s438 + $0xa0] sm:$0xf]
        %v889 = vld [vmem:[%s438 + $0xa4] sm:$0xf]
        %v890 = vld [vmem:[%s438 + $0xa8] sm:$0xf]
        %v891 = vld [vmem:[%s438 + $0xac] sm:$0xf]
        %v892 = vld [vmem:[%s438 + $0xb0] sm:$0xf]
        %v893 = vld [vmem:[%s438 + $0xb4] sm:$0xf]
        %v894 = vld [vmem:[%s438 + $0xb8] sm:$0xf]
        %v895 = vld [vmem:[%s438 + $0xbc] sm:$0xf]
        %v896 = vld [vmem:[%s438 + $0xc0] sm:$0xf]
        %v897 = vld [vmem:[%s438 + $0xc4] sm:$0xf]
        %v898 = vld [vmem:[%s438 + $0xc8] sm:$0xf]
        %v899 = vld [vmem:[%s438 + $0xcc] sm:$0xf]
        %v900 = vld [vmem:[%s438 + $0xd0] sm:$0xf]
        %v901 = vld [vmem:[%s438 + $0xd4] sm:$0xf]
        %v902 = vld [vmem:[%s438 + $0xd8] sm:$0xf]
        %v903 = vld [vmem:[%s438 + $0xdc] sm:$0xf]
        %v904 = vld [vmem:[%s438 + $0xe0] sm:$0xf]
        %v905 = vld [vmem:[%s438 + $0xe4] sm:$0xf]
        %v906 = vld [vmem:[%s438 + $0xe8] sm:$0xf]
        %v907 = vld [vmem:[%s438 + $0xec] sm:$0xf]
        %v908 = vld [vmem:[%s438 + $0xf0] sm:$0xf]
        %v909 = vld [vmem:[%s438 + $0xf4] sm:$0xf]
        %v910 = vld [vmem:[%s438 + $0xf8] sm:$0xf]
        %v911 = vld [vmem:[%s438 + $0xfc] sm:$0xf]
        %v912 = vld [vmem:[#allocation5] sm:$0xff]
        %v913 = vld [vmem:[#allocation5 + $0x8] sm:$0xff]
        %v914 = vld [vmem:[#allocation5 + $0x10] sm:$0xff]
        %v915 = vld [vmem:[#allocation5 + $0x18] sm:$0xff]
        %v916 = vld [vmem:[#allocation5 + $0x20] sm:$0xff]
        %v917 = vld [vmem:[#allocation5 + $0x28] sm:$0xff]
        %v918 = vld [vmem:[#allocation5 + $0x30] sm:$0xff]
        %v919 = vld [vmem:[#allocation5 + $0x38] sm:$0xff]
        %v920 = vld [vmem:[#allocation5 + $0x40] sm:$0xff]
        %v921 = vld [vmem:[#allocation5 + $0x48] sm:$0xff]
        %v922 = vld [vmem:[#allocation5 + $0x50] sm:$0xff]
        %v923 = vld [vmem:[#allocation5 + $0x58] sm:$0xff]
        %v924 = vld [vmem:[#allocation5 + $0x60] sm:$0xff]
        %v925 = vld [vmem:[#allocation5 + $0x68] sm:$0xff]
        %v926 = vld [vmem:[#allocation5 + $0x70] sm:$0xff]
        %v927 = vld [vmem:[#allocation5 + $0x78] sm:$0xff]
        %v928 = vld [vmem:[%s2] sm:$0x3]
        %v930 = vlaneseq
        %v931 = vshrl.u32 %v930, 7
        %v932 = vsub.s32 0, %v931
        %v933 = vrot.slane %v928, %v932
        %v934 = vlaneseq
        %v935 = vshrl.u32 %v934, 7
        %v936 = vsub.s32 1, %v935
        %v937 = vrot.slane %v928, %v936
        %v1004 = vunpack.c.l.b16 %v848
        %v1005 = vunpack.c.l.b16 %v849
        %v1006 = vunpack.c.l.b16 %v850
        %v1007 = vunpack.c.l.b16 %v851
        %v1008 = vunpack.c.l.b16 %v852
        %v1009 = vunpack.c.l.b16 %v853
        %v1010 = vunpack.c.l.b16 %v854
        %v1011 = vunpack.c.l.b16 %v855
        %v1012 = vunpack.c.l.b16 %v856
        %v1013 = vunpack.c.l.b16 %v857
        %v1014 = vunpack.c.l.b16 %v858
        %v1015 = vunpack.c.l.b16 %v859
        %v1016 = vunpack.c.l.b16 %v860
        %v1017 = vunpack.c.l.b16 %v861
        %v1018 = vunpack.c.l.b16 %v862
        %v1019 = vunpack.c.l.b16 %v863
        %v1020 = vunpack.c.l.b16 %v864
        %v1021 = vunpack.c.l.b16 %v865
        %v1022 = vunpack.c.l.b16 %v866
        %v1023 = vunpack.c.l.b16 %v867
        %v1024 = vunpack.c.l.b16 %v868
        %v1025 = vunpack.c.l.b16 %v869
        %v1026 = vunpack.c.l.b16 %v870
        %v1027 = vunpack.c.l.b16 %v871
        %v1028 = vunpack.c.l.b16 %v872
        %v1029 = vunpack.c.l.b16 %v873
        %v1030 = vunpack.c.l.b16 %v874
        %v1031 = vunpack.c.l.b16 %v875
        %v1032 = vunpack.c.l.b16 %v876
        %v1033 = vunpack.c.l.b16 %v877
        %v1034 = vunpack.c.l.b16 %v878
        %v1035 = vunpack.c.l.b16 %v879
        %v1036 = vunpack.c.l.b16 %v880
        %v1037 = vunpack.c.l.b16 %v881
        %v1038 = vunpack.c.l.b16 %v882
        %v1039 = vunpack.c.l.b16 %v883
        %v1040 = vunpack.c.l.b16 %v884
        %v1041 = vunpack.c.l.b16 %v885
        %v1042 = vunpack.c.l.b16 %v886
        %v1043 = vunpack.c.l.b16 %v887
        %v1044 = vunpack.c.l.b16 %v888
        %v1045 = vunpack.c.l.b16 %v889
        %v1046 = vunpack.c.l.b16 %v890
        %v1047 = vunpack.c.l.b16 %v891
        %v1048 = vunpack.c.l.b16 %v892
        %v1049 = vunpack.c.l.b16 %v893
        %v1050 = vunpack.c.l.b16 %v894
        %v1051 = vunpack.c.l.b16 %v895
        %v1052 = vunpack.c.l.b16 %v896
        %v1053 = vunpack.c.l.b16 %v897
        %v1054 = vunpack.c.l.b16 %v898
        %v1055 = vunpack.c.l.b16 %v899
        %v1056 = vunpack.c.l.b16 %v900
        %v1057 = vunpack.c.l.b16 %v901
        %v1058 = vunpack.c.l.b16 %v902
        %v1059 = vunpack.c.l.b16 %v903
        %v1060 = vunpack.c.l.b16 %v904
        %v1061 = vunpack.c.l.b16 %v905
        %v1062 = vunpack.c.l.b16 %v906
        %v1063 = vunpack.c.l.b16 %v907
        %v1064 = vunpack.c.l.b16 %v908
        %v1065 = vunpack.c.l.b16 %v909
        %v1066 = vunpack.c.l.b16 %v910
        %v1067 = vunpack.c.l.b16 %v911
        %v1068 = vpack.c.b16 %v1005, %v1004
        %v1069 = vpack.c.b16 %v1007, %v1006
        %v1070 = vpack.c.b16 %v1009, %v1008
        %v1071 = vpack.c.b16 %v1011, %v1010
        %v1072 = vpack.c.b16 %v1013, %v1012
        %v1073 = vpack.c.b16 %v1015, %v1014
        %v1074 = vpack.c.b16 %v1017, %v1016
        %v1075 = vpack.c.b16 %v1019, %v1018
        %v1076 = vpack.c.b16 %v1021, %v1020
        %v1077 = vpack.c.b16 %v1023, %v1022
        %v1078 = vpack.c.b16 %v1025, %v1024
        %v1079 = vpack.c.b16 %v1027, %v1026
        %v1080 = vpack.c.b16 %v1029, %v1028
        %v1081 = vpack.c.b16 %v1031, %v1030
        %v1082 = vpack.c.b16 %v1033, %v1032
        %v1083 = vpack.c.b16 %v1035, %v1034
        %v1084 = vpack.c.b16 %v1037, %v1036
        %v1085 = vpack.c.b16 %v1039, %v1038
        %v1086 = vpack.c.b16 %v1041, %v1040
        %v1087 = vpack.c.b16 %v1043, %v1042
        %v1088 = vpack.c.b16 %v1045, %v1044
        %v1089 = vpack.c.b16 %v1047, %v1046
        %v1090 = vpack.c.b16 %v1049, %v1048
        %v1091 = vpack.c.b16 %v1051, %v1050
        %v1092 = vpack.c.b16 %v1053, %v1052
        %v1093 = vpack.c.b16 %v1055, %v1054
        %v1094 = vpack.c.b16 %v1057, %v1056
        %v1095 = vpack.c.b16 %v1059, %v1058
        %v1096 = vpack.c.b16 %v1061, %v1060
        %v1097 = vpack.c.b16 %v1063, %v1062
        %v1098 = vpack.c.b16 %v1065, %v1064
        %v1099 = vpack.c.b16 %v1067, %v1066
        %v1148 = vunpack.c.l.b16 %v912
        %v1149 = vunpack.c.h.b16 %v912
        %v1150 = vunpack.c.l.b16 %v913
        %v1151 = vunpack.c.h.b16 %v913
        %v1152 = vunpack.c.l.b16 %v914
        %v1153 = vunpack.c.h.b16 %v914
        %v1154 = vunpack.c.l.b16 %v915
        %v1155 = vunpack.c.h.b16 %v915
        %v1156 = vunpack.c.l.b16 %v916
        %v1157 = vunpack.c.h.b16 %v916
        %v1158 = vunpack.c.l.b16 %v917
        %v1159 = vunpack.c.h.b16 %v917
        %v1160 = vunpack.c.l.b16 %v918
        %v1161 = vunpack.c.h.b16 %v918
        %v1162 = vunpack.c.l.b16 %v919
        %v1163 = vunpack.c.h.b16 %v919
        %v1164 = vunpack.c.l.b16 %v920
        %v1165 = vunpack.c.h.b16 %v920
        %v1166 = vunpack.c.l.b16 %v921
        %v1167 = vunpack.c.h.b16 %v921
        %v1168 = vunpack.c.l.b16 %v922
        %v1169 = vunpack.c.h.b16 %v922
        %v1170 = vunpack.c.l.b16 %v923
        %v1171 = vunpack.c.h.b16 %v923
        %v1172 = vunpack.c.l.b16 %v924
        %v1173 = vunpack.c.h.b16 %v924
        %v1174 = vunpack.c.l.b16 %v925
        %v1175 = vunpack.c.h.b16 %v925
        %v1176 = vunpack.c.l.b16 %v926
        %v1177 = vunpack.c.h.b16 %v926
        %v1178 = vunpack.c.l.b16 %v927
        %v1179 = vunpack.c.h.b16 %v927
        %v1180 = vpack.c.b16 %v1150, %v1148
        %v1181 = vpack.c.b16 %v1151, %v1149
        %v1182 = vpack.c.b16 %v1154, %v1152
        %v1183 = vpack.c.b16 %v1155, %v1153
        %v1184 = vpack.c.b16 %v1158, %v1156
        %v1185 = vpack.c.b16 %v1159, %v1157
        %v1186 = vpack.c.b16 %v1162, %v1160
        %v1187 = vpack.c.b16 %v1163, %v1161
        %v1188 = vpack.c.b16 %v1166, %v1164
        %v1189 = vpack.c.b16 %v1167, %v1165
        %v1190 = vpack.c.b16 %v1170, %v1168
        %v1191 = vpack.c.b16 %v1171, %v1169
        %v1192 = vpack.c.b16 %v1174, %v1172
        %v1193 = vpack.c.b16 %v1175, %v1173
        %v1194 = vpack.c.b16 %v1178, %v1176
        %v1195 = vpack.c.b16 %v1179, %v1177
        %1212 = vmatprep.subr.bf16.mxu0 %v1195
        %1213 = vmatpush1.bf16.msra.mxu0 %v1194
        %1214 = vmatprep.subr.bf16.mxu0 %v1193
        %1215 = vmatpush1.bf16.msra.mxu0 %v1192
        %1216 = vmatprep.subr.bf16.mxu0 %v1191
        %1217 = vmatpush1.bf16.msra.mxu0 %v1190
        %1218 = vmatprep.subr.bf16.mxu0 %v1189
        %1219 = vmatpush1.bf16.msra.mxu0 %v1188
        %1220 = vmatprep.subr.bf16.mxu0 %v1187
        %1221 = vmatpush1.bf16.msra.mxu0 %v1186
        %1222 = vmatprep.subr.bf16.mxu0 %v1185
        %1223 = vmatpush1.bf16.msra.mxu0 %v1184
        %1224 = vmatprep.subr.bf16.mxu0 %v1183
        %1225 = vmatpush1.bf16.msra.mxu0 %v1182
        %1226 = vmatprep.subr.bf16.mxu0 %v1181
        %1227 = vmatpush1.bf16.msra.mxu0 %v1180
        %1228 = vmatprep.subr.bf16.mxu0 0
        %1229 = vmatpush2.bf16.msra.mxu0 0
        %1230 = vmatprep.subr.bf16.mxu0 0
        %1231 = vmatpush2.bf16.msra.mxu0 0
        %1232 = vmatprep.subr.bf16.mxu0 0
        %1233 = vmatpush2.bf16.msra.mxu0 0
        %1234 = vmatprep.subr.bf16.mxu0 0
        %1235 = vmatpush2.bf16.msra.mxu0 0
        %1236 = vmatprep.subr.bf16.mxu0 0
        %1237 = vmatpush2.bf16.msra.mxu0 0
        %1238 = vmatprep.subr.bf16.mxu0 0
        %1239 = vmatpush2.bf16.msra.mxu0 0
        %1240 = vmatprep.subr.bf16.mxu0 0
        %1241 = vmatpush2.bf16.msra.mxu0 0
        %1242 = vmatprep.subr.bf16.mxu0 0
        %1243 = vmatpush2.bf16.msra.mxu0 0
        %1244 = vmatprep.mubr.bf16.mxu0 0
        %1245 = vmatmul.mubr.bf16.gmra.mxu0 %v1068
        %v1246 = vpop.f32.mrf.mxu0
        %v1247 = vadd.f32 %v933, %v1246
        %v1248 = vpop.f32.mrf.mxu0
        %v1249 = vadd.f32 %v937, %v1248
        %v1250 = vpop.f32.mrf.mxu0
        %v1251 = vadd.f32 %v933, %v1250
        %v1252 = vpop.f32.mrf.mxu0
        %v1253 = vadd.f32 %v937, %v1252
        %1254 = vmatprep.mubr.bf16.mxu0 0
        %1255 = vmatmul.mubr.bf16.gmra.mxu0 %v1069
        %v1256 = vpop.f32.mrf.mxu0
        %v1257 = vadd.f32 %v933, %v1256
        %v1258 = vpop.f32.mrf.mxu0
        %v1259 = vadd.f32 %v937, %v1258
        %v1260 = vpop.f32.mrf.mxu0
        %v1261 = vadd.f32 %v933, %v1260
        %v1262 = vpop.f32.mrf.mxu0
        %v1263 = vadd.f32 %v937, %v1262
        %1264 = vmatprep.mubr.bf16.mxu0 0
        %1265 = vmatmul.mubr.bf16.gmra.mxu0 %v1070
        %v1266 = vpop.f32.mrf.mxu0
        %v1267 = vadd.f32 %v933, %v1266
        %v1268 = vpop.f32.mrf.mxu0
        %v1269 = vadd.f32 %v937, %v1268
        %v1270 = vpop.f32.mrf.mxu0
        %v1271 = vadd.f32 %v933, %v1270
        %v1272 = vpop.f32.mrf.mxu0
        %v1273 = vadd.f32 %v937, %v1272
        %1274 = vmatprep.mubr.bf16.mxu0 0
        %1275 = vmatmul.mubr.bf16.gmra.mxu0 %v1071
        %v1276 = vpop.f32.mrf.mxu0
        %v1277 = vadd.f32 %v933, %v1276
        %v1278 = vpop.f32.mrf.mxu0
        %v1279 = vadd.f32 %v937, %v1278
        %v1280 = vpop.f32.mrf.mxu0
        %v1281 = vadd.f32 %v933, %v1280
        %v1282 = vpop.f32.mrf.mxu0
        %v1283 = vadd.f32 %v937, %v1282
        %1284 = vmatprep.mubr.bf16.mxu0 0
        %1285 = vmatmul.mubr.bf16.gmra.mxu0 %v1072
        %v1286 = vpop.f32.mrf.mxu0
        %v1287 = vadd.f32 %v933, %v1286
        %v1288 = vpop.f32.mrf.mxu0
        %v1289 = vadd.f32 %v937, %v1288
        %v1290 = vpop.f32.mrf.mxu0
        %v1291 = vadd.f32 %v933, %v1290
        %v1292 = vpop.f32.mrf.mxu0
        %v1293 = vadd.f32 %v937, %v1292
        %1294 = vmatprep.mubr.bf16.mxu0 0
        %1295 = vmatmul.mubr.bf16.gmra.mxu0 %v1073
        %v1296 = vpop.f32.mrf.mxu0
        %v1297 = vadd.f32 %v933, %v1296
        %v1298 = vpop.f32.mrf.mxu0
        %v1299 = vadd.f32 %v937, %v1298
        %v1300 = vpop.f32.mrf.mxu0
        %v1301 = vadd.f32 %v933, %v1300
        %v1302 = vpop.f32.mrf.mxu0
        %v1303 = vadd.f32 %v937, %v1302
        %1304 = vmatprep.mubr.bf16.mxu0 0
        %1305 = vmatmul.mubr.bf16.gmra.mxu0 %v1074
        %v1306 = vpop.f32.mrf.mxu0
        %v1307 = vadd.f32 %v933, %v1306
        %v1308 = vpop.f32.mrf.mxu0
        %v1309 = vadd.f32 %v937, %v1308
        %v1310 = vpop.f32.mrf.mxu0
        %v1311 = vadd.f32 %v933, %v1310
        %v1312 = vpop.f32.mrf.mxu0
        %v1313 = vadd.f32 %v937, %v1312
        %1314 = vmatprep.mubr.bf16.mxu0 0
        %1315 = vmatmul.mubr.bf16.gmra.mxu0 %v1075
        %v1316 = vpop.f32.mrf.mxu0
        %v1317 = vadd.f32 %v933, %v1316
        %v1318 = vpop.f32.mrf.mxu0
        %v1319 = vadd.f32 %v937, %v1318
        %v1320 = vpop.f32.mrf.mxu0
        %v1321 = vadd.f32 %v933, %v1320
        %v1322 = vpop.f32.mrf.mxu0
        %v1323 = vadd.f32 %v937, %v1322
        %1324 = vmatprep.mubr.bf16.mxu0 0
        %1325 = vmatmul.mubr.bf16.gmra.mxu0 %v1076
        %v1326 = vpop.f32.mrf.mxu0
        %v1327 = vadd.f32 %v933, %v1326
        %v1328 = vpop.f32.mrf.mxu0
        %v1329 = vadd.f32 %v937, %v1328
        %v1330 = vpop.f32.mrf.mxu0
        %v1331 = vadd.f32 %v933, %v1330
        %v1332 = vpop.f32.mrf.mxu0
        %v1333 = vadd.f32 %v937, %v1332
        %1334 = vmatprep.mubr.bf16.mxu0 0
        %1335 = vmatmul.mubr.bf16.gmra.mxu0 %v1077
        %v1336 = vpop.f32.mrf.mxu0
        %v1337 = vadd.f32 %v933, %v1336
        %v1338 = vpop.f32.mrf.mxu0
        %v1339 = vadd.f32 %v937, %v1338
        %v1340 = vpop.f32.mrf.mxu0
        %v1341 = vadd.f32 %v933, %v1340
        %v1342 = vpop.f32.mrf.mxu0
        %v1343 = vadd.f32 %v937, %v1342
        %1344 = vmatprep.mubr.bf16.mxu0 0
        %1345 = vmatmul.mubr.bf16.gmra.mxu0 %v1078
        %v1346 = vpop.f32.mrf.mxu0
        %v1347 = vadd.f32 %v933, %v1346
        %v1348 = vpop.f32.mrf.mxu0
        %v1349 = vadd.f32 %v937, %v1348
        %v1350 = vpop.f32.mrf.mxu0
        %v1351 = vadd.f32 %v933, %v1350
        %v1352 = vpop.f32.mrf.mxu0
        %v1353 = vadd.f32 %v937, %v1352
        %1354 = vmatprep.mubr.bf16.mxu0 0
        %1355 = vmatmul.mubr.bf16.gmra.mxu0 %v1079
        %v1356 = vpop.f32.mrf.mxu0
        %v1357 = vadd.f32 %v933, %v1356
        %v1358 = vpop.f32.mrf.mxu0
        %v1359 = vadd.f32 %v937, %v1358
        %v1360 = vpop.f32.mrf.mxu0
        %v1361 = vadd.f32 %v933, %v1360
        %v1362 = vpop.f32.mrf.mxu0
        %v1363 = vadd.f32 %v937, %v1362
        %1364 = vmatprep.mubr.bf16.mxu0 0
        %1365 = vmatmul.mubr.bf16.gmra.mxu0 %v1080
        %v1366 = vpop.f32.mrf.mxu0
        %v1367 = vadd.f32 %v933, %v1366
        %v1368 = vpop.f32.mrf.mxu0
        %v1369 = vadd.f32 %v937, %v1368
        %v1370 = vpop.f32.mrf.mxu0
        %v1371 = vadd.f32 %v933, %v1370
        %v1372 = vpop.f32.mrf.mxu0
        %v1373 = vadd.f32 %v937, %v1372
        %1374 = vmatprep.mubr.bf16.mxu0 0
        %1375 = vmatmul.mubr.bf16.gmra.mxu0 %v1081
        %v1376 = vpop.f32.mrf.mxu0
        %v1377 = vadd.f32 %v933, %v1376
        %v1378 = vpop.f32.mrf.mxu0
        %v1379 = vadd.f32 %v937, %v1378
        %v1380 = vpop.f32.mrf.mxu0
        %v1381 = vadd.f32 %v933, %v1380
        %v1382 = vpop.f32.mrf.mxu0
        %v1383 = vadd.f32 %v937, %v1382
        %1384 = vmatprep.mubr.bf16.mxu0 0
        %1385 = vmatmul.mubr.bf16.gmra.mxu0 %v1082
        %v1386 = vpop.f32.mrf.mxu0
        %v1387 = vadd.f32 %v933, %v1386
        %v1388 = vpop.f32.mrf.mxu0
        %v1389 = vadd.f32 %v937, %v1388
        %v1390 = vpop.f32.mrf.mxu0
        %v1391 = vadd.f32 %v933, %v1390
        %v1392 = vpop.f32.mrf.mxu0
        %v1393 = vadd.f32 %v937, %v1392
        %1394 = vmatprep.mubr.bf16.mxu0 0
        %1395 = vmatmul.mubr.bf16.gmra.mxu0 %v1083
        %v1396 = vpop.f32.mrf.mxu0
        %v1397 = vadd.f32 %v933, %v1396
        %v1398 = vpop.f32.mrf.mxu0
        %v1399 = vadd.f32 %v937, %v1398
        %v1400 = vpop.f32.mrf.mxu0
        %v1401 = vadd.f32 %v933, %v1400
        %v1402 = vpop.f32.mrf.mxu0
        %v1403 = vadd.f32 %v937, %v1402
        %1404 = vmatprep.mubr.bf16.mxu0 0
        %1405 = vmatmul.mubr.bf16.gmra.mxu0 %v1084
        %v1406 = vpop.f32.mrf.mxu0
        %v1407 = vadd.f32 %v933, %v1406
        %v1408 = vpop.f32.mrf.mxu0
        %v1409 = vadd.f32 %v937, %v1408
        %v1410 = vpop.f32.mrf.mxu0
        %v1411 = vadd.f32 %v933, %v1410
        %v1412 = vpop.f32.mrf.mxu0
        %v1413 = vadd.f32 %v937, %v1412
        %1414 = vmatprep.mubr.bf16.mxu0 0
        %1415 = vmatmul.mubr.bf16.gmra.mxu0 %v1085
        %v1416 = vpop.f32.mrf.mxu0
        %v1417 = vadd.f32 %v933, %v1416
        %v1418 = vpop.f32.mrf.mxu0
        %v1419 = vadd.f32 %v937, %v1418
        %v1420 = vpop.f32.mrf.mxu0
        %v1421 = vadd.f32 %v933, %v1420
        %v1422 = vpop.f32.mrf.mxu0
        %v1423 = vadd.f32 %v937, %v1422
        %1424 = vmatprep.mubr.bf16.mxu0 0
        %1425 = vmatmul.mubr.bf16.gmra.mxu0 %v1086
        %v1426 = vpop.f32.mrf.mxu0
        %v1427 = vadd.f32 %v933, %v1426
        %v1428 = vpop.f32.mrf.mxu0
        %v1429 = vadd.f32 %v937, %v1428
        %v1430 = vpop.f32.mrf.mxu0
        %v1431 = vadd.f32 %v933, %v1430
        %v1432 = vpop.f32.mrf.mxu0
        %v1433 = vadd.f32 %v937, %v1432
        %1434 = vmatprep.mubr.bf16.mxu0 0
        %1435 = vmatmul.mubr.bf16.gmra.mxu0 %v1087
        %v1436 = vpop.f32.mrf.mxu0
        %v1437 = vadd.f32 %v933, %v1436
        %v1438 = vpop.f32.mrf.mxu0
        %v1439 = vadd.f32 %v937, %v1438
        %v1440 = vpop.f32.mrf.mxu0
        %v1441 = vadd.f32 %v933, %v1440
        %v1442 = vpop.f32.mrf.mxu0
        %v1443 = vadd.f32 %v937, %v1442
        %1444 = vmatprep.mubr.bf16.mxu0 0
        %1445 = vmatmul.mubr.bf16.gmra.mxu0 %v1088
        %v1446 = vpop.f32.mrf.mxu0
        %v1447 = vadd.f32 %v933, %v1446
        %v1448 = vpop.f32.mrf.mxu0
        %v1449 = vadd.f32 %v937, %v1448
        %v1450 = vpop.f32.mrf.mxu0
        %v1451 = vadd.f32 %v933, %v1450
        %v1452 = vpop.f32.mrf.mxu0
        %v1453 = vadd.f32 %v937, %v1452
        %1454 = vmatprep.mubr.bf16.mxu0 0
        %1455 = vmatmul.mubr.bf16.gmra.mxu0 %v1089
        %v1456 = vpop.f32.mrf.mxu0
        %v1457 = vadd.f32 %v933, %v1456
        %v1458 = vpop.f32.mrf.mxu0
        %v1459 = vadd.f32 %v937, %v1458
        %v1460 = vpop.f32.mrf.mxu0
        %v1461 = vadd.f32 %v933, %v1460
        %v1462 = vpop.f32.mrf.mxu0
        %v1463 = vadd.f32 %v937, %v1462
        %1464 = vmatprep.mubr.bf16.mxu0 0
        %1465 = vmatmul.mubr.bf16.gmra.mxu0 %v1090
        %v1466 = vpop.f32.mrf.mxu0
        %v1467 = vadd.f32 %v933, %v1466
        %v1468 = vpop.f32.mrf.mxu0
        %v1469 = vadd.f32 %v937, %v1468
        %v1470 = vpop.f32.mrf.mxu0
        %v1471 = vadd.f32 %v933, %v1470
        %v1472 = vpop.f32.mrf.mxu0
        %v1473 = vadd.f32 %v937, %v1472
        %1474 = vmatprep.mubr.bf16.mxu0 0
        %1475 = vmatmul.mubr.bf16.gmra.mxu0 %v1091
        %v1476 = vpop.f32.mrf.mxu0
        %v1477 = vadd.f32 %v933, %v1476
        %v1478 = vpop.f32.mrf.mxu0
        %v1479 = vadd.f32 %v937, %v1478
        %v1480 = vpop.f32.mrf.mxu0
        %v1481 = vadd.f32 %v933, %v1480
        %v1482 = vpop.f32.mrf.mxu0
        %v1483 = vadd.f32 %v937, %v1482
        %1484 = vmatprep.mubr.bf16.mxu0 0
        %1485 = vmatmul.mubr.bf16.gmra.mxu0 %v1092
        %v1486 = vpop.f32.mrf.mxu0
        %v1487 = vadd.f32 %v933, %v1486
        %v1488 = vpop.f32.mrf.mxu0
        %v1489 = vadd.f32 %v937, %v1488
        %v1490 = vpop.f32.mrf.mxu0
        %v1491 = vadd.f32 %v933, %v1490
        %v1492 = vpop.f32.mrf.mxu0
        %v1493 = vadd.f32 %v937, %v1492
        %1494 = vmatprep.mubr.bf16.mxu0 0
        %1495 = vmatmul.mubr.bf16.gmra.mxu0 %v1093
        %v1496 = vpop.f32.mrf.mxu0
        %v1497 = vadd.f32 %v933, %v1496
        %v1498 = vpop.f32.mrf.mxu0
        %v1499 = vadd.f32 %v937, %v1498
        %v1500 = vpop.f32.mrf.mxu0
        %v1501 = vadd.f32 %v933, %v1500
        %v1502 = vpop.f32.mrf.mxu0
        %v1503 = vadd.f32 %v937, %v1502
        %1504 = vmatprep.mubr.bf16.mxu0 0
        %1505 = vmatmul.mubr.bf16.gmra.mxu0 %v1094
        %v1506 = vpop.f32.mrf.mxu0
        %v1507 = vadd.f32 %v933, %v1506
        %v1508 = vpop.f32.mrf.mxu0
        %v1509 = vadd.f32 %v937, %v1508
        %v1510 = vpop.f32.mrf.mxu0
        %v1511 = vadd.f32 %v933, %v1510
        %v1512 = vpop.f32.mrf.mxu0
        %v1513 = vadd.f32 %v937, %v1512
        %1514 = vmatprep.mubr.bf16.mxu0 0
        %1515 = vmatmul.mubr.bf16.gmra.mxu0 %v1095
        %v1516 = vpop.f32.mrf.mxu0
        %v1517 = vadd.f32 %v933, %v1516
        %v1518 = vpop.f32.mrf.mxu0
        %v1519 = vadd.f32 %v937, %v1518
        %v1520 = vpop.f32.mrf.mxu0
        %v1521 = vadd.f32 %v933, %v1520
        %v1522 = vpop.f32.mrf.mxu0
        %v1523 = vadd.f32 %v937, %v1522
        %1524 = vmatprep.mubr.bf16.mxu0 0
        %1525 = vmatmul.mubr.bf16.gmra.mxu0 %v1096
        %v1526 = vpop.f32.mrf.mxu0
        %v1527 = vadd.f32 %v933, %v1526
        %v1528 = vpop.f32.mrf.mxu0
        %v1529 = vadd.f32 %v937, %v1528
        %v1530 = vpop.f32.mrf.mxu0
        %v1531 = vadd.f32 %v933, %v1530
        %v1532 = vpop.f32.mrf.mxu0
        %v1533 = vadd.f32 %v937, %v1532
        %1534 = vmatprep.mubr.bf16.mxu0 0
        %1535 = vmatmul.mubr.bf16.gmra.mxu0 %v1097
        %v1536 = vpop.f32.mrf.mxu0
        %v1537 = vadd.f32 %v933, %v1536
        %v1538 = vpop.f32.mrf.mxu0
        %v1539 = vadd.f32 %v937, %v1538
        %v1540 = vpop.f32.mrf.mxu0
        %v1541 = vadd.f32 %v933, %v1540
        %v1542 = vpop.f32.mrf.mxu0
        %v1543 = vadd.f32 %v937, %v1542
        %1544 = vmatprep.mubr.bf16.mxu0 0
        %1545 = vmatmul.mubr.bf16.gmra.mxu0 %v1098
        %v1546 = vpop.f32.mrf.mxu0
        %v1547 = vadd.f32 %v933, %v1546
        %v1548 = vpop.f32.mrf.mxu0
        %v1549 = vadd.f32 %v937, %v1548
        %v1550 = vpop.f32.mrf.mxu0
        %v1551 = vadd.f32 %v933, %v1550
        %v1552 = vpop.f32.mrf.mxu0
        %v1553 = vadd.f32 %v937, %v1552
        %1554 = vmatprep.mubr.bf16.mxu0 0
        %1555 = vmatmul.mubr.bf16.gmra.mxu0 %v1099
        %v1556 = vpop.f32.mrf.mxu0
        %v1557 = vadd.f32 %v933, %v1556
        %v1558 = vpop.f32.mrf.mxu0
        %v1559 = vadd.f32 %v937, %v1558
        %v1560 = vpop.f32.mrf.mxu0
        %v1561 = vadd.f32 %v933, %v1560
        %v1562 = vpop.f32.mrf.mxu0
        %v1563 = vadd.f32 %v937, %v1562
        %1564 = vdwg.mxu0
        %1565 = vadd.xlane.f32.xlu0 %v1247
        %v1566 = vpop.xlane.xlu0 %1565
        %1567 = vadd.xlane.f32.xlu0 %v1251
        %v1568 = vpop.xlane.xlu0 %1567
        %1569 = vadd.xlane.f32.xlu0 %v1257
        %v1570 = vpop.xlane.xlu0 %1569
        %1571 = vadd.xlane.f32.xlu0 %v1261
        %v1572 = vpop.xlane.xlu0 %1571
        %1573 = vadd.xlane.f32.xlu0 %v1267
        %v1574 = vpop.xlane.xlu0 %1573
        %1575 = vadd.xlane.f32.xlu0 %v1271
        %v1576 = vpop.xlane.xlu0 %1575
        %1577 = vadd.xlane.f32.xlu0 %v1277
        %v1578 = vpop.xlane.xlu0 %1577
        %1579 = vadd.xlane.f32.xlu0 %v1281
        %v1580 = vpop.xlane.xlu0 %1579
        %1581 = vadd.xlane.f32.xlu0 %v1287
        %v1582 = vpop.xlane.xlu0 %1581
        %1583 = vadd.xlane.f32.xlu0 %v1291
        %v1584 = vpop.xlane.xlu0 %1583
        %1585 = vadd.xlane.f32.xlu0 %v1297
        %v1586 = vpop.xlane.xlu0 %1585
        %1587 = vadd.xlane.f32.xlu0 %v1301
        %v1588 = vpop.xlane.xlu0 %1587
        %1589 = vadd.xlane.f32.xlu0 %v1307
        %v1590 = vpop.xlane.xlu0 %1589
        %1591 = vadd.xlane.f32.xlu0 %v1311
        %v1592 = vpop.xlane.xlu0 %1591
        %1593 = vadd.xlane.f32.xlu0 %v1317
        %v1594 = vpop.xlane.xlu0 %1593
        %1595 = vadd.xlane.f32.xlu0 %v1321
        %v1596 = vpop.xlane.xlu0 %1595
        %1597 = vadd.xlane.f32.xlu0 %v1327
        %v1598 = vpop.xlane.xlu0 %1597
        %1599 = vadd.xlane.f32.xlu0 %v1331
        %v1600 = vpop.xlane.xlu0 %1599
        %1601 = vadd.xlane.f32.xlu0 %v1337
        %v1602 = vpop.xlane.xlu0 %1601
        %1603 = vadd.xlane.f32.xlu0 %v1341
        %v1604 = vpop.xlane.xlu0 %1603
        %1605 = vadd.xlane.f32.xlu0 %v1347
        %v1606 = vpop.xlane.xlu0 %1605
        %1607 = vadd.xlane.f32.xlu0 %v1351
        %v1608 = vpop.xlane.xlu0 %1607
        %1609 = vadd.xlane.f32.xlu0 %v1357
        %v1610 = vpop.xlane.xlu0 %1609
        %1611 = vadd.xlane.f32.xlu0 %v1361
        %v1612 = vpop.xlane.xlu0 %1611
        %1613 = vadd.xlane.f32.xlu0 %v1367
        %v1614 = vpop.xlane.xlu0 %1613
        %1615 = vadd.xlane.f32.xlu0 %v1371
        %v1616 = vpop.xlane.xlu0 %1615
        %1617 = vadd.xlane.f32.xlu0 %v1377
        %v1618 = vpop.xlane.xlu0 %1617
        %1619 = vadd.xlane.f32.xlu0 %v1381
        %v1620 = vpop.xlane.xlu0 %1619
        %1621 = vadd.xlane.f32.xlu0 %v1387
        %v1622 = vpop.xlane.xlu0 %1621
        %1623 = vadd.xlane.f32.xlu0 %v1391
        %v1624 = vpop.xlane.xlu0 %1623
        %1625 = vadd.xlane.f32.xlu0 %v1397
        %v1626 = vpop.xlane.xlu0 %1625
        %1627 = vadd.xlane.f32.xlu0 %v1401
        %v1628 = vpop.xlane.xlu0 %1627
        %1629 = vadd.xlane.f32.xlu0 %v1407
        %v1630 = vpop.xlane.xlu0 %1629
        %1631 = vadd.xlane.f32.xlu0 %v1411
        %v1632 = vpop.xlane.xlu0 %1631
        %1633 = vadd.xlane.f32.xlu0 %v1417
        %v1634 = vpop.xlane.xlu0 %1633
        %1635 = vadd.xlane.f32.xlu0 %v1421
        %v1636 = vpop.xlane.xlu0 %1635
        %1637 = vadd.xlane.f32.xlu0 %v1427
        %v1638 = vpop.xlane.xlu0 %1637
        %1639 = vadd.xlane.f32.xlu0 %v1431
        %v1640 = vpop.xlane.xlu0 %1639
        %1641 = vadd.xlane.f32.xlu0 %v1437
        %v1642 = vpop.xlane.xlu0 %1641
        %1643 = vadd.xlane.f32.xlu0 %v1441
        %v1644 = vpop.xlane.xlu0 %1643
        %1645 = vadd.xlane.f32.xlu0 %v1447
        %v1646 = vpop.xlane.xlu0 %1645
        %1647 = vadd.xlane.f32.xlu0 %v1451
        %v1648 = vpop.xlane.xlu0 %1647
        %1649 = vadd.xlane.f32.xlu0 %v1457
        %v1650 = vpop.xlane.xlu0 %1649
        %1651 = vadd.xlane.f32.xlu0 %v1461
        %v1652 = vpop.xlane.xlu0 %1651
        %1653 = vadd.xlane.f32.xlu0 %v1467
        %v1654 = vpop.xlane.xlu0 %1653
        %1655 = vadd.xlane.f32.xlu0 %v1471
        %v1656 = vpop.xlane.xlu0 %1655
        %1657 = vadd.xlane.f32.xlu0 %v1477
        %v1658 = vpop.xlane.xlu0 %1657
        %1659 = vadd.xlane.f32.xlu0 %v1481
        %v1660 = vpop.xlane.xlu0 %1659
        %1661 = vadd.xlane.f32.xlu0 %v1487
        %v1662 = vpop.xlane.xlu0 %1661
        %1663 = vadd.xlane.f32.xlu0 %v1491
        %v1664 = vpop.xlane.xlu0 %1663
        %1665 = vadd.xlane.f32.xlu0 %v1497
        %v1666 = vpop.xlane.xlu0 %1665
        %1667 = vadd.xlane.f32.xlu0 %v1501
        %v1668 = vpop.xlane.xlu0 %1667
        %1669 = vadd.xlane.f32.xlu0 %v1507
        %v1670 = vpop.xlane.xlu0 %1669
        %1671 = vadd.xlane.f32.xlu0 %v1511
        %v1672 = vpop.xlane.xlu0 %1671
        %1673 = vadd.xlane.f32.xlu0 %v1517
        %v1674 = vpop.xlane.xlu0 %1673
        %1675 = vadd.xlane.f32.xlu0 %v1521
        %v1676 = vpop.xlane.xlu0 %1675
        %1677 = vadd.xlane.f32.xlu0 %v1527
        %v1678 = vpop.xlane.xlu0 %1677
        %1679 = vadd.xlane.f32.xlu0 %v1531
        %v1680 = vpop.xlane.xlu0 %1679
        %1681 = vadd.xlane.f32.xlu0 %v1537
        %v1682 = vpop.xlane.xlu0 %1681
        %1683 = vadd.xlane.f32.xlu0 %v1541
        %v1684 = vpop.xlane.xlu0 %1683
        %1685 = vadd.xlane.f32.xlu0 %v1547
        %v1686 = vpop.xlane.xlu0 %1685
        %1687 = vadd.xlane.f32.xlu0 %v1551
        %v1688 = vpop.xlane.xlu0 %1687
        %1689 = vadd.xlane.f32.xlu0 %v1557
        %v1690 = vpop.xlane.xlu0 %1689
        %1691 = vadd.xlane.f32.xlu0 %v1561
        %v1692 = vpop.xlane.xlu0 %1691
        %v1693 = vrcp.pop 128.0
        %v1694 = vmul.f32 %v1566, %v1693
        %v1695 = vmul.f32 %v1568, %v1693
        %v1696 = vmul.f32 %v1570, %v1693
        %v1697 = vmul.f32 %v1572, %v1693
        %v1698 = vmul.f32 %v1574, %v1693
        %v1699 = vmul.f32 %v1576, %v1693
        %v1700 = vmul.f32 %v1578, %v1693
        %v1701 = vmul.f32 %v1580, %v1693
        %v1702 = vmul.f32 %v1582, %v1693
        %v1703 = vmul.f32 %v1584, %v1693
        %v1704 = vmul.f32 %v1586, %v1693
        %v1705 = vmul.f32 %v1588, %v1693
        %v1706 = vmul.f32 %v1590, %v1693
        %v1707 = vmul.f32 %v1592, %v1693
        %v1708 = vmul.f32 %v1594, %v1693
        %v1709 = vmul.f32 %v1596, %v1693
        %v1710 = vmul.f32 %v1598, %v1693
        %v1711 = vmul.f32 %v1600, %v1693
        %v1712 = vmul.f32 %v1602, %v1693
        %v1713 = vmul.f32 %v1604, %v1693
        %v1714 = vmul.f32 %v1606, %v1693
        %v1715 = vmul.f32 %v1608, %v1693
        %v1716 = vmul.f32 %v1610, %v1693
        %v1717 = vmul.f32 %v1612, %v1693
        %v1718 = vmul.f32 %v1614, %v1693
        %v1719 = vmul.f32 %v1616, %v1693
        %v1720 = vmul.f32 %v1618, %v1693
        %v1721 = vmul.f32 %v1620, %v1693
        %v1722 = vmul.f32 %v1622, %v1693
        %v1723 = vmul.f32 %v1624, %v1693
        %v1724 = vmul.f32 %v1626, %v1693
        %v1725 = vmul.f32 %v1628, %v1693
        %v1726 = vmul.f32 %v1630, %v1693
        %v1727 = vmul.f32 %v1632, %v1693
        %v1728 = vmul.f32 %v1634, %v1693
        %v1729 = vmul.f32 %v1636, %v1693
        %v1730 = vmul.f32 %v1638, %v1693
        %v1731 = vmul.f32 %v1640, %v1693
        %v1732 = vmul.f32 %v1642, %v1693
        %v1733 = vmul.f32 %v1644, %v1693
        %v1734 = vmul.f32 %v1646, %v1693
        %v1735 = vmul.f32 %v1648, %v1693
        %v1736 = vmul.f32 %v1650, %v1693
        %v1737 = vmul.f32 %v1652, %v1693
        %v1738 = vmul.f32 %v1654, %v1693
        %v1739 = vmul.f32 %v1656, %v1693
        %v1740 = vmul.f32 %v1658, %v1693
        %v1741 = vmul.f32 %v1660, %v1693
        %v1742 = vmul.f32 %v1662, %v1693
        %v1743 = vmul.f32 %v1664, %v1693
        %v1744 = vmul.f32 %v1666, %v1693
        %v1745 = vmul.f32 %v1668, %v1693
        %v1746 = vmul.f32 %v1670, %v1693
        %v1747 = vmul.f32 %v1672, %v1693
        %v1748 = vmul.f32 %v1674, %v1693
        %v1749 = vmul.f32 %v1676, %v1693
        %v1750 = vmul.f32 %v1678, %v1693
        %v1751 = vmul.f32 %v1680, %v1693
        %v1752 = vmul.f32 %v1682, %v1693
        %v1753 = vmul.f32 %v1684, %v1693
        %v1754 = vmul.f32 %v1686, %v1693
        %v1755 = vmul.f32 %v1688, %v1693
        %v1756 = vmul.f32 %v1690, %v1693
        %v1757 = vmul.f32 %v1692, %v1693
        %v1758 = vsub.f32 %v1247, %v1694
        %v1759 = vsub.f32 %v1251, %v1695
        %v1760 = vsub.f32 %v1257, %v1696
        %v1761 = vsub.f32 %v1261, %v1697
        %v1762 = vsub.f32 %v1267, %v1698
        %v1763 = vsub.f32 %v1271, %v1699
        %v1764 = vsub.f32 %v1277, %v1700
        %v1765 = vsub.f32 %v1281, %v1701
        %v1766 = vsub.f32 %v1287, %v1702
        %v1767 = vsub.f32 %v1291, %v1703
        %v1768 = vsub.f32 %v1297, %v1704
        %v1769 = vsub.f32 %v1301, %v1705
        %v1770 = vsub.f32 %v1307, %v1706
        %v1771 = vsub.f32 %v1311, %v1707
        %v1772 = vsub.f32 %v1317, %v1708
        %v1773 = vsub.f32 %v1321, %v1709
        %v1774 = vsub.f32 %v1327, %v1710
        %v1775 = vsub.f32 %v1331, %v1711
        %v1776 = vsub.f32 %v1337, %v1712
        %v1777 = vsub.f32 %v1341, %v1713
        %v1778 = vsub.f32 %v1347, %v1714
        %v1779 = vsub.f32 %v1351, %v1715
        %v1780 = vsub.f32 %v1357, %v1716
        %v1781 = vsub.f32 %v1361, %v1717
        %v1782 = vsub.f32 %v1367, %v1718
        %v1783 = vsub.f32 %v1371, %v1719
        %v1784 = vsub.f32 %v1377, %v1720
        %v1785 = vsub.f32 %v1381, %v1721
        %v1786 = vsub.f32 %v1387, %v1722
        %v1787 = vsub.f32 %v1391, %v1723
        %v1788 = vsub.f32 %v1397, %v1724
        %v1789 = vsub.f32 %v1401, %v1725
        %v1790 = vsub.f32 %v1407, %v1726
        %v1791 = vsub.f32 %v1411, %v1727
        %v1792 = vsub.f32 %v1417, %v1728
        %v1793 = vsub.f32 %v1421, %v1729
        %v1794 = vsub.f32 %v1427, %v1730
        %v1795 = vsub.f32 %v1431, %v1731
        %v1796 = vsub.f32 %v1437, %v1732
        %v1797 = vsub.f32 %v1441, %v1733
        %v1798 = vsub.f32 %v1447, %v1734
        %v1799 = vsub.f32 %v1451, %v1735
        %v1800 = vsub.f32 %v1457, %v1736
        %v1801 = vsub.f32 %v1461, %v1737
        %v1802 = vsub.f32 %v1467, %v1738
        %v1803 = vsub.f32 %v1471, %v1739
        %v1804 = vsub.f32 %v1477, %v1740
        %v1805 = vsub.f32 %v1481, %v1741
        %v1806 = vsub.f32 %v1487, %v1742
        %v1807 = vsub.f32 %v1491, %v1743
        %v1808 = vsub.f32 %v1497, %v1744
        %v1809 = vsub.f32 %v1501, %v1745
        %v1810 = vsub.f32 %v1507, %v1746
        %v1811 = vsub.f32 %v1511, %v1747
        %v1812 = vsub.f32 %v1517, %v1748
        %v1813 = vsub.f32 %v1521, %v1749
        %v1814 = vsub.f32 %v1527, %v1750
        %v1815 = vsub.f32 %v1531, %v1751
        %v1816 = vsub.f32 %v1537, %v1752
        %v1817 = vsub.f32 %v1541, %v1753
        %v1818 = vsub.f32 %v1547, %v1754
        %v1819 = vsub.f32 %v1551, %v1755
        %v1820 = vsub.f32 %v1557, %v1756
        %v1821 = vsub.f32 %v1561, %v1757
        %v1822 = vmul.f32 %v1758, %v1758
        %v1823 = vmul.f32 %v1759, %v1759
        %v1824 = vmul.f32 %v1760, %v1760
        %v1825 = vmul.f32 %v1761, %v1761
        %v1826 = vmul.f32 %v1762, %v1762
        %v1827 = vmul.f32 %v1763, %v1763
        %v1828 = vmul.f32 %v1764, %v1764
        %v1829 = vmul.f32 %v1765, %v1765
        %v1830 = vmul.f32 %v1766, %v1766
        %v1831 = vmul.f32 %v1767, %v1767
        %v1832 = vmul.f32 %v1768, %v1768
        %v1833 = vmul.f32 %v1769, %v1769
        %v1834 = vmul.f32 %v1770, %v1770
        %v1835 = vmul.f32 %v1771, %v1771
        %v1836 = vmul.f32 %v1772, %v1772
        %v1837 = vmul.f32 %v1773, %v1773
        %v1838 = vmul.f32 %v1774, %v1774
        %v1839 = vmul.f32 %v1775, %v1775
        %v1840 = vmul.f32 %v1776, %v1776
        %v1841 = vmul.f32 %v1777, %v1777
        %v1842 = vmul.f32 %v1778, %v1778
        %v1843 = vmul.f32 %v1779, %v1779
        %v1844 = vmul.f32 %v1780, %v1780
        %v1845 = vmul.f32 %v1781, %v1781
        %v1846 = vmul.f32 %v1782, %v1782
        %v1847 = vmul.f32 %v1783, %v1783
        %v1848 = vmul.f32 %v1784, %v1784
        %v1849 = vmul.f32 %v1785, %v1785
        %v1850 = vmul.f32 %v1786, %v1786
        %v1851 = vmul.f32 %v1787, %v1787
        %v1852 = vmul.f32 %v1788, %v1788
        %v1853 = vmul.f32 %v1789, %v1789
        %v1854 = vmul.f32 %v1790, %v1790
        %v1855 = vmul.f32 %v1791, %v1791
        %v1856 = vmul.f32 %v1792, %v1792
        %v1857 = vmul.f32 %v1793, %v1793
        %v1858 = vmul.f32 %v1794, %v1794
        %v1859 = vmul.f32 %v1795, %v1795
        %v1860 = vmul.f32 %v1796, %v1796
        %v1861 = vmul.f32 %v1797, %v1797
        %v1862 = vmul.f32 %v1798, %v1798
        %v1863 = vmul.f32 %v1799, %v1799
        %v1864 = vmul.f32 %v1800, %v1800
        %v1865 = vmul.f32 %v1801, %v1801
        %v1866 = vmul.f32 %v1802, %v1802
        %v1867 = vmul.f32 %v1803, %v1803
        %v1868 = vmul.f32 %v1804, %v1804
        %v1869 = vmul.f32 %v1805, %v1805
        %v1870 = vmul.f32 %v1806, %v1806
        %v1871 = vmul.f32 %v1807, %v1807
        %v1872 = vmul.f32 %v1808, %v1808
        %v1873 = vmul.f32 %v1809, %v1809
        %v1874 = vmul.f32 %v1810, %v1810
        %v1875 = vmul.f32 %v1811, %v1811
        %v1876 = vmul.f32 %v1812, %v1812
        %v1877 = vmul.f32 %v1813, %v1813
        %v1878 = vmul.f32 %v1814, %v1814
        %v1879 = vmul.f32 %v1815, %v1815
        %v1880 = vmul.f32 %v1816, %v1816
        %v1881 = vmul.f32 %v1817, %v1817
        %v1882 = vmul.f32 %v1818, %v1818
        %v1883 = vmul.f32 %v1819, %v1819
        %v1884 = vmul.f32 %v1820, %v1820
        %v1885 = vmul.f32 %v1821, %v1821
        %1886 = vadd.xlane.f32.xlu0 %v1822
        %v1887 = vpop.xlane.xlu0 %1886
        %1888 = vadd.xlane.f32.xlu0 %v1823
        %v1889 = vpop.xlane.xlu0 %1888
        %1890 = vadd.xlane.f32.xlu0 %v1824
        %v1891 = vpop.xlane.xlu0 %1890
        %1892 = vadd.xlane.f32.xlu0 %v1825
        %v1893 = vpop.xlane.xlu0 %1892
        %1894 = vadd.xlane.f32.xlu0 %v1826
        %v1895 = vpop.xlane.xlu0 %1894
        %1896 = vadd.xlane.f32.xlu0 %v1827
        %v1897 = vpop.xlane.xlu0 %1896
        %1898 = vadd.xlane.f32.xlu0 %v1828
        %v1899 = vpop.xlane.xlu0 %1898
        %1900 = vadd.xlane.f32.xlu0 %v1829
        %v1901 = vpop.xlane.xlu0 %1900
        %1902 = vadd.xlane.f32.xlu0 %v1830
        %v1903 = vpop.xlane.xlu0 %1902
        %1904 = vadd.xlane.f32.xlu0 %v1831
        %v1905 = vpop.xlane.xlu0 %1904
        %1906 = vadd.xlane.f32.xlu0 %v1832
        %v1907 = vpop.xlane.xlu0 %1906
        %1908 = vadd.xlane.f32.xlu0 %v1833
        %v1909 = vpop.xlane.xlu0 %1908
        %1910 = vadd.xlane.f32.xlu0 %v1834
        %v1911 = vpop.xlane.xlu0 %1910
        %1912 = vadd.xlane.f32.xlu0 %v1835
        %v1913 = vpop.xlane.xlu0 %1912
        %1914 = vadd.xlane.f32.xlu0 %v1836
        %v1915 = vpop.xlane.xlu0 %1914
        %1916 = vadd.xlane.f32.xlu0 %v1837
        %v1917 = vpop.xlane.xlu0 %1916
        %1918 = vadd.xlane.f32.xlu0 %v1838
        %v1919 = vpop.xlane.xlu0 %1918
        %1920 = vadd.xlane.f32.xlu0 %v1839
        %v1921 = vpop.xlane.xlu0 %1920
        %1922 = vadd.xlane.f32.xlu0 %v1840
        %v1923 = vpop.xlane.xlu0 %1922
        %1924 = vadd.xlane.f32.xlu0 %v1841
        %v1925 = vpop.xlane.xlu0 %1924
        %1926 = vadd.xlane.f32.xlu0 %v1842
        %v1927 = vpop.xlane.xlu0 %1926
        %1928 = vadd.xlane.f32.xlu0 %v1843
        %v1929 = vpop.xlane.xlu0 %1928
        %1930 = vadd.xlane.f32.xlu0 %v1844
        %v1931 = vpop.xlane.xlu0 %1930
        %1932 = vadd.xlane.f32.xlu0 %v1845
        %v1933 = vpop.xlane.xlu0 %1932
        %1934 = vadd.xlane.f32.xlu0 %v1846
        %v1935 = vpop.xlane.xlu0 %1934
        %1936 = vadd.xlane.f32.xlu0 %v1847
        %v1937 = vpop.xlane.xlu0 %1936
        %1938 = vadd.xlane.f32.xlu0 %v1848
        %v1939 = vpop.xlane.xlu0 %1938
        %1940 = vadd.xlane.f32.xlu0 %v1849
        %v1941 = vpop.xlane.xlu0 %1940
        %1942 = vadd.xlane.f32.xlu0 %v1850
        %v1943 = vpop.xlane.xlu0 %1942
        %1944 = vadd.xlane.f32.xlu0 %v1851
        %v1945 = vpop.xlane.xlu0 %1944
        %1946 = vadd.xlane.f32.xlu0 %v1852
        %v1947 = vpop.xlane.xlu0 %1946
        %1948 = vadd.xlane.f32.xlu0 %v1853
        %v1949 = vpop.xlane.xlu0 %1948
        %1950 = vadd.xlane.f32.xlu0 %v1854
        %v1951 = vpop.xlane.xlu0 %1950
        %1952 = vadd.xlane.f32.xlu0 %v1855
        %v1953 = vpop.xlane.xlu0 %1952
        %1954 = vadd.xlane.f32.xlu0 %v1856
        %v1955 = vpop.xlane.xlu0 %1954
        %1956 = vadd.xlane.f32.xlu0 %v1857
        %v1957 = vpop.xlane.xlu0 %1956
        %1958 = vadd.xlane.f32.xlu0 %v1858
        %v1959 = vpop.xlane.xlu0 %1958
        %1960 = vadd.xlane.f32.xlu0 %v1859
        %v1961 = vpop.xlane.xlu0 %1960
        %1962 = vadd.xlane.f32.xlu0 %v1860
        %v1963 = vpop.xlane.xlu0 %1962
        %1964 = vadd.xlane.f32.xlu0 %v1861
        %v1965 = vpop.xlane.xlu0 %1964
        %1966 = vadd.xlane.f32.xlu0 %v1862
        %v1967 = vpop.xlane.xlu0 %1966
        %1968 = vadd.xlane.f32.xlu0 %v1863
        %v1969 = vpop.xlane.xlu0 %1968
        %1970 = vadd.xlane.f32.xlu0 %v1864
        %v1971 = vpop.xlane.xlu0 %1970
        %1972 = vadd.xlane.f32.xlu0 %v1865
        %v1973 = vpop.xlane.xlu0 %1972
        %1974 = vadd.xlane.f32.xlu0 %v1866
        %v1975 = vpop.xlane.xlu0 %1974
        %1976 = vadd.xlane.f32.xlu0 %v1867
        %v1977 = vpop.xlane.xlu0 %1976
        %1978 = vadd.xlane.f32.xlu0 %v1868
        %v1979 = vpop.xlane.xlu0 %1978
        %1980 = vadd.xlane.f32.xlu0 %v1869
        %v1981 = vpop.xlane.xlu0 %1980
        %1982 = vadd.xlane.f32.xlu0 %v1870
        %v1983 = vpop.xlane.xlu0 %1982
        %1984 = vadd.xlane.f32.xlu0 %v1871
        %v1985 = vpop.xlane.xlu0 %1984
        %1986 = vadd.xlane.f32.xlu0 %v1872
        %v1987 = vpop.xlane.xlu0 %1986
        %1988 = vadd.xlane.f32.xlu0 %v1873
        %v1989 = vpop.xlane.xlu0 %1988
        %1990 = vadd.xlane.f32.xlu0 %v1874
        %v1991 = vpop.xlane.xlu0 %1990
        %1992 = vadd.xlane.f32.xlu0 %v1875
        %v1993 = vpop.xlane.xlu0 %1992
        %1994 = vadd.xlane.f32.xlu0 %v1876
        %v1995 = vpop.xlane.xlu0 %1994
        %1996 = vadd.xlane.f32.xlu0 %v1877
        %v1997 = vpop.xlane.xlu0 %1996
        %1998 = vadd.xlane.f32.xlu0 %v1878
        %v1999 = vpop.xlane.xlu0 %1998
        %2000 = vadd.xlane.f32.xlu0 %v1879
        %v2001 = vpop.xlane.xlu0 %2000
        %2002 = vadd.xlane.f32.xlu0 %v1880
        %v2003 = vpop.xlane.xlu0 %2002
        %2004 = vadd.xlane.f32.xlu0 %v1881
        %v2005 = vpop.xlane.xlu0 %2004
        %2006 = vadd.xlane.f32.xlu0 %v1882
        %v2007 = vpop.xlane.xlu0 %2006
        %2008 = vadd.xlane.f32.xlu0 %v1883
        %v2009 = vpop.xlane.xlu0 %2008
        %2010 = vadd.xlane.f32.xlu0 %v1884
        %v2011 = vpop.xlane.xlu0 %2010
        %2012 = vadd.xlane.f32.xlu0 %v1885
        %v2013 = vpop.xlane.xlu0 %2012
        %v2014 = vmul.f32 %v1887, %v1693
        %v2015 = vmul.f32 %v1889, %v1693
        %v2016 = vmul.f32 %v1891, %v1693
        %v2017 = vmul.f32 %v1893, %v1693
        %v2018 = vmul.f32 %v1895, %v1693
        %v2019 = vmul.f32 %v1897, %v1693
        %v2020 = vmul.f32 %v1899, %v1693
        %v2021 = vmul.f32 %v1901, %v1693
        %v2022 = vmul.f32 %v1903, %v1693
        %v2023 = vmul.f32 %v1905, %v1693
        %v2024 = vmul.f32 %v1907, %v1693
        %v2025 = vmul.f32 %v1909, %v1693
        %v2026 = vmul.f32 %v1911, %v1693
        %v2027 = vmul.f32 %v1913, %v1693
        %v2028 = vmul.f32 %v1915, %v1693
        %v2029 = vmul.f32 %v1917, %v1693
        %v2030 = vmul.f32 %v1919, %v1693
        %v2031 = vmul.f32 %v1921, %v1693
        %v2032 = vmul.f32 %v1923, %v1693
        %v2033 = vmul.f32 %v1925, %v1693
        %v2034 = vmul.f32 %v1927, %v1693
        %v2035 = vmul.f32 %v1929, %v1693
        %v2036 = vmul.f32 %v1931, %v1693
        %v2037 = vmul.f32 %v1933, %v1693
        %v2038 = vmul.f32 %v1935, %v1693
        %v2039 = vmul.f32 %v1937, %v1693
        %v2040 = vmul.f32 %v1939, %v1693
        %v2041 = vmul.f32 %v1941, %v1693
        %v2042 = vmul.f32 %v1943, %v1693
        %v2043 = vmul.f32 %v1945, %v1693
        %v2044 = vmul.f32 %v1947, %v1693
        %v2045 = vmul.f32 %v1949, %v1693
        %v2046 = vmul.f32 %v1951, %v1693
        %v2047 = vmul.f32 %v1953, %v1693
        %v2048 = vmul.f32 %v1955, %v1693
        %v2049 = vmul.f32 %v1957, %v1693
        %v2050 = vmul.f32 %v1959, %v1693
        %v2051 = vmul.f32 %v1961, %v1693
        %v2052 = vmul.f32 %v1963, %v1693
        %v2053 = vmul.f32 %v1965, %v1693
        %v2054 = vmul.f32 %v1967, %v1693
        %v2055 = vmul.f32 %v1969, %v1693
        %v2056 = vmul.f32 %v1971, %v1693
        %v2057 = vmul.f32 %v1973, %v1693
        %v2058 = vmul.f32 %v1975, %v1693
        %v2059 = vmul.f32 %v1977, %v1693
        %v2060 = vmul.f32 %v1979, %v1693
        %v2061 = vmul.f32 %v1981, %v1693
        %v2062 = vmul.f32 %v1983, %v1693
        %v2063 = vmul.f32 %v1985, %v1693
        %v2064 = vmul.f32 %v1987, %v1693
        %v2065 = vmul.f32 %v1989, %v1693
        %v2066 = vmul.f32 %v1991, %v1693
        %v2067 = vmul.f32 %v1993, %v1693
        %v2068 = vmul.f32 %v1995, %v1693
        %v2069 = vmul.f32 %v1997, %v1693
        %v2070 = vmul.f32 %v1999, %v1693
        %v2071 = vmul.f32 %v2001, %v1693
        %v2072 = vmul.f32 %v2003, %v1693
        %v2073 = vmul.f32 %v2005, %v1693
        %v2074 = vmul.f32 %v2007, %v1693
        %v2075 = vmul.f32 %v2009, %v1693
        %v2076 = vmul.f32 %v2011, %v1693
        %v2077 = vmul.f32 %v2013, %v1693
        %v2078 = vadd.f32 %v2014, 1e-05
        %v2079 = vadd.f32 %v2015, 1e-05
        %v2080 = vadd.f32 %v2016, 1e-05
        %v2081 = vadd.f32 %v2017, 1e-05
        %v2082 = vadd.f32 %v2018, 1e-05
        %v2083 = vadd.f32 %v2019, 1e-05
        %v2084 = vadd.f32 %v2020, 1e-05
        %v2085 = vadd.f32 %v2021, 1e-05
        %v2086 = vadd.f32 %v2022, 1e-05
        %v2087 = vadd.f32 %v2023, 1e-05
        %v2088 = vadd.f32 %v2024, 1e-05
        %v2089 = vadd.f32 %v2025, 1e-05
        %v2090 = vadd.f32 %v2026, 1e-05
        %v2091 = vadd.f32 %v2027, 1e-05
        %v2092 = vadd.f32 %v2028, 1e-05
        %v2093 = vadd.f32 %v2029, 1e-05
        %v2094 = vadd.f32 %v2030, 1e-05
        %v2095 = vadd.f32 %v2031, 1e-05
        %v2096 = vadd.f32 %v2032, 1e-05
        %v2097 = vadd.f32 %v2033, 1e-05
        %v2098 = vadd.f32 %v2034, 1e-05
        %v2099 = vadd.f32 %v2035, 1e-05
        %v2100 = vadd.f32 %v2036, 1e-05
        %v2101 = vadd.f32 %v2037, 1e-05
        %v2102 = vadd.f32 %v2038, 1e-05
        %v2103 = vadd.f32 %v2039, 1e-05
        %v2104 = vadd.f32 %v2040, 1e-05
        %v2105 = vadd.f32 %v2041, 1e-05
        %v2106 = vadd.f32 %v2042, 1e-05
        %v2107 = vadd.f32 %v2043, 1e-05
        %v2108 = vadd.f32 %v2044, 1e-05
        %v2109 = vadd.f32 %v2045, 1e-05
        %v2110 = vadd.f32 %v2046, 1e-05
        %v2111 = vadd.f32 %v2047, 1e-05
        %v2112 = vadd.f32 %v2048, 1e-05
        %v2113 = vadd.f32 %v2049, 1e-05
        %v2114 = vadd.f32 %v2050, 1e-05
        %v2115 = vadd.f32 %v2051, 1e-05
        %v2116 = vadd.f32 %v2052, 1e-05
        %v2117 = vadd.f32 %v2053, 1e-05
        %v2118 = vadd.f32 %v2054, 1e-05
        %v2119 = vadd.f32 %v2055, 1e-05
        %v2120 = vadd.f32 %v2056, 1e-05
        %v2121 = vadd.f32 %v2057, 1e-05
        %v2122 = vadd.f32 %v2058, 1e-05
        %v2123 = vadd.f32 %v2059, 1e-05
        %v2124 = vadd.f32 %v2060, 1e-05
        %v2125 = vadd.f32 %v2061, 1e-05
        %v2126 = vadd.f32 %v2062, 1e-05
        %v2127 = vadd.f32 %v2063, 1e-05
        %v2128 = vadd.f32 %v2064, 1e-05
        %v2129 = vadd.f32 %v2065, 1e-05
        %v2130 = vadd.f32 %v2066, 1e-05
        %v2131 = vadd.f32 %v2067, 1e-05
        %v2132 = vadd.f32 %v2068, 1e-05
        %v2133 = vadd.f32 %v2069, 1e-05
        %v2134 = vadd.f32 %v2070, 1e-05
        %v2135 = vadd.f32 %v2071, 1e-05
        %v2136 = vadd.f32 %v2072, 1e-05
        %v2137 = vadd.f32 %v2073, 1e-05
        %v2138 = vadd.f32 %v2074, 1e-05
        %v2139 = vadd.f32 %v2075, 1e-05
        %v2140 = vadd.f32 %v2076, 1e-05
        %v2141 = vadd.f32 %v2077, 1e-05
        %v2142 = vrsqrt.pop %v2078
        %v2143 = vrsqrt.pop %v2079
        %v2144 = vrsqrt.pop %v2080
        %v2145 = vrsqrt.pop %v2081
        %v2146 = vrsqrt.pop %v2082
        %v2147 = vrsqrt.pop %v2083
        %v2148 = vrsqrt.pop %v2084
        %v2149 = vrsqrt.pop %v2085
        %v2150 = vrsqrt.pop %v2086
        %v2151 = vrsqrt.pop %v2087
        %v2152 = vrsqrt.pop %v2088
        %v2153 = vrsqrt.pop %v2089
        %v2154 = vrsqrt.pop %v2090
        %v2155 = vrsqrt.pop %v2091
        %v2156 = vrsqrt.pop %v2092
        %v2157 = vrsqrt.pop %v2093
        %v2158 = vrsqrt.pop %v2094
        %v2159 = vrsqrt.pop %v2095
        %v2160 = vrsqrt.pop %v2096
        %v2161 = vrsqrt.pop %v2097
        %v2162 = vrsqrt.pop %v2098
        %v2163 = vrsqrt.pop %v2099
        %v2164 = vrsqrt.pop %v2100
        %v2165 = vrsqrt.pop %v2101
        %v2166 = vrsqrt.pop %v2102
        %v2167 = vrsqrt.pop %v2103
        %v2168 = vrsqrt.pop %v2104
        %v2169 = vrsqrt.pop %v2105
        %v2170 = vrsqrt.pop %v2106
        %v2171 = vrsqrt.pop %v2107
        %v2172 = vrsqrt.pop %v2108
        %v2173 = vrsqrt.pop %v2109
        %v2174 = vrsqrt.pop %v2110
        %v2175 = vrsqrt.pop %v2111
        %v2176 = vrsqrt.pop %v2112
        %v2177 = vrsqrt.pop %v2113
        %v2178 = vrsqrt.pop %v2114
        %v2179 = vrsqrt.pop %v2115
        %v2180 = vrsqrt.pop %v2116
        %v2181 = vrsqrt.pop %v2117
        %v2182 = vrsqrt.pop %v2118
        %v2183 = vrsqrt.pop %v2119
        %v2184 = vrsqrt.pop %v2120
        %v2185 = vrsqrt.pop %v2121
        %v2186 = vrsqrt.pop %v2122
        %v2187 = vrsqrt.pop %v2123
        %v2188 = vrsqrt.pop %v2124
        %v2189 = vrsqrt.pop %v2125
        %v2190 = vrsqrt.pop %v2126
        %v2191 = vrsqrt.pop %v2127
        %v2192 = vrsqrt.pop %v2128
        %v2193 = vrsqrt.pop %v2129
        %v2194 = vrsqrt.pop %v2130
        %v2195 = vrsqrt.pop %v2131
        %v2196 = vrsqrt.pop %v2132
        %v2197 = vrsqrt.pop %v2133
        %v2198 = vrsqrt.pop %v2134
        %v2199 = vrsqrt.pop %v2135
        %v2200 = vrsqrt.pop %v2136
        %v2201 = vrsqrt.pop %v2137
        %v2202 = vrsqrt.pop %v2138
        %v2203 = vrsqrt.pop %v2139
        %v2204 = vrsqrt.pop %v2140
        %v2205 = vrsqrt.pop %v2141
        %v2206 = vmul.f32 %v1758, %v2142
        %v2207 = vmul.f32 %v1759, %v2143
        %v2208 = vmul.f32 %v1760, %v2144
        %v2209 = vmul.f32 %v1761, %v2145
        %v2210 = vmul.f32 %v1762, %v2146
        %v2211 = vmul.f32 %v1763, %v2147
        %v2212 = vmul.f32 %v1764, %v2148
        %v2213 = vmul.f32 %v1765, %v2149
        %v2214 = vmul.f32 %v1766, %v2150
        %v2215 = vmul.f32 %v1767, %v2151
        %v2216 = vmul.f32 %v1768, %v2152
        %v2217 = vmul.f32 %v1769, %v2153
        %v2218 = vmul.f32 %v1770, %v2154
        %v2219 = vmul.f32 %v1771, %v2155
        %v2220 = vmul.f32 %v1772, %v2156
        %v2221 = vmul.f32 %v1773, %v2157
        %v2222 = vmul.f32 %v1774, %v2158
        %v2223 = vmul.f32 %v1775, %v2159
        %v2224 = vmul.f32 %v1776, %v2160
        %v2225 = vmul.f32 %v1777, %v2161
        %v2226 = vmul.f32 %v1778, %v2162
        %v2227 = vmul.f32 %v1779, %v2163
        %v2228 = vmul.f32 %v1780, %v2164
        %v2229 = vmul.f32 %v1781, %v2165
        %v2230 = vmul.f32 %v1782, %v2166
        %v2231 = vmul.f32 %v1783, %v2167
        %v2232 = vmul.f32 %v1784, %v2168
        %v2233 = vmul.f32 %v1785, %v2169
        %v2234 = vmul.f32 %v1786, %v2170
        %v2235 = vmul.f32 %v1787, %v2171
        %v2236 = vmul.f32 %v1788, %v2172
        %v2237 = vmul.f32 %v1789, %v2173
        %v2238 = vmul.f32 %v1790, %v2174
        %v2239 = vmul.f32 %v1791, %v2175
        %v2240 = vmul.f32 %v1792, %v2176
        %v2241 = vmul.f32 %v1793, %v2177
        %v2242 = vmul.f32 %v1794, %v2178
        %v2243 = vmul.f32 %v1795, %v2179
        %v2244 = vmul.f32 %v1796, %v2180
        %v2245 = vmul.f32 %v1797, %v2181
        %v2246 = vmul.f32 %v1798, %v2182
        %v2247 = vmul.f32 %v1799, %v2183
        %v2248 = vmul.f32 %v1800, %v2184
        %v2249 = vmul.f32 %v1801, %v2185
        %v2250 = vmul.f32 %v1802, %v2186
        %v2251 = vmul.f32 %v1803, %v2187
        %v2252 = vmul.f32 %v1804, %v2188
        %v2253 = vmul.f32 %v1805, %v2189
        %v2254 = vmul.f32 %v1806, %v2190
        %v2255 = vmul.f32 %v1807, %v2191
        %v2256 = vmul.f32 %v1808, %v2192
        %v2257 = vmul.f32 %v1809, %v2193
        %v2258 = vmul.f32 %v1810, %v2194
        %v2259 = vmul.f32 %v1811, %v2195
        %v2260 = vmul.f32 %v1812, %v2196
        %v2261 = vmul.f32 %v1813, %v2197
        %v2262 = vmul.f32 %v1814, %v2198
        %v2263 = vmul.f32 %v1815, %v2199
        %v2264 = vmul.f32 %v1816, %v2200
        %v2265 = vmul.f32 %v1817, %v2201
        %v2266 = vmul.f32 %v1818, %v2202
        %v2267 = vmul.f32 %v1819, %v2203
        %v2268 = vmul.f32 %v1820, %v2204
        %v2269 = vmul.f32 %v1821, %v2205
        %v2270 = vld [vmem:[#allocation7] sm:$0x1]
        %v2272 = vlaneseq
        %v2273 = vshrl.u32 %v2272, 7
        %v2274 = vsub.s32 0, %v2273
        %v2275 = vrot.slane %v2270, %v2274
        %v2277 = vmul.f32 %v2206, %v2275
        %v2278 = vmul.f32 %v2207, %v2275
        %v2279 = vmul.f32 %v2208, %v2275
        %v2280 = vmul.f32 %v2209, %v2275
        %v2281 = vmul.f32 %v2210, %v2275
        %v2282 = vmul.f32 %v2211, %v2275
        %v2283 = vmul.f32 %v2212, %v2275
        %v2284 = vmul.f32 %v2213, %v2275
        %v2285 = vmul.f32 %v2214, %v2275
        %v2286 = vmul.f32 %v2215, %v2275
        %v2287 = vmul.f32 %v2216, %v2275
        %v2288 = vmul.f32 %v2217, %v2275
        %v2289 = vmul.f32 %v2218, %v2275
        %v2290 = vmul.f32 %v2219, %v2275
        %v2291 = vmul.f32 %v2220, %v2275
        %v2292 = vmul.f32 %v2221, %v2275
        %v2293 = vmul.f32 %v2222, %v2275
        %v2294 = vmul.f32 %v2223, %v2275
        %v2295 = vmul.f32 %v2224, %v2275
        %v2296 = vmul.f32 %v2225, %v2275
        %v2297 = vmul.f32 %v2226, %v2275
        %v2298 = vmul.f32 %v2227, %v2275
        %v2299 = vmul.f32 %v2228, %v2275
        %v2300 = vmul.f32 %v2229, %v2275
        %v2301 = vmul.f32 %v2230, %v2275
        %v2302 = vmul.f32 %v2231, %v2275
        %v2303 = vmul.f32 %v2232, %v2275
        %v2304 = vmul.f32 %v2233, %v2275
        %v2305 = vmul.f32 %v2234, %v2275
        %v2306 = vmul.f32 %v2235, %v2275
        %v2307 = vmul.f32 %v2236, %v2275
        %v2308 = vmul.f32 %v2237, %v2275
        %v2309 = vmul.f32 %v2238, %v2275
        %v2310 = vmul.f32 %v2239, %v2275
        %v2311 = vmul.f32 %v2240, %v2275
        %v2312 = vmul.f32 %v2241, %v2275
        %v2313 = vmul.f32 %v2242, %v2275
        %v2314 = vmul.f32 %v2243, %v2275
        %v2315 = vmul.f32 %v2244, %v2275
        %v2316 = vmul.f32 %v2245, %v2275
        %v2317 = vmul.f32 %v2246, %v2275
        %v2318 = vmul.f32 %v2247, %v2275
        %v2319 = vmul.f32 %v2248, %v2275
        %v2320 = vmul.f32 %v2249, %v2275
        %v2321 = vmul.f32 %v2250, %v2275
        %v2322 = vmul.f32 %v2251, %v2275
        %v2323 = vmul.f32 %v2252, %v2275
        %v2324 = vmul.f32 %v2253, %v2275
        %v2325 = vmul.f32 %v2254, %v2275
        %v2326 = vmul.f32 %v2255, %v2275
        %v2327 = vmul.f32 %v2256, %v2275
        %v2328 = vmul.f32 %v2257, %v2275
        %v2329 = vmul.f32 %v2258, %v2275
        %v2330 = vmul.f32 %v2259, %v2275
        %v2331 = vmul.f32 %v2260, %v2275
        %v2332 = vmul.f32 %v2261, %v2275
        %v2333 = vmul.f32 %v2262, %v2275
        %v2334 = vmul.f32 %v2263, %v2275
        %v2335 = vmul.f32 %v2264, %v2275
        %v2336 = vmul.f32 %v2265, %v2275
        %v2337 = vmul.f32 %v2266, %v2275
        %v2338 = vmul.f32 %v2267, %v2275
        %v2339 = vmul.f32 %v2268, %v2275
        %v2340 = vmul.f32 %v2269, %v2275
        %v2341 = vld [vmem:[%s4] sm:$0x1]
        %v2343 = vlaneseq
        %v2344 = vshrl.u32 %v2343, 7
        %v2345 = vsub.s32 0, %v2344
        %v2346 = vrot.slane %v2341, %v2345
        %v2348 = vadd.f32 %v2277, %v2346
        %v2349 = vadd.f32 %v2278, %v2346
        %v2350 = vadd.f32 %v2279, %v2346
        %v2351 = vadd.f32 %v2280, %v2346
        %v2352 = vadd.f32 %v2281, %v2346
        %v2353 = vadd.f32 %v2282, %v2346
        %v2354 = vadd.f32 %v2283, %v2346
        %v2355 = vadd.f32 %v2284, %v2346
        %v2356 = vadd.f32 %v2285, %v2346
        %v2357 = vadd.f32 %v2286, %v2346
        %v2358 = vadd.f32 %v2287, %v2346
        %v2359 = vadd.f32 %v2288, %v2346
        %v2360 = vadd.f32 %v2289, %v2346
        %v2361 = vadd.f32 %v2290, %v2346
        %v2362 = vadd.f32 %v2291, %v2346
        %v2363 = vadd.f32 %v2292, %v2346
        %v2364 = vadd.f32 %v2293, %v2346
        %v2365 = vadd.f32 %v2294, %v2346
        %v2366 = vadd.f32 %v2295, %v2346
        %v2367 = vadd.f32 %v2296, %v2346
        %v2368 = vadd.f32 %v2297, %v2346
        %v2369 = vadd.f32 %v2298, %v2346
        %v2370 = vadd.f32 %v2299, %v2346
        %v2371 = vadd.f32 %v2300, %v2346
        %v2372 = vadd.f32 %v2301, %v2346
        %v2373 = vadd.f32 %v2302, %v2346
        %v2374 = vadd.f32 %v2303, %v2346
        %v2375 = vadd.f32 %v2304, %v2346
        %v2376 = vadd.f32 %v2305, %v2346
        %v2377 = vadd.f32 %v2306, %v2346
        %v2378 = vadd.f32 %v2307, %v2346
        %v2379 = vadd.f32 %v2308, %v2346
        %v2380 = vadd.f32 %v2309, %v2346
        %v2381 = vadd.f32 %v2310, %v2346
        %v2382 = vadd.f32 %v2311, %v2346
        %v2383 = vadd.f32 %v2312, %v2346
        %v2384 = vadd.f32 %v2313, %v2346
        %v2385 = vadd.f32 %v2314, %v2346
        %v2386 = vadd.f32 %v2315, %v2346
        %v2387 = vadd.f32 %v2316, %v2346
        %v2388 = vadd.f32 %v2317, %v2346
        %v2389 = vadd.f32 %v2318, %v2346
        %v2390 = vadd.f32 %v2319, %v2346
        %v2391 = vadd.f32 %v2320, %v2346
        %v2392 = vadd.f32 %v2321, %v2346
        %v2393 = vadd.f32 %v2322, %v2346
        %v2394 = vadd.f32 %v2323, %v2346
        %v2395 = vadd.f32 %v2324, %v2346
        %v2396 = vadd.f32 %v2325, %v2346
        %v2397 = vadd.f32 %v2326, %v2346
        %v2398 = vadd.f32 %v2327, %v2346
        %v2399 = vadd.f32 %v2328, %v2346
        %v2400 = vadd.f32 %v2329, %v2346
        %v2401 = vadd.f32 %v2330, %v2346
        %v2402 = vadd.f32 %v2331, %v2346
        %v2403 = vadd.f32 %v2332, %v2346
        %v2404 = vadd.f32 %v2333, %v2346
        %v2405 = vadd.f32 %v2334, %v2346
        %v2406 = vadd.f32 %v2335, %v2346
        %v2407 = vadd.f32 %v2336, %v2346
        %v2408 = vadd.f32 %v2337, %v2346
        %v2409 = vadd.f32 %v2338, %v2346
        %v2410 = vadd.f32 %v2339, %v2346
        %v2411 = vadd.f32 %v2340, %v2346
        %v2412 = vmax.f32 %v2348, 0.0
        %v2413 = vmax.f32 %v2349, 0.0
        %v2414 = vmax.f32 %v2350, 0.0
        %v2415 = vmax.f32 %v2351, 0.0
        %v2416 = vmax.f32 %v2352, 0.0
        %v2417 = vmax.f32 %v2353, 0.0
        %v2418 = vmax.f32 %v2354, 0.0
        %v2419 = vmax.f32 %v2355, 0.0
        %v2420 = vmax.f32 %v2356, 0.0
        %v2421 = vmax.f32 %v2357, 0.0
        %v2422 = vmax.f32 %v2358, 0.0
        %v2423 = vmax.f32 %v2359, 0.0
        %v2424 = vmax.f32 %v2360, 0.0
        %v2425 = vmax.f32 %v2361, 0.0
        %v2426 = vmax.f32 %v2362, 0.0
        %v2427 = vmax.f32 %v2363, 0.0
        %v2428 = vmax.f32 %v2364, 0.0
        %v2429 = vmax.f32 %v2365, 0.0
        %v2430 = vmax.f32 %v2366, 0.0
        %v2431 = vmax.f32 %v2367, 0.0
        %v2432 = vmax.f32 %v2368, 0.0
        %v2433 = vmax.f32 %v2369, 0.0
        %v2434 = vmax.f32 %v2370, 0.0
        %v2435 = vmax.f32 %v2371, 0.0
        %v2436 = vmax.f32 %v2372, 0.0
        %v2437 = vmax.f32 %v2373, 0.0
        %v2438 = vmax.f32 %v2374, 0.0
        %v2439 = vmax.f32 %v2375, 0.0
        %v2440 = vmax.f32 %v2376, 0.0
        %v2441 = vmax.f32 %v2377, 0.0
        %v2442 = vmax.f32 %v2378, 0.0
        %v2443 = vmax.f32 %v2379, 0.0
        %v2444 = vmax.f32 %v2380, 0.0
        %v2445 = vmax.f32 %v2381, 0.0
        %v2446 = vmax.f32 %v2382, 0.0
        %v2447 = vmax.f32 %v2383, 0.0
        %v2448 = vmax.f32 %v2384, 0.0
        %v2449 = vmax.f32 %v2385, 0.0
        %v2450 = vmax.f32 %v2386, 0.0
        %v2451 = vmax.f32 %v2387, 0.0
        %v2452 = vmax.f32 %v2388, 0.0
        %v2453 = vmax.f32 %v2389, 0.0
        %v2454 = vmax.f32 %v2390, 0.0
        %v2455 = vmax.f32 %v2391, 0.0
        %v2456 = vmax.f32 %v2392, 0.0
        %v2457 = vmax.f32 %v2393, 0.0
        %v2458 = vmax.f32 %v2394, 0.0
        %v2459 = vmax.f32 %v2395, 0.0
        %v2460 = vmax.f32 %v2396, 0.0
        %v2461 = vmax.f32 %v2397, 0.0
        %v2462 = vmax.f32 %v2398, 0.0
        %v2463 = vmax.f32 %v2399, 0.0
        %v2464 = vmax.f32 %v2400, 0.0
        %v2465 = vmax.f32 %v2401, 0.0
        %v2466 = vmax.f32 %v2402, 0.0
        %v2467 = vmax.f32 %v2403, 0.0
        %v2468 = vmax.f32 %v2404, 0.0
        %v2469 = vmax.f32 %v2405, 0.0
        %v2470 = vmax.f32 %v2406, 0.0
        %v2471 = vmax.f32 %v2407, 0.0
        %v2472 = vmax.f32 %v2408, 0.0
        %v2473 = vmax.f32 %v2409, 0.0
        %v2474 = vmax.f32 %v2410, 0.0
        %v2475 = vmax.f32 %v2411, 0.0
        %v2476 = vpack.c.bf16 %v2413, %v2412
        %v2477 = vpack.c.bf16 %v2415, %v2414
        %v2478 = vpack.c.bf16 %v2417, %v2416
        %v2479 = vpack.c.bf16 %v2419, %v2418
        %v2480 = vpack.c.bf16 %v2421, %v2420
        %v2481 = vpack.c.bf16 %v2423, %v2422
        %v2482 = vpack.c.bf16 %v2425, %v2424
        %v2483 = vpack.c.bf16 %v2427, %v2426
        %v2484 = vpack.c.bf16 %v2429, %v2428
        %v2485 = vpack.c.bf16 %v2431, %v2430
        %v2486 = vpack.c.bf16 %v2433, %v2432
        %v2487 = vpack.c.bf16 %v2435, %v2434
        %v2488 = vpack.c.bf16 %v2437, %v2436
        %v2489 = vpack.c.bf16 %v2439, %v2438
        %v2490 = vpack.c.bf16 %v2441, %v2440
        %v2491 = vpack.c.bf16 %v2443, %v2442
        %v2492 = vpack.c.bf16 %v2445, %v2444
        %v2493 = vpack.c.bf16 %v2447, %v2446
        %v2494 = vpack.c.bf16 %v2449, %v2448
        %v2495 = vpack.c.bf16 %v2451, %v2450
        %v2496 = vpack.c.bf16 %v2453, %v2452
        %v2497 = vpack.c.bf16 %v2455, %v2454
        %v2498 = vpack.c.bf16 %v2457, %v2456
        %v2499 = vpack.c.bf16 %v2459, %v2458
        %v2500 = vpack.c.bf16 %v2461, %v2460
        %v2501 = vpack.c.bf16 %v2463, %v2462
        %v2502 = vpack.c.bf16 %v2465, %v2464
        %v2503 = vpack.c.bf16 %v2467, %v2466
        %v2504 = vpack.c.bf16 %v2469, %v2468
        %v2505 = vpack.c.bf16 %v2471, %v2470
        %v2506 = vpack.c.bf16 %v2473, %v2472
        %v2507 = vpack.c.bf16 %v2475, %v2474
        %v2540 = vunpack.c.l.b16 %v2476
        %v2541 = vunpack.c.h.b16 %v2476
        %v2542 = vunpack.c.l.b16 %v2477
        %v2543 = vunpack.c.h.b16 %v2477
        %v2544 = vunpack.c.l.b16 %v2478
        %v2545 = vunpack.c.h.b16 %v2478
        %v2546 = vunpack.c.l.b16 %v2479
        %v2547 = vunpack.c.h.b16 %v2479
        %v2548 = vunpack.c.l.b16 %v2480
        %v2549 = vunpack.c.h.b16 %v2480
        %v2550 = vunpack.c.l.b16 %v2481
        %v2551 = vunpack.c.h.b16 %v2481
        %v2552 = vunpack.c.l.b16 %v2482
        %v2553 = vunpack.c.h.b16 %v2482
        %v2554 = vunpack.c.l.b16 %v2483
        %v2555 = vunpack.c.h.b16 %v2483
        %v2556 = vunpack.c.l.b16 %v2484
        %v2557 = vunpack.c.h.b16 %v2484
        %v2558 = vunpack.c.l.b16 %v2485
        %v2559 = vunpack.c.h.b16 %v2485
        %v2560 = vunpack.c.l.b16 %v2486
        %v2561 = vunpack.c.h.b16 %v2486
        %v2562 = vunpack.c.l.b16 %v2487
        %v2563 = vunpack.c.h.b16 %v2487
        %v2564 = vunpack.c.l.b16 %v2488
        %v2565 = vunpack.c.h.b16 %v2488
        %v2566 = vunpack.c.l.b16 %v2489
        %v2567 = vunpack.c.h.b16 %v2489
        %v2568 = vunpack.c.l.b16 %v2490
        %v2569 = vunpack.c.h.b16 %v2490
        %v2570 = vunpack.c.l.b16 %v2491
        %v2571 = vunpack.c.h.b16 %v2491
        %v2572 = vunpack.c.l.b16 %v2492
        %v2573 = vunpack.c.h.b16 %v2492
        %v2574 = vunpack.c.l.b16 %v2493
        %v2575 = vunpack.c.h.b16 %v2493
        %v2576 = vunpack.c.l.b16 %v2494
        %v2577 = vunpack.c.h.b16 %v2494
        %v2578 = vunpack.c.l.b16 %v2495
        %v2579 = vunpack.c.h.b16 %v2495
        %v2580 = vunpack.c.l.b16 %v2496
        %v2581 = vunpack.c.h.b16 %v2496
        %v2582 = vunpack.c.l.b16 %v2497
        %v2583 = vunpack.c.h.b16 %v2497
        %v2584 = vunpack.c.l.b16 %v2498
        %v2585 = vunpack.c.h.b16 %v2498
        %v2586 = vunpack.c.l.b16 %v2499
        %v2587 = vunpack.c.h.b16 %v2499
        %v2588 = vunpack.c.l.b16 %v2500
        %v2589 = vunpack.c.h.b16 %v2500
        %v2590 = vunpack.c.l.b16 %v2501
        %v2591 = vunpack.c.h.b16 %v2501
        %v2592 = vunpack.c.l.b16 %v2502
        %v2593 = vunpack.c.h.b16 %v2502
        %v2594 = vunpack.c.l.b16 %v2503
        %v2595 = vunpack.c.h.b16 %v2503
        %v2596 = vunpack.c.l.b16 %v2504
        %v2597 = vunpack.c.h.b16 %v2504
        %v2598 = vunpack.c.l.b16 %v2505
        %v2599 = vunpack.c.h.b16 %v2505
        %v2600 = vunpack.c.l.b16 %v2506
        %v2601 = vunpack.c.h.b16 %v2506
        %v2602 = vunpack.c.l.b16 %v2507
        %v2603 = vunpack.c.h.b16 %v2507
        %v2604 = vpack.c.b16 %v2540, %v2540
        %v2605 = vpack.c.b16 %v2541, %v2541
        %v2606 = vpack.c.b16 %v2542, %v2542
        %v2607 = vpack.c.b16 %v2543, %v2543
        %v2608 = vpack.c.b16 %v2544, %v2544
        %v2609 = vpack.c.b16 %v2545, %v2545
        %v2610 = vpack.c.b16 %v2546, %v2546
        %v2611 = vpack.c.b16 %v2547, %v2547
        %v2612 = vpack.c.b16 %v2548, %v2548
        %v2613 = vpack.c.b16 %v2549, %v2549
        %v2614 = vpack.c.b16 %v2550, %v2550
        %v2615 = vpack.c.b16 %v2551, %v2551
        %v2616 = vpack.c.b16 %v2552, %v2552
        %v2617 = vpack.c.b16 %v2553, %v2553
        %v2618 = vpack.c.b16 %v2554, %v2554
        %v2619 = vpack.c.b16 %v2555, %v2555
        %v2620 = vpack.c.b16 %v2556, %v2556
        %v2621 = vpack.c.b16 %v2557, %v2557
        %v2622 = vpack.c.b16 %v2558, %v2558
        %v2623 = vpack.c.b16 %v2559, %v2559
        %v2624 = vpack.c.b16 %v2560, %v2560
        %v2625 = vpack.c.b16 %v2561, %v2561
        %v2626 = vpack.c.b16 %v2562, %v2562
        %v2627 = vpack.c.b16 %v2563, %v2563
        %v2628 = vpack.c.b16 %v2564, %v2564
        %v2629 = vpack.c.b16 %v2565, %v2565
        %v2630 = vpack.c.b16 %v2566, %v2566
        %v2631 = vpack.c.b16 %v2567, %v2567
        %v2632 = vpack.c.b16 %v2568, %v2568
        %v2633 = vpack.c.b16 %v2569, %v2569
        %v2634 = vpack.c.b16 %v2570, %v2570
        %v2635 = vpack.c.b16 %v2571, %v2571
        %v2636 = vpack.c.b16 %v2572, %v2572
        %v2637 = vpack.c.b16 %v2573, %v2573
        %v2638 = vpack.c.b16 %v2574, %v2574
        %v2639 = vpack.c.b16 %v2575, %v2575
        %v2640 = vpack.c.b16 %v2576, %v2576
        %v2641 = vpack.c.b16 %v2577, %v2577
        %v2642 = vpack.c.b16 %v2578, %v2578
        %v2643 = vpack.c.b16 %v2579, %v2579
        %v2644 = vpack.c.b16 %v2580, %v2580
        %v2645 = vpack.c.b16 %v2581, %v2581
        %v2646 = vpack.c.b16 %v2582, %v2582
        %v2647 = vpack.c.b16 %v2583, %v2583
        %v2648 = vpack.c.b16 %v2584, %v2584
        %v2649 = vpack.c.b16 %v2585, %v2585
        %v2650 = vpack.c.b16 %v2586, %v2586
        %v2651 = vpack.c.b16 %v2587, %v2587
        %v2652 = vpack.c.b16 %v2588, %v2588
        %v2653 = vpack.c.b16 %v2589, %v2589
        %v2654 = vpack.c.b16 %v2590, %v2590
        %v2655 = vpack.c.b16 %v2591, %v2591
        %v2656 = vpack.c.b16 %v2592, %v2592
        %v2657 = vpack.c.b16 %v2593, %v2593
        %v2658 = vpack.c.b16 %v2594, %v2594
        %v2659 = vpack.c.b16 %v2595, %v2595
        %v2660 = vpack.c.b16 %v2596, %v2596
        %v2661 = vpack.c.b16 %v2597, %v2597
        %v2662 = vpack.c.b16 %v2598, %v2598
        %v2663 = vpack.c.b16 %v2599, %v2599
        %v2664 = vpack.c.b16 %v2600, %v2600
        %v2665 = vpack.c.b16 %v2601, %v2601
        %v2666 = vpack.c.b16 %v2602, %v2602
        %v2667 = vpack.c.b16 %v2603, %v2603
        %2732 = vst [vmem:[%s480] sm:$0xf] %v2604
        %2733 = vst [vmem:[%s480 + $0x4] sm:$0xf] %v2605
        %2734 = vst [vmem:[%s480 + $0x8] sm:$0xf] %v2606
        %2735 = vst [vmem:[%s480 + $0xc] sm:$0xf] %v2607
        %2736 = vst [vmem:[%s480 + $0x10] sm:$0xf] %v2608
        %2737 = vst [vmem:[%s480 + $0x14] sm:$0xf] %v2609
        %2738 = vst [vmem:[%s480 + $0x18] sm:$0xf] %v2610
        %2739 = vst [vmem:[%s480 + $0x1c] sm:$0xf] %v2611
        %2740 = vst [vmem:[%s480 + $0x20] sm:$0xf] %v2612
        %2741 = vst [vmem:[%s480 + $0x24] sm:$0xf] %v2613
        %2742 = vst [vmem:[%s480 + $0x28] sm:$0xf] %v2614
        %2743 = vst [vmem:[%s480 + $0x2c] sm:$0xf] %v2615
        %2744 = vst [vmem:[%s480 + $0x30] sm:$0xf] %v2616
        %2745 = vst [vmem:[%s480 + $0x34] sm:$0xf] %v2617
        %2746 = vst [vmem:[%s480 + $0x38] sm:$0xf] %v2618
        %2747 = vst [vmem:[%s480 + $0x3c] sm:$0xf] %v2619
        %2748 = vst [vmem:[%s480 + $0x40] sm:$0xf] %v2620
        %2749 = vst [vmem:[%s480 + $0x44] sm:$0xf] %v2621
        %2750 = vst [vmem:[%s480 + $0x48] sm:$0xf] %v2622
        %2751 = vst [vmem:[%s480 + $0x4c] sm:$0xf] %v2623
        %2752 = vst [vmem:[%s480 + $0x50] sm:$0xf] %v2624
        %2753 = vst [vmem:[%s480 + $0x54] sm:$0xf] %v2625
        %2754 = vst [vmem:[%s480 + $0x58] sm:$0xf] %v2626
        %2755 = vst [vmem:[%s480 + $0x5c] sm:$0xf] %v2627
        %2756 = vst [vmem:[%s480 + $0x60] sm:$0xf] %v2628
        %2757 = vst [vmem:[%s480 + $0x64] sm:$0xf] %v2629
        %2758 = vst [vmem:[%s480 + $0x68] sm:$0xf] %v2630
        %2759 = vst [vmem:[%s480 + $0x6c] sm:$0xf] %v2631
        %2760 = vst [vmem:[%s480 + $0x70] sm:$0xf] %v2632
        %2761 = vst [vmem:[%s480 + $0x74] sm:$0xf] %v2633
        %2762 = vst [vmem:[%s480 + $0x78] sm:$0xf] %v2634
        %2763 = vst [vmem:[%s480 + $0x7c] sm:$0xf] %v2635
        %2764 = vst [vmem:[%s480 + $0x80] sm:$0xf] %v2636
        %2765 = vst [vmem:[%s480 + $0x84] sm:$0xf] %v2637
        %2766 = vst [vmem:[%s480 + $0x88] sm:$0xf] %v2638
        %2767 = vst [vmem:[%s480 + $0x8c] sm:$0xf] %v2639
        %2768 = vst [vmem:[%s480 + $0x90] sm:$0xf] %v2640
        %2769 = vst [vmem:[%s480 + $0x94] sm:$0xf] %v2641
        %2770 = vst [vmem:[%s480 + $0x98] sm:$0xf] %v2642
        %2771 = vst [vmem:[%s480 + $0x9c] sm:$0xf] %v2643
        %2772 = vst [vmem:[%s480 + $0xa0] sm:$0xf] %v2644
        %2773 = vst [vmem:[%s480 + $0xa4] sm:$0xf] %v2645
        %2774 = vst [vmem:[%s480 + $0xa8] sm:$0xf] %v2646
        %2775 = vst [vmem:[%s480 + $0xac] sm:$0xf] %v2647
        %2776 = vst [vmem:[%s480 + $0xb0] sm:$0xf] %v2648
        %2777 = vst [vmem:[%s480 + $0xb4] sm:$0xf] %v2649
        %2778 = vst [vmem:[%s480 + $0xb8] sm:$0xf] %v2650
        %2779 = vst [vmem:[%s480 + $0xbc] sm:$0xf] %v2651
        %2780 = vst [vmem:[%s480 + $0xc0] sm:$0xf] %v2652
        %2781 = vst [vmem:[%s480 + $0xc4] sm:$0xf] %v2653
        %2782 = vst [vmem:[%s480 + $0xc8] sm:$0xf] %v2654
        %2783 = vst [vmem:[%s480 + $0xcc] sm:$0xf] %v2655
        %2784 = vst [vmem:[%s480 + $0xd0] sm:$0xf] %v2656
        %2785 = vst [vmem:[%s480 + $0xd4] sm:$0xf] %v2657
        %2786 = vst [vmem:[%s480 + $0xd8] sm:$0xf] %v2658
        %2787 = vst [vmem:[%s480 + $0xdc] sm:$0xf] %v2659
        %2788 = vst [vmem:[%s480 + $0xe0] sm:$0xf] %v2660
        %2789 = vst [vmem:[%s480 + $0xe4] sm:$0xf] %v2661
        %2790 = vst [vmem:[%s480 + $0xe8] sm:$0xf] %v2662
        %2791 = vst [vmem:[%s480 + $0xec] sm:$0xf] %v2663
        %2792 = vst [vmem:[%s480 + $0xf0] sm:$0xf] %v2664
        %2793 = vst [vmem:[%s480 + $0xf4] sm:$0xf] %v2665
        %2794 = vst [vmem:[%s480 + $0xf8] sm:$0xf] %v2666
        %2795 = vst [vmem:[%s480 + $0xfc] sm:$0xf] %v2667
        %v2796 = vld [vmem:[#allocation8] sm:$0xff]
        %v2797 = vld [vmem:[#allocation8 + $0x8] sm:$0xf]
        %v2798 = vld [vmem:[#allocation8 + $0xc] sm:$0xff]
        %v2799 = vld [vmem:[#allocation8 + $0x14] sm:$0xf]
        %v2800 = vld [vmem:[#allocation8 + $0x18] sm:$0xff]
        %v2801 = vld [vmem:[#allocation8 + $0x20] sm:$0xf]
        %v2802 = vld [vmem:[#allocation8 + $0x24] sm:$0xff]
        %v2803 = vld [vmem:[#allocation8 + $0x2c] sm:$0xf]
        %v2804 = vld [vmem:[#allocation8 + $0x30] sm:$0xff]
        %v2805 = vld [vmem:[#allocation8 + $0x38] sm:$0xf]
        %v2806 = vld [vmem:[#allocation8 + $0x3c] sm:$0xff]
        %v2807 = vld [vmem:[#allocation8 + $0x44] sm:$0xf]
        %v2808 = vld [vmem:[#allocation8 + $0x48] sm:$0xff]
        %v2809 = vld [vmem:[#allocation8 + $0x50] sm:$0xf]
        %v2810 = vld [vmem:[#allocation8 + $0x54] sm:$0xff]
        %v2811 = vld [vmem:[#allocation8 + $0x5c] sm:$0xf]
        %v2812 = vld [vmem:[#allocation8 + $0x60] sm:$0xff]
        %v2813 = vld [vmem:[#allocation8 + $0x68] sm:$0xf]
        %v2814 = vld [vmem:[#allocation8 + $0x6c] sm:$0xff]
        %v2815 = vld [vmem:[#allocation8 + $0x74] sm:$0xf]
        %v2816 = vld [vmem:[#allocation8 + $0x78] sm:$0xff]
        %v2817 = vld [vmem:[#allocation8 + $0x80] sm:$0xf]
        %v2818 = vld [vmem:[#allocation8 + $0x84] sm:$0xff]
        %v2819 = vld [vmem:[#allocation8 + $0x8c] sm:$0xf]
        %v2820 = vld [vmem:[#allocation8 + $0x90] sm:$0xff]
        %v2821 = vld [vmem:[#allocation8 + $0x98] sm:$0xf]
        %v2822 = vld [vmem:[#allocation8 + $0x9c] sm:$0xff]
        %v2823 = vld [vmem:[#allocation8 + $0xa4] sm:$0xf]
        %v2824 = vld [vmem:[#allocation8 + $0xa8] sm:$0xff]
        %v2825 = vld [vmem:[#allocation8 + $0xb0] sm:$0xf]
        %v2826 = vld [vmem:[#allocation8 + $0xb4] sm:$0xff]
        %v2827 = vld [vmem:[#allocation8 + $0xbc] sm:$0xf]
        %v2828 = vld [vmem:[%s6] sm:$0x7]
        %v2830 = vlaneseq
        %v2831 = vshrl.u32 %v2830, 7
        %v2832 = vsub.s32 0, %v2831
        %v2833 = vrot.slane %v2828, %v2832
        %v2834 = vlaneseq
        %v2835 = vshrl.u32 %v2834, 7
        %v2836 = vsub.s32 1, %v2835
        %v2837 = vrot.slane %v2828, %v2836
        %v2838 = vlaneseq
        %v2839 = vshrl.u32 %v2838, 7
        %v2840 = vsub.s32 2, %v2839
        %v2841 = vrot.slane %v2828, %v2840
        %v2877 = vunpack.c.l.b16 %v2796
        %v2878 = vunpack.c.h.b16 %v2796
        %v2879 = vunpack.c.l.b16 %v2797
        %v2880 = vunpack.c.l.b16 %v2798
        %v2881 = vunpack.c.h.b16 %v2798
        %v2882 = vunpack.c.l.b16 %v2799
        %v2883 = vunpack.c.l.b16 %v2800
        %v2884 = vunpack.c.h.b16 %v2800
        %v2885 = vunpack.c.l.b16 %v2801
        %v2886 = vunpack.c.l.b16 %v2802
        %v2887 = vunpack.c.h.b16 %v2802
        %v2888 = vunpack.c.l.b16 %v2803
        %v2889 = vunpack.c.l.b16 %v2804
        %v2890 = vunpack.c.h.b16 %v2804
        %v2891 = vunpack.c.l.b16 %v2805
        %v2892 = vunpack.c.l.b16 %v2806
        %v2893 = vunpack.c.h.b16 %v2806
        %v2894 = vunpack.c.l.b16 %v2807
        %v2895 = vunpack.c.l.b16 %v2808
        %v2896 = vunpack.c.h.b16 %v2808
        %v2897 = vunpack.c.l.b16 %v2809
        %v2898 = vunpack.c.l.b16 %v2810
        %v2899 = vunpack.c.h.b16 %v2810
        %v2900 = vunpack.c.l.b16 %v2811
        %v2901 = vunpack.c.l.b16 %v2812
        %v2902 = vunpack.c.h.b16 %v2812
        %v2903 = vunpack.c.l.b16 %v2813
        %v2904 = vunpack.c.l.b16 %v2814
        %v2905 = vunpack.c.h.b16 %v2814
        %v2906 = vunpack.c.l.b16 %v2815
        %v2907 = vunpack.c.l.b16 %v2816
        %v2908 = vunpack.c.h.b16 %v2816
        %v2909 = vunpack.c.l.b16 %v2817
        %v2910 = vunpack.c.l.b16 %v2818
        %v2911 = vunpack.c.h.b16 %v2818
        %v2912 = vunpack.c.l.b16 %v2819
        %v2913 = vunpack.c.l.b16 %v2820
        %v2914 = vunpack.c.h.b16 %v2820
        %v2915 = vunpack.c.l.b16 %v2821
        %v2916 = vunpack.c.l.b16 %v2822
        %v2917 = vunpack.c.h.b16 %v2822
        %v2918 = vunpack.c.l.b16 %v2823
        %v2919 = vunpack.c.l.b16 %v2824
        %v2920 = vunpack.c.h.b16 %v2824
        %v2921 = vunpack.c.l.b16 %v2825
        %v2922 = vunpack.c.l.b16 %v2826
        %v2923 = vunpack.c.h.b16 %v2826
        %v2924 = vunpack.c.l.b16 %v2827
        %v2925 = vpack.c.b16 %v2880, %v2877
        %v2926 = vpack.c.b16 %v2881, %v2878
        %v2927 = vpack.c.b16 %v2882, %v2879
        %v2928 = vpack.c.b16 %v2886, %v2883
        %v2929 = vpack.c.b16 %v2887, %v2884
        %v2930 = vpack.c.b16 %v2888, %v2885
        %v2931 = vpack.c.b16 %v2892, %v2889
        %v2932 = vpack.c.b16 %v2893, %v2890
        %v2933 = vpack.c.b16 %v2894, %v2891
        %v2934 = vpack.c.b16 %v2898, %v2895
        %v2935 = vpack.c.b16 %v2899, %v2896
        %v2936 = vpack.c.b16 %v2900, %v2897
        %v2937 = vpack.c.b16 %v2904, %v2901
        %v2938 = vpack.c.b16 %v2905, %v2902
        %v2939 = vpack.c.b16 %v2906, %v2903
        %v2940 = vpack.c.b16 %v2910, %v2907
        %v2941 = vpack.c.b16 %v2911, %v2908
        %v2942 = vpack.c.b16 %v2912, %v2909
        %v2943 = vpack.c.b16 %v2916, %v2913
        %v2944 = vpack.c.b16 %v2917, %v2914
        %v2945 = vpack.c.b16 %v2918, %v2915
        %v2946 = vpack.c.b16 %v2922, %v2919
        %v2947 = vpack.c.b16 %v2923, %v2920
        %v2948 = vpack.c.b16 %v2924, %v2921
        %2973 = vmatprep.subr.bf16.mxu0 %v2947
        %2974 = vmatpush1.bf16.msra.mxu0 %v2946
        %2975 = vmatprep.subr.bf16.mxu0 %v2944
        %2976 = vmatpush1.bf16.msra.mxu0 %v2943
        %2977 = vmatprep.subr.bf16.mxu0 %v2941
        %2978 = vmatpush1.bf16.msra.mxu0 %v2940
        %2979 = vmatprep.subr.bf16.mxu0 %v2938
        %2980 = vmatpush1.bf16.msra.mxu0 %v2937
        %2981 = vmatprep.subr.bf16.mxu0 %v2935
        %2982 = vmatpush1.bf16.msra.mxu0 %v2934
        %2983 = vmatprep.subr.bf16.mxu0 %v2932
        %2984 = vmatpush1.bf16.msra.mxu0 %v2931
        %2985 = vmatprep.subr.bf16.mxu0 %v2929
        %2986 = vmatpush1.bf16.msra.mxu0 %v2928
        %2987 = vmatprep.subr.bf16.mxu0 %v2926
        %2988 = vmatpush1.bf16.msra.mxu0 %v2925
        %2989 = vmatprep.subr.bf16.mxu0 0
        %2990 = vmatpush2.bf16.msra.mxu0 0
        %2991 = vmatprep.subr.bf16.mxu0 0
        %2992 = vmatpush2.bf16.msra.mxu0 0
        %2993 = vmatprep.subr.bf16.mxu0 0
        %2994 = vmatpush2.bf16.msra.mxu0 0
        %2995 = vmatprep.subr.bf16.mxu0 0
        %2996 = vmatpush2.bf16.msra.mxu0 0
        %2997 = vmatprep.subr.bf16.mxu0 0
        %2998 = vmatpush2.bf16.msra.mxu0 0
        %2999 = vmatprep.subr.bf16.mxu0 0
        %3000 = vmatpush2.bf16.msra.mxu0 0
        %3001 = vmatprep.subr.bf16.mxu0 0
        %3002 = vmatpush2.bf16.msra.mxu0 0
        %3003 = vmatprep.subr.bf16.mxu0 0
        %3004 = vmatpush2.bf16.msra.mxu0 0
        %3005 = vmatprep.mubr.bf16.mxu0 0
        %3006 = vmatmul.mubr.bf16.gmra.mxu0 %v2476
        %v3007 = vpop.f32.mrf.mxu0
        %v3008 = vadd.f32 %v2833, %v3007
        %v3009 = vpop.f32.mrf.mxu0
        %v3010 = vadd.f32 %v2837, %v3009
        %v3011 = vpop.f32.mrf.mxu0
        %v3012 = vadd.f32 %v2833, %v3011
        %v3013 = vpop.f32.mrf.mxu0
        %v3014 = vadd.f32 %v2837, %v3013
        %3015 = vmatprep.mubr.bf16.mxu0 0
        %3016 = vmatmul.mubr.bf16.gmra.mxu0 %v2477
        %v3017 = vpop.f32.mrf.mxu0
        %v3018 = vadd.f32 %v2833, %v3017
        %v3019 = vpop.f32.mrf.mxu0
        %v3020 = vadd.f32 %v2837, %v3019
        %v3021 = vpop.f32.mrf.mxu0
        %v3022 = vadd.f32 %v2833, %v3021
        %v3023 = vpop.f32.mrf.mxu0
        %v3024 = vadd.f32 %v2837, %v3023
        %3025 = vmatprep.mubr.bf16.mxu0 0
        %3026 = vmatmul.mubr.bf16.gmra.mxu0 %v2478
        %v3027 = vpop.f32.mrf.mxu0
        %v3028 = vadd.f32 %v2833, %v3027
        %v3029 = vpop.f32.mrf.mxu0
        %v3030 = vadd.f32 %v2837, %v3029
        %v3031 = vpop.f32.mrf.mxu0
        %v3032 = vadd.f32 %v2833, %v3031
        %v3033 = vpop.f32.mrf.mxu0
        %v3034 = vadd.f32 %v2837, %v3033
        %3035 = vmatprep.mubr.bf16.mxu0 0
        %3036 = vmatmul.mubr.bf16.gmra.mxu0 %v2479
        %v3037 = vpop.f32.mrf.mxu0
        %v3038 = vadd.f32 %v2833, %v3037
        %v3039 = vpop.f32.mrf.mxu0
        %v3040 = vadd.f32 %v2837, %v3039
        %v3041 = vpop.f32.mrf.mxu0
        %v3042 = vadd.f32 %v2833, %v3041
        %v3043 = vpop.f32.mrf.mxu0
        %v3044 = vadd.f32 %v2837, %v3043
        %3045 = vmatprep.mubr.bf16.mxu0 0
        %3046 = vmatmul.mubr.bf16.gmra.mxu0 %v2480
        %v3047 = vpop.f32.mrf.mxu0
        %v3048 = vadd.f32 %v2833, %v3047
        %v3049 = vpop.f32.mrf.mxu0
        %v3050 = vadd.f32 %v2837, %v3049
        %v3051 = vpop.f32.mrf.mxu0
        %v3052 = vadd.f32 %v2833, %v3051
        %v3053 = vpop.f32.mrf.mxu0
        %v3054 = vadd.f32 %v2837, %v3053
        %3055 = vmatprep.mubr.bf16.mxu0 0
        %3056 = vmatmul.mubr.bf16.gmra.mxu0 %v2481
        %v3057 = vpop.f32.mrf.mxu0
        %v3058 = vadd.f32 %v2833, %v3057
        %v3059 = vpop.f32.mrf.mxu0
        %v3060 = vadd.f32 %v2837, %v3059
        %v3061 = vpop.f32.mrf.mxu0
        %v3062 = vadd.f32 %v2833, %v3061
        %v3063 = vpop.f32.mrf.mxu0
        %v3064 = vadd.f32 %v2837, %v3063
        %3065 = vmatprep.mubr.bf16.mxu0 0
        %3066 = vmatmul.mubr.bf16.gmra.mxu0 %v2482
        %v3067 = vpop.f32.mrf.mxu0
        %v3068 = vadd.f32 %v2833, %v3067
        %v3069 = vpop.f32.mrf.mxu0
        %v3070 = vadd.f32 %v2837, %v3069
        %v3071 = vpop.f32.mrf.mxu0
        %v3072 = vadd.f32 %v2833, %v3071
        %v3073 = vpop.f32.mrf.mxu0
        %v3074 = vadd.f32 %v2837, %v3073
        %3075 = vmatprep.mubr.bf16.mxu0 0
        %3076 = vmatmul.mubr.bf16.gmra.mxu0 %v2483
        %v3077 = vpop.f32.mrf.mxu0
        %v3078 = vadd.f32 %v2833, %v3077
        %v3079 = vpop.f32.mrf.mxu0
        %v3080 = vadd.f32 %v2837, %v3079
        %v3081 = vpop.f32.mrf.mxu0
        %v3082 = vadd.f32 %v2833, %v3081
        %v3083 = vpop.f32.mrf.mxu0
        %v3084 = vadd.f32 %v2837, %v3083
        %3085 = vmatprep.mubr.bf16.mxu0 0
        %3086 = vmatmul.mubr.bf16.gmra.mxu0 %v2484
        %v3087 = vpop.f32.mrf.mxu0
        %v3088 = vadd.f32 %v2833, %v3087
        %v3089 = vpop.f32.mrf.mxu0
        %v3090 = vadd.f32 %v2837, %v3089
        %v3091 = vpop.f32.mrf.mxu0
        %v3092 = vadd.f32 %v2833, %v3091
        %v3093 = vpop.f32.mrf.mxu0
        %v3094 = vadd.f32 %v2837, %v3093
        %3095 = vmatprep.mubr.bf16.mxu0 0
        %3096 = vmatmul.mubr.bf16.gmra.mxu0 %v2485
        %v3097 = vpop.f32.mrf.mxu0
        %v3098 = vadd.f32 %v2833, %v3097
        %v3099 = vpop.f32.mrf.mxu0
        %v3100 = vadd.f32 %v2837, %v3099
        %v3101 = vpop.f32.mrf.mxu0
        %v3102 = vadd.f32 %v2833, %v3101
        %v3103 = vpop.f32.mrf.mxu0
        %v3104 = vadd.f32 %v2837, %v3103
        %3105 = vmatprep.mubr.bf16.mxu0 0
        %3106 = vmatmul.mubr.bf16.gmra.mxu0 %v2486
        %v3107 = vpop.f32.mrf.mxu0
        %v3108 = vadd.f32 %v2833, %v3107
        %v3109 = vpop.f32.mrf.mxu0
        %v3110 = vadd.f32 %v2837, %v3109
        %v3111 = vpop.f32.mrf.mxu0
        %v3112 = vadd.f32 %v2833, %v3111
        %v3113 = vpop.f32.mrf.mxu0
        %v3114 = vadd.f32 %v2837, %v3113
        %3115 = vmatprep.mubr.bf16.mxu0 0
        %3116 = vmatmul.mubr.bf16.gmra.mxu0 %v2487
        %v3117 = vpop.f32.mrf.mxu0
        %v3118 = vadd.f32 %v2833, %v3117
        %v3119 = vpop.f32.mrf.mxu0
        %v3120 = vadd.f32 %v2837, %v3119
        %v3121 = vpop.f32.mrf.mxu0
        %v3122 = vadd.f32 %v2833, %v3121
        %v3123 = vpop.f32.mrf.mxu0
        %v3124 = vadd.f32 %v2837, %v3123
        %3125 = vmatprep.mubr.bf16.mxu0 0
        %3126 = vmatmul.mubr.bf16.gmra.mxu0 %v2488
        %v3127 = vpop.f32.mrf.mxu0
        %v3128 = vadd.f32 %v2833, %v3127
        %v3129 = vpop.f32.mrf.mxu0
        %v3130 = vadd.f32 %v2837, %v3129
        %v3131 = vpop.f32.mrf.mxu0
        %v3132 = vadd.f32 %v2833, %v3131
        %v3133 = vpop.f32.mrf.mxu0
        %v3134 = vadd.f32 %v2837, %v3133
        %3135 = vmatprep.mubr.bf16.mxu0 0
        %3136 = vmatmul.mubr.bf16.gmra.mxu0 %v2489
        %v3137 = vpop.f32.mrf.mxu0
        %v3138 = vadd.f32 %v2833, %v3137
        %v3139 = vpop.f32.mrf.mxu0
        %v3140 = vadd.f32 %v2837, %v3139
        %v3141 = vpop.f32.mrf.mxu0
        %v3142 = vadd.f32 %v2833, %v3141
        %v3143 = vpop.f32.mrf.mxu0
        %v3144 = vadd.f32 %v2837, %v3143
        %3145 = vmatprep.mubr.bf16.mxu0 0
        %3146 = vmatmul.mubr.bf16.gmra.mxu0 %v2490
        %v3147 = vpop.f32.mrf.mxu0
        %v3148 = vadd.f32 %v2833, %v3147
        %v3149 = vpop.f32.mrf.mxu0
        %v3150 = vadd.f32 %v2837, %v3149
        %v3151 = vpop.f32.mrf.mxu0
        %v3152 = vadd.f32 %v2833, %v3151
        %v3153 = vpop.f32.mrf.mxu0
        %v3154 = vadd.f32 %v2837, %v3153
        %3155 = vmatprep.mubr.bf16.mxu0 0
        %3156 = vmatmul.mubr.bf16.gmra.mxu0 %v2491
        %v3157 = vpop.f32.mrf.mxu0
        %v3158 = vadd.f32 %v2833, %v3157
        %v3159 = vpop.f32.mrf.mxu0
        %v3160 = vadd.f32 %v2837, %v3159
        %v3161 = vpop.f32.mrf.mxu0
        %v3162 = vadd.f32 %v2833, %v3161
        %v3163 = vpop.f32.mrf.mxu0
        %v3164 = vadd.f32 %v2837, %v3163
        %3165 = vmatprep.mubr.bf16.mxu0 0
        %3166 = vmatmul.mubr.bf16.gmra.mxu0 %v2492
        %v3167 = vpop.f32.mrf.mxu0
        %v3168 = vadd.f32 %v2833, %v3167
        %v3169 = vpop.f32.mrf.mxu0
        %v3170 = vadd.f32 %v2837, %v3169
        %v3171 = vpop.f32.mrf.mxu0
        %v3172 = vadd.f32 %v2833, %v3171
        %v3173 = vpop.f32.mrf.mxu0
        %v3174 = vadd.f32 %v2837, %v3173
        %3175 = vmatprep.mubr.bf16.mxu0 0
        %3176 = vmatmul.mubr.bf16.gmra.mxu0 %v2493
        %v3177 = vpop.f32.mrf.mxu0
        %v3178 = vadd.f32 %v2833, %v3177
        %v3179 = vpop.f32.mrf.mxu0
        %v3180 = vadd.f32 %v2837, %v3179
        %v3181 = vpop.f32.mrf.mxu0
        %v3182 = vadd.f32 %v2833, %v3181
        %v3183 = vpop.f32.mrf.mxu0
        %v3184 = vadd.f32 %v2837, %v3183
        %3185 = vmatprep.mubr.bf16.mxu0 0
        %3186 = vmatmul.mubr.bf16.gmra.mxu0 %v2494
        %v3187 = vpop.f32.mrf.mxu0
        %v3188 = vadd.f32 %v2833, %v3187
        %v3189 = vpop.f32.mrf.mxu0
        %v3190 = vadd.f32 %v2837, %v3189
        %v3191 = vpop.f32.mrf.mxu0
        %v3192 = vadd.f32 %v2833, %v3191
        %v3193 = vpop.f32.mrf.mxu0
        %v3194 = vadd.f32 %v2837, %v3193
        %3195 = vmatprep.mubr.bf16.mxu0 0
        %3196 = vmatmul.mubr.bf16.gmra.mxu0 %v2495
        %v3197 = vpop.f32.mrf.mxu0
        %v3198 = vadd.f32 %v2833, %v3197
        %v3199 = vpop.f32.mrf.mxu0
        %v3200 = vadd.f32 %v2837, %v3199
        %v3201 = vpop.f32.mrf.mxu0
        %v3202 = vadd.f32 %v2833, %v3201
        %v3203 = vpop.f32.mrf.mxu0
        %v3204 = vadd.f32 %v2837, %v3203
        %3205 = vmatprep.mubr.bf16.mxu0 0
        %3206 = vmatmul.mubr.bf16.gmra.mxu0 %v2496
        %v3207 = vpop.f32.mrf.mxu0
        %v3208 = vadd.f32 %v2833, %v3207
        %v3209 = vpop.f32.mrf.mxu0
        %v3210 = vadd.f32 %v2837, %v3209
        %v3211 = vpop.f32.mrf.mxu0
        %v3212 = vadd.f32 %v2833, %v3211
        %v3213 = vpop.f32.mrf.mxu0
        %v3214 = vadd.f32 %v2837, %v3213
        %3215 = vmatprep.mubr.bf16.mxu0 0
        %3216 = vmatmul.mubr.bf16.gmra.mxu0 %v2497
        %v3217 = vpop.f32.mrf.mxu0
        %v3218 = vadd.f32 %v2833, %v3217
        %v3219 = vpop.f32.mrf.mxu0
        %v3220 = vadd.f32 %v2837, %v3219
        %v3221 = vpop.f32.mrf.mxu0
        %v3222 = vadd.f32 %v2833, %v3221
        %v3223 = vpop.f32.mrf.mxu0
        %v3224 = vadd.f32 %v2837, %v3223
        %3225 = vmatprep.mubr.bf16.mxu0 0
        %3226 = vmatmul.mubr.bf16.gmra.mxu0 %v2498
        %v3227 = vpop.f32.mrf.mxu0
        %v3228 = vadd.f32 %v2833, %v3227
        %v3229 = vpop.f32.mrf.mxu0
        %v3230 = vadd.f32 %v2837, %v3229
        %v3231 = vpop.f32.mrf.mxu0
        %v3232 = vadd.f32 %v2833, %v3231
        %v3233 = vpop.f32.mrf.mxu0
        %v3234 = vadd.f32 %v2837, %v3233
        %3235 = vmatprep.mubr.bf16.mxu0 0
        %3236 = vmatmul.mubr.bf16.gmra.mxu0 %v2499
        %v3237 = vpop.f32.mrf.mxu0
        %v3238 = vadd.f32 %v2833, %v3237
        %v3239 = vpop.f32.mrf.mxu0
        %v3240 = vadd.f32 %v2837, %v3239
        %v3241 = vpop.f32.mrf.mxu0
        %v3242 = vadd.f32 %v2833, %v3241
        %v3243 = vpop.f32.mrf.mxu0
        %v3244 = vadd.f32 %v2837, %v3243
        %3245 = vmatprep.mubr.bf16.mxu0 0
        %3246 = vmatmul.mubr.bf16.gmra.mxu0 %v2500
        %v3247 = vpop.f32.mrf.mxu0
        %v3248 = vadd.f32 %v2833, %v3247
        %v3249 = vpop.f32.mrf.mxu0
        %v3250 = vadd.f32 %v2837, %v3249
        %v3251 = vpop.f32.mrf.mxu0
        %v3252 = vadd.f32 %v2833, %v3251
        %v3253 = vpop.f32.mrf.mxu0
        %v3254 = vadd.f32 %v2837, %v3253
        %3255 = vmatprep.mubr.bf16.mxu0 0
        %3256 = vmatmul.mubr.bf16.gmra.mxu0 %v2501
        %v3257 = vpop.f32.mrf.mxu0
        %v3258 = vadd.f32 %v2833, %v3257
        %v3259 = vpop.f32.mrf.mxu0
        %v3260 = vadd.f32 %v2837, %v3259
        %v3261 = vpop.f32.mrf.mxu0
        %v3262 = vadd.f32 %v2833, %v3261
        %v3263 = vpop.f32.mrf.mxu0
        %v3264 = vadd.f32 %v2837, %v3263
        %3265 = vmatprep.mubr.bf16.mxu0 0
        %3266 = vmatmul.mubr.bf16.gmra.mxu0 %v2502
        %v3267 = vpop.f32.mrf.mxu0
        %v3268 = vadd.f32 %v2833, %v3267
        %v3269 = vpop.f32.mrf.mxu0
        %v3270 = vadd.f32 %v2837, %v3269
        %v3271 = vpop.f32.mrf.mxu0
        %v3272 = vadd.f32 %v2833, %v3271
        %v3273 = vpop.f32.mrf.mxu0
        %v3274 = vadd.f32 %v2837, %v3273
        %3275 = vmatprep.mubr.bf16.mxu0 0
        %3276 = vmatmul.mubr.bf16.gmra.mxu0 %v2503
        %v3277 = vpop.f32.mrf.mxu0
        %v3278 = vadd.f32 %v2833, %v3277
        %v3279 = vpop.f32.mrf.mxu0
        %v3280 = vadd.f32 %v2837, %v3279
        %v3281 = vpop.f32.mrf.mxu0
        %v3282 = vadd.f32 %v2833, %v3281
        %v3283 = vpop.f32.mrf.mxu0
        %v3284 = vadd.f32 %v2837, %v3283
        %3285 = vmatprep.mubr.bf16.mxu0 0
        %3286 = vmatmul.mubr.bf16.gmra.mxu0 %v2504
        %v3287 = vpop.f32.mrf.mxu0
        %v3288 = vadd.f32 %v2833, %v3287
        %v3289 = vpop.f32.mrf.mxu0
        %v3290 = vadd.f32 %v2837, %v3289
        %v3291 = vpop.f32.mrf.mxu0
        %v3292 = vadd.f32 %v2833, %v3291
        %v3293 = vpop.f32.mrf.mxu0
        %v3294 = vadd.f32 %v2837, %v3293
        %3295 = vmatprep.mubr.bf16.mxu0 0
        %3296 = vmatmul.mubr.bf16.gmra.mxu0 %v2505
        %v3297 = vpop.f32.mrf.mxu0
        %v3298 = vadd.f32 %v2833, %v3297
        %v3299 = vpop.f32.mrf.mxu0
        %v3300 = vadd.f32 %v2837, %v3299
        %v3301 = vpop.f32.mrf.mxu0
        %v3302 = vadd.f32 %v2833, %v3301
        %v3303 = vpop.f32.mrf.mxu0
        %v3304 = vadd.f32 %v2837, %v3303
        %3305 = vmatprep.mubr.bf16.mxu0 0
        %3306 = vmatmul.mubr.bf16.gmra.mxu0 %v2506
        %v3307 = vpop.f32.mrf.mxu0
        %v3308 = vadd.f32 %v2833, %v3307
        %v3309 = vpop.f32.mrf.mxu0
        %v3310 = vadd.f32 %v2837, %v3309
        %v3311 = vpop.f32.mrf.mxu0
        %v3312 = vadd.f32 %v2833, %v3311
        %v3313 = vpop.f32.mrf.mxu0
        %v3314 = vadd.f32 %v2837, %v3313
        %3315 = vmatprep.mubr.bf16.mxu0 0
        %3316 = vmatmul.mubr.bf16.gmra.mxu0 %v2507
        %v3317 = vpop.f32.mrf.mxu0
        %v3318 = vadd.f32 %v2833, %v3317
        %v3319 = vpop.f32.mrf.mxu0
        %v3320 = vadd.f32 %v2837, %v3319
        %v3321 = vpop.f32.mrf.mxu0
        %v3322 = vadd.f32 %v2833, %v3321
        %v3323 = vpop.f32.mrf.mxu0
        %v3324 = vadd.f32 %v2837, %v3323
        %3325 = vdwg.mxu0
        %3326 = vmatprep.subr.bf16.mxu0 0
        %3327 = vmatpush1.bf16.msra.mxu0 %v2948
        %3328 = vmatprep.subr.bf16.mxu0 0
        %3329 = vmatpush1.bf16.msra.mxu0 %v2945
        %3330 = vmatprep.subr.bf16.mxu0 0
        %3331 = vmatpush1.bf16.msra.mxu0 %v2942
        %3332 = vmatprep.subr.bf16.mxu0 0
        %3333 = vmatpush1.bf16.msra.mxu0 %v2939
        %3334 = vmatprep.subr.bf16.mxu0 0
        %3335 = vmatpush1.bf16.msra.mxu0 %v2936
        %3336 = vmatprep.subr.bf16.mxu0 0
        %3337 = vmatpush1.bf16.msra.mxu0 %v2933
        %3338 = vmatprep.subr.bf16.mxu0 0
        %3339 = vmatpush1.bf16.msra.mxu0 %v2930
        %3340 = vmatprep.subr.bf16.mxu0 0
        %3341 = vmatpush1.bf16.msra.mxu0 %v2927
        %3342 = vmatprep.subr.bf16.mxu0 0
        %3343 = vmatpush2.bf16.msra.mxu0 0
        %3344 = vmatprep.subr.bf16.mxu0 0
        %3345 = vmatpush2.bf16.msra.mxu0 0
        %3346 = vmatprep.subr.bf16.mxu0 0
        %3347 = vmatpush2.bf16.msra.mxu0 0
        %3348 = vmatprep.subr.bf16.mxu0 0
        %3349 = vmatpush2.bf16.msra.mxu0 0
        %3350 = vmatprep.subr.bf16.mxu0 0
        %3351 = vmatpush2.bf16.msra.mxu0 0
        %3352 = vmatprep.subr.bf16.mxu0 0
        %3353 = vmatpush2.bf16.msra.mxu0 0
        %3354 = vmatprep.subr.bf16.mxu0 0
        %3355 = vmatpush2.bf16.msra.mxu0 0
        %3356 = vmatprep.subr.bf16.mxu0 0
        %3357 = vmatpush2.bf16.msra.mxu0 0
        %3358 = vmatprep.mubr.bf16.mxu0 0
        %3359 = vmatmul.mubr.bf16.gmra.mxu0 %v2476
        %v3360 = vpop.f32.mrf.mxu0
        %v3361 = vadd.f32 %v2841, %v3360
        %v3362 = vpop.f32.mrf.mxu0
        %v3363 = vpop.f32.mrf.mxu0
        %v3364 = vadd.f32 %v2841, %v3363
        %v3365 = vpop.f32.mrf.mxu0
        %3366 = vmatprep.mubr.bf16.mxu0 0
        %3367 = vmatmul.mubr.bf16.gmra.mxu0 %v2477
        %v3368 = vpop.f32.mrf.mxu0
        %v3369 = vadd.f32 %v2841, %v3368
        %v3370 = vpop.f32.mrf.mxu0
        %v3371 = vpop.f32.mrf.mxu0
        %v3372 = vadd.f32 %v2841, %v3371
        %v3373 = vpop.f32.mrf.mxu0
        %3374 = vmatprep.mubr.bf16.mxu0 0
        %3375 = vmatmul.mubr.bf16.gmra.mxu0 %v2478
        %v3376 = vpop.f32.mrf.mxu0
        %v3377 = vadd.f32 %v2841, %v3376
        %v3378 = vpop.f32.mrf.mxu0
        %v3379 = vpop.f32.mrf.mxu0
        %v3380 = vadd.f32 %v2841, %v3379
        %v3381 = vpop.f32.mrf.mxu0
        %3382 = vmatprep.mubr.bf16.mxu0 0
        %3383 = vmatmul.mubr.bf16.gmra.mxu0 %v2479
        %v3384 = vpop.f32.mrf.mxu0
        %v3385 = vadd.f32 %v2841, %v3384
        %v3386 = vpop.f32.mrf.mxu0
        %v3387 = vpop.f32.mrf.mxu0
        %v3388 = vadd.f32 %v2841, %v3387
        %v3389 = vpop.f32.mrf.mxu0
        %3390 = vmatprep.mubr.bf16.mxu0 0
        %3391 = vmatmul.mubr.bf16.gmra.mxu0 %v2480
        %v3392 = vpop.f32.mrf.mxu0
        %v3393 = vadd.f32 %v2841, %v3392
        %v3394 = vpop.f32.mrf.mxu0
        %v3395 = vpop.f32.mrf.mxu0
        %v3396 = vadd.f32 %v2841, %v3395
        %v3397 = vpop.f32.mrf.mxu0
        %3398 = vmatprep.mubr.bf16.mxu0 0
        %3399 = vmatmul.mubr.bf16.gmra.mxu0 %v2481
        %v3400 = vpop.f32.mrf.mxu0
        %v3401 = vadd.f32 %v2841, %v3400
        %v3402 = vpop.f32.mrf.mxu0
        %v3403 = vpop.f32.mrf.mxu0
        %v3404 = vadd.f32 %v2841, %v3403
        %v3405 = vpop.f32.mrf.mxu0
        %3406 = vmatprep.mubr.bf16.mxu0 0
        %3407 = vmatmul.mubr.bf16.gmra.mxu0 %v2482
        %v3408 = vpop.f32.mrf.mxu0
        %v3409 = vadd.f32 %v2841, %v3408
        %v3410 = vpop.f32.mrf.mxu0
        %v3411 = vpop.f32.mrf.mxu0
        %v3412 = vadd.f32 %v2841, %v3411
        %v3413 = vpop.f32.mrf.mxu0
        %3414 = vmatprep.mubr.bf16.mxu0 0
        %3415 = vmatmul.mubr.bf16.gmra.mxu0 %v2483
        %v3416 = vpop.f32.mrf.mxu0
        %v3417 = vadd.f32 %v2841, %v3416
        %v3418 = vpop.f32.mrf.mxu0
        %v3419 = vpop.f32.mrf.mxu0
        %v3420 = vadd.f32 %v2841, %v3419
        %v3421 = vpop.f32.mrf.mxu0
        %3422 = vmatprep.mubr.bf16.mxu0 0
        %3423 = vmatmul.mubr.bf16.gmra.mxu0 %v2484
        %v3424 = vpop.f32.mrf.mxu0
        %v3425 = vadd.f32 %v2841, %v3424
        %v3426 = vpop.f32.mrf.mxu0
        %v3427 = vpop.f32.mrf.mxu0
        %v3428 = vadd.f32 %v2841, %v3427
        %v3429 = vpop.f32.mrf.mxu0
        %3430 = vmatprep.mubr.bf16.mxu0 0
        %3431 = vmatmul.mubr.bf16.gmra.mxu0 %v2485
        %v3432 = vpop.f32.mrf.mxu0
        %v3433 = vadd.f32 %v2841, %v3432
        %v3434 = vpop.f32.mrf.mxu0
        %v3435 = vpop.f32.mrf.mxu0
        %v3436 = vadd.f32 %v2841, %v3435
        %v3437 = vpop.f32.mrf.mxu0
        %3438 = vmatprep.mubr.bf16.mxu0 0
        %3439 = vmatmul.mubr.bf16.gmra.mxu0 %v2486
        %v3440 = vpop.f32.mrf.mxu0
        %v3441 = vadd.f32 %v2841, %v3440
        %v3442 = vpop.f32.mrf.mxu0
        %v3443 = vpop.f32.mrf.mxu0
        %v3444 = vadd.f32 %v2841, %v3443
        %v3445 = vpop.f32.mrf.mxu0
        %3446 = vmatprep.mubr.bf16.mxu0 0
        %3447 = vmatmul.mubr.bf16.gmra.mxu0 %v2487
        %v3448 = vpop.f32.mrf.mxu0
        %v3449 = vadd.f32 %v2841, %v3448
        %v3450 = vpop.f32.mrf.mxu0
        %v3451 = vpop.f32.mrf.mxu0
        %v3452 = vadd.f32 %v2841, %v3451
        %v3453 = vpop.f32.mrf.mxu0
        %3454 = vmatprep.mubr.bf16.mxu0 0
        %3455 = vmatmul.mubr.bf16.gmra.mxu0 %v2488
        %v3456 = vpop.f32.mrf.mxu0
        %v3457 = vadd.f32 %v2841, %v3456
        %v3458 = vpop.f32.mrf.mxu0
        %v3459 = vpop.f32.mrf.mxu0
        %v3460 = vadd.f32 %v2841, %v3459
        %v3461 = vpop.f32.mrf.mxu0
        %3462 = vmatprep.mubr.bf16.mxu0 0
        %3463 = vmatmul.mubr.bf16.gmra.mxu0 %v2489
        %v3464 = vpop.f32.mrf.mxu0
        %v3465 = vadd.f32 %v2841, %v3464
        %v3466 = vpop.f32.mrf.mxu0
        %v3467 = vpop.f32.mrf.mxu0
        %v3468 = vadd.f32 %v2841, %v3467
        %v3469 = vpop.f32.mrf.mxu0
        %3470 = vmatprep.mubr.bf16.mxu0 0
        %3471 = vmatmul.mubr.bf16.gmra.mxu0 %v2490
        %v3472 = vpop.f32.mrf.mxu0
        %v3473 = vadd.f32 %v2841, %v3472
        %v3474 = vpop.f32.mrf.mxu0
        %v3475 = vpop.f32.mrf.mxu0
        %v3476 = vadd.f32 %v2841, %v3475
        %v3477 = vpop.f32.mrf.mxu0
        %3478 = vmatprep.mubr.bf16.mxu0 0
        %3479 = vmatmul.mubr.bf16.gmra.mxu0 %v2491
        %v3480 = vpop.f32.mrf.mxu0
        %v3481 = vadd.f32 %v2841, %v3480
        %v3482 = vpop.f32.mrf.mxu0
        %v3483 = vpop.f32.mrf.mxu0
        %v3484 = vadd.f32 %v2841, %v3483
        %v3485 = vpop.f32.mrf.mxu0
        %3486 = vmatprep.mubr.bf16.mxu0 0
        %3487 = vmatmul.mubr.bf16.gmra.mxu0 %v2492
        %v3488 = vpop.f32.mrf.mxu0
        %v3489 = vadd.f32 %v2841, %v3488
        %v3490 = vpop.f32.mrf.mxu0
        %v3491 = vpop.f32.mrf.mxu0
        %v3492 = vadd.f32 %v2841, %v3491
        %v3493 = vpop.f32.mrf.mxu0
        %3494 = vmatprep.mubr.bf16.mxu0 0
        %3495 = vmatmul.mubr.bf16.gmra.mxu0 %v2493
        %v3496 = vpop.f32.mrf.mxu0
        %v3497 = vadd.f32 %v2841, %v3496
        %v3498 = vpop.f32.mrf.mxu0
        %v3499 = vpop.f32.mrf.mxu0
        %v3500 = vadd.f32 %v2841, %v3499
        %v3501 = vpop.f32.mrf.mxu0
        %3502 = vmatprep.mubr.bf16.mxu0 0
        %3503 = vmatmul.mubr.bf16.gmra.mxu0 %v2494
        %v3504 = vpop.f32.mrf.mxu0
        %v3505 = vadd.f32 %v2841, %v3504
        %v3506 = vpop.f32.mrf.mxu0
        %v3507 = vpop.f32.mrf.mxu0
        %v3508 = vadd.f32 %v2841, %v3507
        %v3509 = vpop.f32.mrf.mxu0
        %3510 = vmatprep.mubr.bf16.mxu0 0
        %3511 = vmatmul.mubr.bf16.gmra.mxu0 %v2495
        %v3512 = vpop.f32.mrf.mxu0
        %v3513 = vadd.f32 %v2841, %v3512
        %v3514 = vpop.f32.mrf.mxu0
        %v3515 = vpop.f32.mrf.mxu0
        %v3516 = vadd.f32 %v2841, %v3515
        %v3517 = vpop.f32.mrf.mxu0
        %3518 = vmatprep.mubr.bf16.mxu0 0
        %3519 = vmatmul.mubr.bf16.gmra.mxu0 %v2496
        %v3520 = vpop.f32.mrf.mxu0
        %v3521 = vadd.f32 %v2841, %v3520
        %v3522 = vpop.f32.mrf.mxu0
        %v3523 = vpop.f32.mrf.mxu0
        %v3524 = vadd.f32 %v2841, %v3523
        %v3525 = vpop.f32.mrf.mxu0
        %3526 = vmatprep.mubr.bf16.mxu0 0
        %3527 = vmatmul.mubr.bf16.gmra.mxu0 %v2497
        %v3528 = vpop.f32.mrf.mxu0
        %v3529 = vadd.f32 %v2841, %v3528
        %v3530 = vpop.f32.mrf.mxu0
        %v3531 = vpop.f32.mrf.mxu0
        %v3532 = vadd.f32 %v2841, %v3531
        %v3533 = vpop.f32.mrf.mxu0
        %3534 = vmatprep.mubr.bf16.mxu0 0
        %3535 = vmatmul.mubr.bf16.gmra.mxu0 %v2498
        %v3536 = vpop.f32.mrf.mxu0
        %v3537 = vadd.f32 %v2841, %v3536
        %v3538 = vpop.f32.mrf.mxu0
        %v3539 = vpop.f32.mrf.mxu0
        %v3540 = vadd.f32 %v2841, %v3539
        %v3541 = vpop.f32.mrf.mxu0
        %3542 = vmatprep.mubr.bf16.mxu0 0
        %3543 = vmatmul.mubr.bf16.gmra.mxu0 %v2499
        %v3544 = vpop.f32.mrf.mxu0
        %v3545 = vadd.f32 %v2841, %v3544
        %v3546 = vpop.f32.mrf.mxu0
        %v3547 = vpop.f32.mrf.mxu0
        %v3548 = vadd.f32 %v2841, %v3547
        %v3549 = vpop.f32.mrf.mxu0
        %3550 = vmatprep.mubr.bf16.mxu0 0
        %3551 = vmatmul.mubr.bf16.gmra.mxu0 %v2500
        %v3552 = vpop.f32.mrf.mxu0
        %v3553 = vadd.f32 %v2841, %v3552
        %v3554 = vpop.f32.mrf.mxu0
        %v3555 = vpop.f32.mrf.mxu0
        %v3556 = vadd.f32 %v2841, %v3555
        %v3557 = vpop.f32.mrf.mxu0
        %3558 = vmatprep.mubr.bf16.mxu0 0
        %3559 = vmatmul.mubr.bf16.gmra.mxu0 %v2501
        %v3560 = vpop.f32.mrf.mxu0
        %v3561 = vadd.f32 %v2841, %v3560
        %v3562 = vpop.f32.mrf.mxu0
        %v3563 = vpop.f32.mrf.mxu0
        %v3564 = vadd.f32 %v2841, %v3563
        %v3565 = vpop.f32.mrf.mxu0
        %3566 = vmatprep.mubr.bf16.mxu0 0
        %3567 = vmatmul.mubr.bf16.gmra.mxu0 %v2502
        %v3568 = vpop.f32.mrf.mxu0
        %v3569 = vadd.f32 %v2841, %v3568
        %v3570 = vpop.f32.mrf.mxu0
        %v3571 = vpop.f32.mrf.mxu0
        %v3572 = vadd.f32 %v2841, %v3571
        %v3573 = vpop.f32.mrf.mxu0
        %3574 = vmatprep.mubr.bf16.mxu0 0
        %3575 = vmatmul.mubr.bf16.gmra.mxu0 %v2503
        %v3576 = vpop.f32.mrf.mxu0
        %v3577 = vadd.f32 %v2841, %v3576
        %v3578 = vpop.f32.mrf.mxu0
        %v3579 = vpop.f32.mrf.mxu0
        %v3580 = vadd.f32 %v2841, %v3579
        %v3581 = vpop.f32.mrf.mxu0
        %3582 = vmatprep.mubr.bf16.mxu0 0
        %3583 = vmatmul.mubr.bf16.gmra.mxu0 %v2504
        %v3584 = vpop.f32.mrf.mxu0
        %v3585 = vadd.f32 %v2841, %v3584
        %v3586 = vpop.f32.mrf.mxu0
        %v3587 = vpop.f32.mrf.mxu0
        %v3588 = vadd.f32 %v2841, %v3587
        %v3589 = vpop.f32.mrf.mxu0
        %3590 = vmatprep.mubr.bf16.mxu0 0
        %3591 = vmatmul.mubr.bf16.gmra.mxu0 %v2505
        %v3592 = vpop.f32.mrf.mxu0
        %v3593 = vadd.f32 %v2841, %v3592
        %v3594 = vpop.f32.mrf.mxu0
        %v3595 = vpop.f32.mrf.mxu0
        %v3596 = vadd.f32 %v2841, %v3595
        %v3597 = vpop.f32.mrf.mxu0
        %3598 = vmatprep.mubr.bf16.mxu0 0
        %3599 = vmatmul.mubr.bf16.gmra.mxu0 %v2506
        %v3600 = vpop.f32.mrf.mxu0
        %v3601 = vadd.f32 %v2841, %v3600
        %v3602 = vpop.f32.mrf.mxu0
        %v3603 = vpop.f32.mrf.mxu0
        %v3604 = vadd.f32 %v2841, %v3603
        %v3605 = vpop.f32.mrf.mxu0
        %3606 = vmatprep.mubr.bf16.mxu0 0
        %3607 = vmatmul.mubr.bf16.gmra.mxu0 %v2507
        %v3608 = vpop.f32.mrf.mxu0
        %v3609 = vadd.f32 %v2841, %v3608
        %v3610 = vpop.f32.mrf.mxu0
        %v3611 = vpop.f32.mrf.mxu0
        %v3612 = vadd.f32 %v2841, %v3611
        %v3613 = vpop.f32.mrf.mxu0
        %3614 = vdwg.mxu0
        %v3615 = vmul.f32 %v3008, %v784
        %v3616 = vmul.f32 %v3012, %v785
        %v3617 = vmul.f32 %v3018, %v786
        %v3618 = vmul.f32 %v3022, %v787
        %v3619 = vmul.f32 %v3028, %v788
        %v3620 = vmul.f32 %v3032, %v789
        %v3621 = vmul.f32 %v3038, %v790
        %v3622 = vmul.f32 %v3042, %v791
        %v3623 = vmul.f32 %v3048, %v792
        %v3624 = vmul.f32 %v3052, %v793
        %v3625 = vmul.f32 %v3058, %v794
        %v3626 = vmul.f32 %v3062, %v795
        %v3627 = vmul.f32 %v3068, %v796
        %v3628 = vmul.f32 %v3072, %v797
        %v3629 = vmul.f32 %v3078, %v798
        %v3630 = vmul.f32 %v3082, %v799
        %v3631 = vmul.f32 %v3088, %v800
        %v3632 = vmul.f32 %v3092, %v801
        %v3633 = vmul.f32 %v3098, %v802
        %v3634 = vmul.f32 %v3102, %v803
        %v3635 = vmul.f32 %v3108, %v804
        %v3636 = vmul.f32 %v3112, %v805
        %v3637 = vmul.f32 %v3118, %v806
        %v3638 = vmul.f32 %v3122, %v807
        %v3639 = vmul.f32 %v3128, %v808
        %v3640 = vmul.f32 %v3132, %v809
        %v3641 = vmul.f32 %v3138, %v810
        %v3642 = vmul.f32 %v3142, %v811
        %v3643 = vmul.f32 %v3148, %v812
        %v3644 = vmul.f32 %v3152, %v813
        %v3645 = vmul.f32 %v3158, %v814
        %v3646 = vmul.f32 %v3162, %v815
        %v3647 = vmul.f32 %v3168, %v816
        %v3648 = vmul.f32 %v3172, %v817
        %v3649 = vmul.f32 %v3178, %v818
        %v3650 = vmul.f32 %v3182, %v819
        %v3651 = vmul.f32 %v3188, %v820
        %v3652 = vmul.f32 %v3192, %v821
        %v3653 = vmul.f32 %v3198, %v822
        %v3654 = vmul.f32 %v3202, %v823
        %v3655 = vmul.f32 %v3208, %v824
        %v3656 = vmul.f32 %v3212, %v825
        %v3657 = vmul.f32 %v3218, %v826
        %v3658 = vmul.f32 %v3222, %v827
        %v3659 = vmul.f32 %v3228, %v828
        %v3660 = vmul.f32 %v3232, %v829
        %v3661 = vmul.f32 %v3238, %v830
        %v3662 = vmul.f32 %v3242, %v831
        %v3663 = vmul.f32 %v3248, %v832
        %v3664 = vmul.f32 %v3252, %v833
        %v3665 = vmul.f32 %v3258, %v834
        %v3666 = vmul.f32 %v3262, %v835
        %v3667 = vmul.f32 %v3268, %v836
        %v3668 = vmul.f32 %v3272, %v837
        %v3669 = vmul.f32 %v3278, %v838
        %v3670 = vmul.f32 %v3282, %v839
        %v3671 = vmul.f32 %v3288, %v840
        %v3672 = vmul.f32 %v3292, %v841
        %v3673 = vmul.f32 %v3298, %v842
        %v3674 = vmul.f32 %v3302, %v843
        %v3675 = vmul.f32 %v3308, %v844
        %v3676 = vmul.f32 %v3312, %v845
        %v3677 = vmul.f32 %v3318, %v846
        %v3678 = vmul.f32 %v3322, %v847
        %v3679 = vmul.f32 %v3010, %v784
        %v3680 = vmul.f32 %v3014, %v785
        %v3681 = vmul.f32 %v3020, %v786
        %v3682 = vmul.f32 %v3024, %v787
        %v3683 = vmul.f32 %v3030, %v788
        %v3684 = vmul.f32 %v3034, %v789
        %v3685 = vmul.f32 %v3040, %v790
        %v3686 = vmul.f32 %v3044, %v791
        %v3687 = vmul.f32 %v3050, %v792
        %v3688 = vmul.f32 %v3054, %v793
        %v3689 = vmul.f32 %v3060, %v794
        %v3690 = vmul.f32 %v3064, %v795
        %v3691 = vmul.f32 %v3070, %v796
        %v3692 = vmul.f32 %v3074, %v797
        %v3693 = vmul.f32 %v3080, %v798
        %v3694 = vmul.f32 %v3084, %v799
        %v3695 = vmul.f32 %v3090, %v800
        %v3696 = vmul.f32 %v3094, %v801
        %v3697 = vmul.f32 %v3100, %v802
        %v3698 = vmul.f32 %v3104, %v803
        %v3699 = vmul.f32 %v3110, %v804
        %v3700 = vmul.f32 %v3114, %v805
        %v3701 = vmul.f32 %v3120, %v806
        %v3702 = vmul.f32 %v3124, %v807
        %v3703 = vmul.f32 %v3130, %v808
        %v3704 = vmul.f32 %v3134, %v809
        %v3705 = vmul.f32 %v3140, %v810
        %v3706 = vmul.f32 %v3144, %v811
        %v3707 = vmul.f32 %v3150, %v812
        %v3708 = vmul.f32 %v3154, %v813
        %v3709 = vmul.f32 %v3160, %v814
        %v3710 = vmul.f32 %v3164, %v815
        %v3711 = vmul.f32 %v3170, %v816
        %v3712 = vmul.f32 %v3174, %v817
        %v3713 = vmul.f32 %v3180, %v818
        %v3714 = vmul.f32 %v3184, %v819
        %v3715 = vmul.f32 %v3190, %v820
        %v3716 = vmul.f32 %v3194, %v821
        %v3717 = vmul.f32 %v3200, %v822
        %v3718 = vmul.f32 %v3204, %v823
        %v3719 = vmul.f32 %v3210, %v824
        %v3720 = vmul.f32 %v3214, %v825
        %v3721 = vmul.f32 %v3220, %v826
        %v3722 = vmul.f32 %v3224, %v827
        %v3723 = vmul.f32 %v3230, %v828
        %v3724 = vmul.f32 %v3234, %v829
        %v3725 = vmul.f32 %v3240, %v830
        %v3726 = vmul.f32 %v3244, %v831
        %v3727 = vmul.f32 %v3250, %v832
        %v3728 = vmul.f32 %v3254, %v833
        %v3729 = vmul.f32 %v3260, %v834
        %v3730 = vmul.f32 %v3264, %v835
        %v3731 = vmul.f32 %v3270, %v836
        %v3732 = vmul.f32 %v3274, %v837
        %v3733 = vmul.f32 %v3280, %v838
        %v3734 = vmul.f32 %v3284, %v839
        %v3735 = vmul.f32 %v3290, %v840
        %v3736 = vmul.f32 %v3294, %v841
        %v3737 = vmul.f32 %v3300, %v842
        %v3738 = vmul.f32 %v3304, %v843
        %v3739 = vmul.f32 %v3310, %v844
        %v3740 = vmul.f32 %v3314, %v845
        %v3741 = vmul.f32 %v3320, %v846
        %v3742 = vmul.f32 %v3324, %v847
        %v3743 = vmul.f32 %v3361, %v784
        %v3744 = vmul.f32 %v3364, %v785
        %v3745 = vmul.f32 %v3369, %v786
        %v3746 = vmul.f32 %v3372, %v787
        %v3747 = vmul.f32 %v3377, %v788
        %v3748 = vmul.f32 %v3380, %v789
        %v3749 = vmul.f32 %v3385, %v790
        %v3750 = vmul.f32 %v3388, %v791
        %v3751 = vmul.f32 %v3393, %v792
        %v3752 = vmul.f32 %v3396, %v793
        %v3753 = vmul.f32 %v3401, %v794
        %v3754 = vmul.f32 %v3404, %v795
        %v3755 = vmul.f32 %v3409, %v796
        %v3756 = vmul.f32 %v3412, %v797
        %v3757 = vmul.f32 %v3417, %v798
        %v3758 = vmul.f32 %v3420, %v799
        %v3759 = vmul.f32 %v3425, %v800
        %v3760 = vmul.f32 %v3428, %v801
        %v3761 = vmul.f32 %v3433, %v802
        %v3762 = vmul.f32 %v3436, %v803
        %v3763 = vmul.f32 %v3441, %v804
        %v3764 = vmul.f32 %v3444, %v805
        %v3765 = vmul.f32 %v3449, %v806
        %v3766 = vmul.f32 %v3452, %v807
        %v3767 = vmul.f32 %v3457, %v808
        %v3768 = vmul.f32 %v3460, %v809
        %v3769 = vmul.f32 %v3465, %v810
        %v3770 = vmul.f32 %v3468, %v811
        %v3771 = vmul.f32 %v3473, %v812
        %v3772 = vmul.f32 %v3476, %v813
        %v3773 = vmul.f32 %v3481, %v814
        %v3774 = vmul.f32 %v3484, %v815
        %v3775 = vmul.f32 %v3489, %v816
        %v3776 = vmul.f32 %v3492, %v817
        %v3777 = vmul.f32 %v3497, %v818
        %v3778 = vmul.f32 %v3500, %v819
        %v3779 = vmul.f32 %v3505, %v820
        %v3780 = vmul.f32 %v3508, %v821
        %v3781 = vmul.f32 %v3513, %v822
        %v3782 = vmul.f32 %v3516, %v823
        %v3783 = vmul.f32 %v3521, %v824
        %v3784 = vmul.f32 %v3524, %v825
        %v3785 = vmul.f32 %v3529, %v826
        %v3786 = vmul.f32 %v3532, %v827
        %v3787 = vmul.f32 %v3537, %v828
        %v3788 = vmul.f32 %v3540, %v829
        %v3789 = vmul.f32 %v3545, %v830
        %v3790 = vmul.f32 %v3548, %v831
        %v3791 = vmul.f32 %v3553, %v832
        %v3792 = vmul.f32 %v3556, %v833
        %v3793 = vmul.f32 %v3561, %v834
        %v3794 = vmul.f32 %v3564, %v835
        %v3795 = vmul.f32 %v3569, %v836
        %v3796 = vmul.f32 %v3572, %v837
        %v3797 = vmul.f32 %v3577, %v838
        %v3798 = vmul.f32 %v3580, %v839
        %v3799 = vmul.f32 %v3585, %v840
        %v3800 = vmul.f32 %v3588, %v841
        %v3801 = vmul.f32 %v3593, %v842
        %v3802 = vmul.f32 %v3596, %v843
        %v3803 = vmul.f32 %v3601, %v844
        %v3804 = vmul.f32 %v3604, %v845
        %v3805 = vmul.f32 %v3609, %v846
        %v3806 = vmul.f32 %v3612, %v847
        %v3807 = vpack.c.bf16 %v3616, %v3615
        %v3808 = vpack.c.bf16 %v3618, %v3617
        %v3809 = vpack.c.bf16 %v3620, %v3619
        %v3810 = vpack.c.bf16 %v3622, %v3621
        %v3811 = vpack.c.bf16 %v3624, %v3623
        %v3812 = vpack.c.bf16 %v3626, %v3625
        %v3813 = vpack.c.bf16 %v3628, %v3627
        %v3814 = vpack.c.bf16 %v3630, %v3629
        %v3815 = vpack.c.bf16 %v3632, %v3631
        %v3816 = vpack.c.bf16 %v3634, %v3633
        %v3817 = vpack.c.bf16 %v3636, %v3635
        %v3818 = vpack.c.bf16 %v3638, %v3637
        %v3819 = vpack.c.bf16 %v3640, %v3639
        %v3820 = vpack.c.bf16 %v3642, %v3641
        %v3821 = vpack.c.bf16 %v3644, %v3643
        %v3822 = vpack.c.bf16 %v3646, %v3645
        %v3823 = vpack.c.bf16 %v3648, %v3647
        %v3824 = vpack.c.bf16 %v3650, %v3649
        %v3825 = vpack.c.bf16 %v3652, %v3651
        %v3826 = vpack.c.bf16 %v3654, %v3653
        %v3827 = vpack.c.bf16 %v3656, %v3655
        %v3828 = vpack.c.bf16 %v3658, %v3657
        %v3829 = vpack.c.bf16 %v3660, %v3659
        %v3830 = vpack.c.bf16 %v3662, %v3661
        %v3831 = vpack.c.bf16 %v3664, %v3663
        %v3832 = vpack.c.bf16 %v3666, %v3665
        %v3833 = vpack.c.bf16 %v3668, %v3667
        %v3834 = vpack.c.bf16 %v3670, %v3669
        %v3835 = vpack.c.bf16 %v3672, %v3671
        %v3836 = vpack.c.bf16 %v3674, %v3673
        %v3837 = vpack.c.bf16 %v3676, %v3675
        %v3838 = vpack.c.bf16 %v3678, %v3677
        %v3871 = vunpack.c.l.b16 %v3807
        %v3872 = vunpack.c.h.b16 %v3807
        %v3873 = vunpack.c.l.b16 %v3808
        %v3874 = vunpack.c.h.b16 %v3808
        %v3875 = vunpack.c.l.b16 %v3809
        %v3876 = vunpack.c.h.b16 %v3809
        %v3877 = vunpack.c.l.b16 %v3810
        %v3878 = vunpack.c.h.b16 %v3810
        %v3879 = vunpack.c.l.b16 %v3811
        %v3880 = vunpack.c.h.b16 %v3811
        %v3881 = vunpack.c.l.b16 %v3812
        %v3882 = vunpack.c.h.b16 %v3812
        %v3883 = vunpack.c.l.b16 %v3813
        %v3884 = vunpack.c.h.b16 %v3813
        %v3885 = vunpack.c.l.b16 %v3814
        %v3886 = vunpack.c.h.b16 %v3814
        %v3887 = vunpack.c.l.b16 %v3815
        %v3888 = vunpack.c.h.b16 %v3815
        %v3889 = vunpack.c.l.b16 %v3816
        %v3890 = vunpack.c.h.b16 %v3816
        %v3891 = vunpack.c.l.b16 %v3817
        %v3892 = vunpack.c.h.b16 %v3817
        %v3893 = vunpack.c.l.b16 %v3818
        %v3894 = vunpack.c.h.b16 %v3818
        %v3895 = vunpack.c.l.b16 %v3819
        %v3896 = vunpack.c.h.b16 %v3819
        %v3897 = vunpack.c.l.b16 %v3820
        %v3898 = vunpack.c.h.b16 %v3820
        %v3899 = vunpack.c.l.b16 %v3821
        %v3900 = vunpack.c.h.b16 %v3821
        %v3901 = vunpack.c.l.b16 %v3822
        %v3902 = vunpack.c.h.b16 %v3822
        %v3903 = vunpack.c.l.b16 %v3823
        %v3904 = vunpack.c.h.b16 %v3823
        %v3905 = vunpack.c.l.b16 %v3824
        %v3906 = vunpack.c.h.b16 %v3824
        %v3907 = vunpack.c.l.b16 %v3825
        %v3908 = vunpack.c.h.b16 %v3825
        %v3909 = vunpack.c.l.b16 %v3826
        %v3910 = vunpack.c.h.b16 %v3826
        %v3911 = vunpack.c.l.b16 %v3827
        %v3912 = vunpack.c.h.b16 %v3827
        %v3913 = vunpack.c.l.b16 %v3828
        %v3914 = vunpack.c.h.b16 %v3828
        %v3915 = vunpack.c.l.b16 %v3829
        %v3916 = vunpack.c.h.b16 %v3829
        %v3917 = vunpack.c.l.b16 %v3830
        %v3918 = vunpack.c.h.b16 %v3830
        %v3919 = vunpack.c.l.b16 %v3831
        %v3920 = vunpack.c.h.b16 %v3831
        %v3921 = vunpack.c.l.b16 %v3832
        %v3922 = vunpack.c.h.b16 %v3832
        %v3923 = vunpack.c.l.b16 %v3833
        %v3924 = vunpack.c.h.b16 %v3833
        %v3925 = vunpack.c.l.b16 %v3834
        %v3926 = vunpack.c.h.b16 %v3834
        %v3927 = vunpack.c.l.b16 %v3835
        %v3928 = vunpack.c.h.b16 %v3835
        %v3929 = vunpack.c.l.b16 %v3836
        %v3930 = vunpack.c.h.b16 %v3836
        %v3931 = vunpack.c.l.b16 %v3837
        %v3932 = vunpack.c.h.b16 %v3837
        %v3933 = vunpack.c.l.b16 %v3838
        %v3934 = vunpack.c.h.b16 %v3838
        %v3935 = vpack.c.b16 %v3871, %v3871
        %v3936 = vpack.c.b16 %v3872, %v3872
        %v3937 = vpack.c.b16 %v3873, %v3873
        %v3938 = vpack.c.b16 %v3874, %v3874
        %v3939 = vpack.c.b16 %v3875, %v3875
        %v3940 = vpack.c.b16 %v3876, %v3876
        %v3941 = vpack.c.b16 %v3877, %v3877
        %v3942 = vpack.c.b16 %v3878, %v3878
        %v3943 = vpack.c.b16 %v3879, %v3879
        %v3944 = vpack.c.b16 %v3880, %v3880
        %v3945 = vpack.c.b16 %v3881, %v3881
        %v3946 = vpack.c.b16 %v3882, %v3882
        %v3947 = vpack.c.b16 %v3883, %v3883
        %v3948 = vpack.c.b16 %v3884, %v3884
        %v3949 = vpack.c.b16 %v3885, %v3885
        %v3950 = vpack.c.b16 %v3886, %v3886
        %v3951 = vpack.c.b16 %v3887, %v3887
        %v3952 = vpack.c.b16 %v3888, %v3888
        %v3953 = vpack.c.b16 %v3889, %v3889
        %v3954 = vpack.c.b16 %v3890, %v3890
        %v3955 = vpack.c.b16 %v3891, %v3891
        %v3956 = vpack.c.b16 %v3892, %v3892
        %v3957 = vpack.c.b16 %v3893, %v3893
        %v3958 = vpack.c.b16 %v3894, %v3894
        %v3959 = vpack.c.b16 %v3895, %v3895
        %v3960 = vpack.c.b16 %v3896, %v3896
        %v3961 = vpack.c.b16 %v3897, %v3897
        %v3962 = vpack.c.b16 %v3898, %v3898
        %v3963 = vpack.c.b16 %v3899, %v3899
        %v3964 = vpack.c.b16 %v3900, %v3900
        %v3965 = vpack.c.b16 %v3901, %v3901
        %v3966 = vpack.c.b16 %v3902, %v3902
        %v3967 = vpack.c.b16 %v3903, %v3903
        %v3968 = vpack.c.b16 %v3904, %v3904
        %v3969 = vpack.c.b16 %v3905, %v3905
        %v3970 = vpack.c.b16 %v3906, %v3906
        %v3971 = vpack.c.b16 %v3907, %v3907
        %v3972 = vpack.c.b16 %v3908, %v3908
        %v3973 = vpack.c.b16 %v3909, %v3909
        %v3974 = vpack.c.b16 %v3910, %v3910
        %v3975 = vpack.c.b16 %v3911, %v3911
        %v3976 = vpack.c.b16 %v3912, %v3912
        %v3977 = vpack.c.b16 %v3913, %v3913
        %v3978 = vpack.c.b16 %v3914, %v3914
        %v3979 = vpack.c.b16 %v3915, %v3915
        %v3980 = vpack.c.b16 %v3916, %v3916
        %v3981 = vpack.c.b16 %v3917, %v3917
        %v3982 = vpack.c.b16 %v3918, %v3918
        %v3983 = vpack.c.b16 %v3919, %v3919
        %v3984 = vpack.c.b16 %v3920, %v3920
        %v3985 = vpack.c.b16 %v3921, %v3921
        %v3986 = vpack.c.b16 %v3922, %v3922
        %v3987 = vpack.c.b16 %v3923, %v3923
        %v3988 = vpack.c.b16 %v3924, %v3924
        %v3989 = vpack.c.b16 %v3925, %v3925
        %v3990 = vpack.c.b16 %v3926, %v3926
        %v3991 = vpack.c.b16 %v3927, %v3927
        %v3992 = vpack.c.b16 %v3928, %v3928
        %v3993 = vpack.c.b16 %v3929, %v3929
        %v3994 = vpack.c.b16 %v3930, %v3930
        %v3995 = vpack.c.b16 %v3931, %v3931
        %v3996 = vpack.c.b16 %v3932, %v3932
        %v3997 = vpack.c.b16 %v3933, %v3933
        %v3998 = vpack.c.b16 %v3934, %v3934
        %4063 = vst [vmem:[%s487] sm:$0xf] %v3935
        %4064 = vst [vmem:[%s487 + $0x4] sm:$0xf] %v3936
        %4065 = vst [vmem:[%s487 + $0x8] sm:$0xf] %v3937
        %4066 = vst [vmem:[%s487 + $0xc] sm:$0xf] %v3938
        %4067 = vst [vmem:[%s487 + $0x10] sm:$0xf] %v3939
        %4068 = vst [vmem:[%s487 + $0x14] sm:$0xf] %v3940
        %4069 = vst [vmem:[%s487 + $0x18] sm:$0xf] %v3941
        %4070 = vst [vmem:[%s487 + $0x1c] sm:$0xf] %v3942
        %4071 = vst [vmem:[%s487 + $0x20] sm:$0xf] %v3943
        %4072 = vst [vmem:[%s487 + $0x24] sm:$0xf] %v3944
        %4073 = vst [vmem:[%s487 + $0x28] sm:$0xf] %v3945
        %4074 = vst [vmem:[%s487 + $0x2c] sm:$0xf] %v3946
        %4075 = vst [vmem:[%s487 + $0x30] sm:$0xf] %v3947
        %4076 = vst [vmem:[%s487 + $0x34] sm:$0xf] %v3948
        %4077 = vst [vmem:[%s487 + $0x38] sm:$0xf] %v3949
        %4078 = vst [vmem:[%s487 + $0x3c] sm:$0xf] %v3950
        %4079 = vst [vmem:[%s487 + $0x40] sm:$0xf] %v3951
        %4080 = vst [vmem:[%s487 + $0x44] sm:$0xf] %v3952
        %4081 = vst [vmem:[%s487 + $0x48] sm:$0xf] %v3953
        %4082 = vst [vmem:[%s487 + $0x4c] sm:$0xf] %v3954
        %4083 = vst [vmem:[%s487 + $0x50] sm:$0xf] %v3955
        %4084 = vst [vmem:[%s487 + $0x54] sm:$0xf] %v3956
        %4085 = vst [vmem:[%s487 + $0x58] sm:$0xf] %v3957
        %4086 = vst [vmem:[%s487 + $0x5c] sm:$0xf] %v3958
        %4087 = vst [vmem:[%s487 + $0x60] sm:$0xf] %v3959
        %4088 = vst [vmem:[%s487 + $0x64] sm:$0xf] %v3960
        %4089 = vst [vmem:[%s487 + $0x68] sm:$0xf] %v3961
        %4090 = vst [vmem:[%s487 + $0x6c] sm:$0xf] %v3962
        %4091 = vst [vmem:[%s487 + $0x70] sm:$0xf] %v3963
        %4092 = vst [vmem:[%s487 + $0x74] sm:$0xf] %v3964
        %4093 = vst [vmem:[%s487 + $0x78] sm:$0xf] %v3965
        %4094 = vst [vmem:[%s487 + $0x7c] sm:$0xf] %v3966
        %4095 = vst [vmem:[%s487 + $0x80] sm:$0xf] %v3967
        %4096 = vst [vmem:[%s487 + $0x84] sm:$0xf] %v3968
        %4097 = vst [vmem:[%s487 + $0x88] sm:$0xf] %v3969
        %4098 = vst [vmem:[%s487 + $0x8c] sm:$0xf] %v3970
        %4099 = vst [vmem:[%s487 + $0x90] sm:$0xf] %v3971
        %4100 = vst [vmem:[%s487 + $0x94] sm:$0xf] %v3972
        %4101 = vst [vmem:[%s487 + $0x98] sm:$0xf] %v3973
        %4102 = vst [vmem:[%s487 + $0x9c] sm:$0xf] %v3974
        %4103 = vst [vmem:[%s487 + $0xa0] sm:$0xf] %v3975
        %4104 = vst [vmem:[%s487 + $0xa4] sm:$0xf] %v3976
        %4105 = vst [vmem:[%s487 + $0xa8] sm:$0xf] %v3977
        %4106 = vst [vmem:[%s487 + $0xac] sm:$0xf] %v3978
        %4107 = vst [vmem:[%s487 + $0xb0] sm:$0xf] %v3979
        %4108 = vst [vmem:[%s487 + $0xb4] sm:$0xf] %v3980
        %4109 = vst [vmem:[%s487 + $0xb8] sm:$0xf] %v3981
        %4110 = vst [vmem:[%s487 + $0xbc] sm:$0xf] %v3982
        %4111 = vst [vmem:[%s487 + $0xc0] sm:$0xf] %v3983
        %4112 = vst [vmem:[%s487 + $0xc4] sm:$0xf] %v3984
        %4113 = vst [vmem:[%s487 + $0xc8] sm:$0xf] %v3985
        %4114 = vst [vmem:[%s487 + $0xcc] sm:$0xf] %v3986
        %4115 = vst [vmem:[%s487 + $0xd0] sm:$0xf] %v3987
        %4116 = vst [vmem:[%s487 + $0xd4] sm:$0xf] %v3988
        %4117 = vst [vmem:[%s487 + $0xd8] sm:$0xf] %v3989
        %4118 = vst [vmem:[%s487 + $0xdc] sm:$0xf] %v3990
        %4119 = vst [vmem:[%s487 + $0xe0] sm:$0xf] %v3991
        %4120 = vst [vmem:[%s487 + $0xe4] sm:$0xf] %v3992
        %4121 = vst [vmem:[%s487 + $0xe8] sm:$0xf] %v3993
        %4122 = vst [vmem:[%s487 + $0xec] sm:$0xf] %v3994
        %4123 = vst [vmem:[%s487 + $0xf0] sm:$0xf] %v3995
        %4124 = vst [vmem:[%s487 + $0xf4] sm:$0xf] %v3996
        %4125 = vst [vmem:[%s487 + $0xf8] sm:$0xf] %v3997
        %4126 = vst [vmem:[%s487 + $0xfc] sm:$0xf] %v3998
        %v4127 = vpack.c.bf16 %v3744, %v3743
        %v4128 = vpack.c.bf16 %v3746, %v3745
        %v4129 = vpack.c.bf16 %v3748, %v3747
        %v4130 = vpack.c.bf16 %v3750, %v3749
        %v4131 = vpack.c.bf16 %v3752, %v3751
        %v4132 = vpack.c.bf16 %v3754, %v3753
        %v4133 = vpack.c.bf16 %v3756, %v3755
        %v4134 = vpack.c.bf16 %v3758, %v3757
        %v4135 = vpack.c.bf16 %v3760, %v3759
        %v4136 = vpack.c.bf16 %v3762, %v3761
        %v4137 = vpack.c.bf16 %v3764, %v3763
        %v4138 = vpack.c.bf16 %v3766, %v3765
        %v4139 = vpack.c.bf16 %v3768, %v3767
        %v4140 = vpack.c.bf16 %v3770, %v3769
        %v4141 = vpack.c.bf16 %v3772, %v3771
        %v4142 = vpack.c.bf16 %v3774, %v3773
        %v4143 = vpack.c.bf16 %v3776, %v3775
        %v4144 = vpack.c.bf16 %v3778, %v3777
        %v4145 = vpack.c.bf16 %v3780, %v3779
        %v4146 = vpack.c.bf16 %v3782, %v3781
        %v4147 = vpack.c.bf16 %v3784, %v3783
        %v4148 = vpack.c.bf16 %v3786, %v3785
        %v4149 = vpack.c.bf16 %v3788, %v3787
        %v4150 = vpack.c.bf16 %v3790, %v3789
        %v4151 = vpack.c.bf16 %v3792, %v3791
        %v4152 = vpack.c.bf16 %v3794, %v3793
        %v4153 = vpack.c.bf16 %v3796, %v3795
        %v4154 = vpack.c.bf16 %v3798, %v3797
        %v4155 = vpack.c.bf16 %v3800, %v3799
        %v4156 = vpack.c.bf16 %v3802, %v3801
        %v4157 = vpack.c.bf16 %v3804, %v3803
        %v4158 = vpack.c.bf16 %v3806, %v3805
        %v4191 = vunpack.c.l.b16 %v4127
        %v4192 = vunpack.c.h.b16 %v4127
        %v4193 = vunpack.c.l.b16 %v4128
        %v4194 = vunpack.c.h.b16 %v4128
        %v4195 = vunpack.c.l.b16 %v4129
        %v4196 = vunpack.c.h.b16 %v4129
        %v4197 = vunpack.c.l.b16 %v4130
        %v4198 = vunpack.c.h.b16 %v4130
        %v4199 = vunpack.c.l.b16 %v4131
        %v4200 = vunpack.c.h.b16 %v4131
        %v4201 = vunpack.c.l.b16 %v4132
        %v4202 = vunpack.c.h.b16 %v4132
        %v4203 = vunpack.c.l.b16 %v4133
        %v4204 = vunpack.c.h.b16 %v4133
        %v4205 = vunpack.c.l.b16 %v4134
        %v4206 = vunpack.c.h.b16 %v4134
        %v4207 = vunpack.c.l.b16 %v4135
        %v4208 = vunpack.c.h.b16 %v4135
        %v4209 = vunpack.c.l.b16 %v4136
        %v4210 = vunpack.c.h.b16 %v4136
        %v4211 = vunpack.c.l.b16 %v4137
        %v4212 = vunpack.c.h.b16 %v4137
        %v4213 = vunpack.c.l.b16 %v4138
        %v4214 = vunpack.c.h.b16 %v4138
        %v4215 = vunpack.c.l.b16 %v4139
        %v4216 = vunpack.c.h.b16 %v4139
        %v4217 = vunpack.c.l.b16 %v4140
        %v4218 = vunpack.c.h.b16 %v4140
        %v4219 = vunpack.c.l.b16 %v4141
        %v4220 = vunpack.c.h.b16 %v4141
        %v4221 = vunpack.c.l.b16 %v4142
        %v4222 = vunpack.c.h.b16 %v4142
        %v4223 = vunpack.c.l.b16 %v4143
        %v4224 = vunpack.c.h.b16 %v4143
        %v4225 = vunpack.c.l.b16 %v4144
        %v4226 = vunpack.c.h.b16 %v4144
        %v4227 = vunpack.c.l.b16 %v4145
        %v4228 = vunpack.c.h.b16 %v4145
        %v4229 = vunpack.c.l.b16 %v4146
        %v4230 = vunpack.c.h.b16 %v4146
        %v4231 = vunpack.c.l.b16 %v4147
        %v4232 = vunpack.c.h.b16 %v4147
        %v4233 = vunpack.c.l.b16 %v4148
        %v4234 = vunpack.c.h.b16 %v4148
        %v4235 = vunpack.c.l.b16 %v4149
        %v4236 = vunpack.c.h.b16 %v4149
        %v4237 = vunpack.c.l.b16 %v4150
        %v4238 = vunpack.c.h.b16 %v4150
        %v4239 = vunpack.c.l.b16 %v4151
        %v4240 = vunpack.c.h.b16 %v4151
        %v4241 = vunpack.c.l.b16 %v4152
        %v4242 = vunpack.c.h.b16 %v4152
        %v4243 = vunpack.c.l.b16 %v4153
        %v4244 = vunpack.c.h.b16 %v4153
        %v4245 = vunpack.c.l.b16 %v4154
        %v4246 = vunpack.c.h.b16 %v4154
        %v4247 = vunpack.c.l.b16 %v4155
        %v4248 = vunpack.c.h.b16 %v4155
        %v4249 = vunpack.c.l.b16 %v4156
        %v4250 = vunpack.c.h.b16 %v4156
        %v4251 = vunpack.c.l.b16 %v4157
        %v4252 = vunpack.c.h.b16 %v4157
        %v4253 = vunpack.c.l.b16 %v4158
        %v4254 = vunpack.c.h.b16 %v4158
        %v4255 = vpack.c.b16 %v4191, %v4191
        %v4256 = vpack.c.b16 %v4192, %v4192
        %v4257 = vpack.c.b16 %v4193, %v4193
        %v4258 = vpack.c.b16 %v4194, %v4194
        %v4259 = vpack.c.b16 %v4195, %v4195
        %v4260 = vpack.c.b16 %v4196, %v4196
        %v4261 = vpack.c.b16 %v4197, %v4197
        %v4262 = vpack.c.b16 %v4198, %v4198
        %v4263 = vpack.c.b16 %v4199, %v4199
        %v4264 = vpack.c.b16 %v4200, %v4200
        %v4265 = vpack.c.b16 %v4201, %v4201
        %v4266 = vpack.c.b16 %v4202, %v4202
        %v4267 = vpack.c.b16 %v4203, %v4203
        %v4268 = vpack.c.b16 %v4204, %v4204
        %v4269 = vpack.c.b16 %v4205, %v4205
        %v4270 = vpack.c.b16 %v4206, %v4206
        %v4271 = vpack.c.b16 %v4207, %v4207
        %v4272 = vpack.c.b16 %v4208, %v4208
        %v4273 = vpack.c.b16 %v4209, %v4209
        %v4274 = vpack.c.b16 %v4210, %v4210
        %v4275 = vpack.c.b16 %v4211, %v4211
        %v4276 = vpack.c.b16 %v4212, %v4212
        %v4277 = vpack.c.b16 %v4213, %v4213
        %v4278 = vpack.c.b16 %v4214, %v4214
        %v4279 = vpack.c.b16 %v4215, %v4215
        %v4280 = vpack.c.b16 %v4216, %v4216
        %v4281 = vpack.c.b16 %v4217, %v4217
        %v4282 = vpack.c.b16 %v4218, %v4218
        %v4283 = vpack.c.b16 %v4219, %v4219
        %v4284 = vpack.c.b16 %v4220, %v4220
        %v4285 = vpack.c.b16 %v4221, %v4221
        %v4286 = vpack.c.b16 %v4222, %v4222
        %v4287 = vpack.c.b16 %v4223, %v4223
        %v4288 = vpack.c.b16 %v4224, %v4224
        %v4289 = vpack.c.b16 %v4225, %v4225
        %v4290 = vpack.c.b16 %v4226, %v4226
        %v4291 = vpack.c.b16 %v4227, %v4227
        %v4292 = vpack.c.b16 %v4228, %v4228
        %v4293 = vpack.c.b16 %v4229, %v4229
        %v4294 = vpack.c.b16 %v4230, %v4230
        %v4295 = vpack.c.b16 %v4231, %v4231
        %v4296 = vpack.c.b16 %v4232, %v4232
        %v4297 = vpack.c.b16 %v4233, %v4233
        %v4298 = vpack.c.b16 %v4234, %v4234
        %v4299 = vpack.c.b16 %v4235, %v4235
        %v4300 = vpack.c.b16 %v4236, %v4236
        %v4301 = vpack.c.b16 %v4237, %v4237
        %v4302 = vpack.c.b16 %v4238, %v4238
        %v4303 = vpack.c.b16 %v4239, %v4239
        %v4304 = vpack.c.b16 %v4240, %v4240
        %v4305 = vpack.c.b16 %v4241, %v4241
        %v4306 = vpack.c.b16 %v4242, %v4242
        %v4307 = vpack.c.b16 %v4243, %v4243
        %v4308 = vpack.c.b16 %v4244, %v4244
        %v4309 = vpack.c.b16 %v4245, %v4245
        %v4310 = vpack.c.b16 %v4246, %v4246
        %v4311 = vpack.c.b16 %v4247, %v4247
        %v4312 = vpack.c.b16 %v4248, %v4248
        %v4313 = vpack.c.b16 %v4249, %v4249
        %v4314 = vpack.c.b16 %v4250, %v4250
        %v4315 = vpack.c.b16 %v4251, %v4251
        %v4316 = vpack.c.b16 %v4252, %v4252
        %v4317 = vpack.c.b16 %v4253, %v4253
        %v4318 = vpack.c.b16 %v4254, %v4254
        %4383 = vst [vmem:[%s494] sm:$0xf] %v4255
        %4384 = vst [vmem:[%s494 + $0x4] sm:$0xf] %v4256
        %4385 = vst [vmem:[%s494 + $0x8] sm:$0xf] %v4257
        %4386 = vst [vmem:[%s494 + $0xc] sm:$0xf] %v4258
        %4387 = vst [vmem:[%s494 + $0x10] sm:$0xf] %v4259
        %4388 = vst [vmem:[%s494 + $0x14] sm:$0xf] %v4260
        %4389 = vst [vmem:[%s494 + $0x18] sm:$0xf] %v4261
        %4390 = vst [vmem:[%s494 + $0x1c] sm:$0xf] %v4262
        %4391 = vst [vmem:[%s494 + $0x20] sm:$0xf] %v4263
        %4392 = vst [vmem:[%s494 + $0x24] sm:$0xf] %v4264
        %4393 = vst [vmem:[%s494 + $0x28] sm:$0xf] %v4265
        %4394 = vst [vmem:[%s494 + $0x2c] sm:$0xf] %v4266
        %4395 = vst [vmem:[%s494 + $0x30] sm:$0xf] %v4267
        %4396 = vst [vmem:[%s494 + $0x34] sm:$0xf] %v4268
        %4397 = vst [vmem:[%s494 + $0x38] sm:$0xf] %v4269
        %4398 = vst [vmem:[%s494 + $0x3c] sm:$0xf] %v4270
        %4399 = vst [vmem:[%s494 + $0x40] sm:$0xf] %v4271
        %4400 = vst [vmem:[%s494 + $0x44] sm:$0xf] %v4272
        %4401 = vst [vmem:[%s494 + $0x48] sm:$0xf] %v4273
        %4402 = vst [vmem:[%s494 + $0x4c] sm:$0xf] %v4274
        %4403 = vst [vmem:[%s494 + $0x50] sm:$0xf] %v4275
        %4404 = vst [vmem:[%s494 + $0x54] sm:$0xf] %v4276
        %4405 = vst [vmem:[%s494 + $0x58] sm:$0xf] %v4277
        %4406 = vst [vmem:[%s494 + $0x5c] sm:$0xf] %v4278
        %4407 = vst [vmem:[%s494 + $0x60] sm:$0xf] %v4279
        %4408 = vst [vmem:[%s494 + $0x64] sm:$0xf] %v4280
        %4409 = vst [vmem:[%s494 + $0x68] sm:$0xf] %v4281
        %4410 = vst [vmem:[%s494 + $0x6c] sm:$0xf] %v4282
        %4411 = vst [vmem:[%s494 + $0x70] sm:$0xf] %v4283
        %4412 = vst [vmem:[%s494 + $0x74] sm:$0xf] %v4284
        %4413 = vst [vmem:[%s494 + $0x78] sm:$0xf] %v4285
        %4414 = vst [vmem:[%s494 + $0x7c] sm:$0xf] %v4286
        %4415 = vst [vmem:[%s494 + $0x80] sm:$0xf] %v4287
        %4416 = vst [vmem:[%s494 + $0x84] sm:$0xf] %v4288
        %4417 = vst [vmem:[%s494 + $0x88] sm:$0xf] %v4289
        %4418 = vst [vmem:[%s494 + $0x8c] sm:$0xf] %v4290
        %4419 = vst [vmem:[%s494 + $0x90] sm:$0xf] %v4291
        %4420 = vst [vmem:[%s494 + $0x94] sm:$0xf] %v4292
        %4421 = vst [vmem:[%s494 + $0x98] sm:$0xf] %v4293
        %4422 = vst [vmem:[%s494 + $0x9c] sm:$0xf] %v4294
        %4423 = vst [vmem:[%s494 + $0xa0] sm:$0xf] %v4295
        %4424 = vst [vmem:[%s494 + $0xa4] sm:$0xf] %v4296
        %4425 = vst [vmem:[%s494 + $0xa8] sm:$0xf] %v4297
        %4426 = vst [vmem:[%s494 + $0xac] sm:$0xf] %v4298
        %4427 = vst [vmem:[%s494 + $0xb0] sm:$0xf] %v4299
        %4428 = vst [vmem:[%s494 + $0xb4] sm:$0xf] %v4300
        %4429 = vst [vmem:[%s494 + $0xb8] sm:$0xf] %v4301
        %4430 = vst [vmem:[%s494 + $0xbc] sm:$0xf] %v4302
        %4431 = vst [vmem:[%s494 + $0xc0] sm:$0xf] %v4303
        %4432 = vst [vmem:[%s494 + $0xc4] sm:$0xf] %v4304
        %4433 = vst [vmem:[%s494 + $0xc8] sm:$0xf] %v4305
        %4434 = vst [vmem:[%s494 + $0xcc] sm:$0xf] %v4306
        %4435 = vst [vmem:[%s494 + $0xd0] sm:$0xf] %v4307
        %4436 = vst [vmem:[%s494 + $0xd4] sm:$0xf] %v4308
        %4437 = vst [vmem:[%s494 + $0xd8] sm:$0xf] %v4309
        %4438 = vst [vmem:[%s494 + $0xdc] sm:$0xf] %v4310
        %4439 = vst [vmem:[%s494 + $0xe0] sm:$0xf] %v4311
        %4440 = vst [vmem:[%s494 + $0xe4] sm:$0xf] %v4312
        %4441 = vst [vmem:[%s494 + $0xe8] sm:$0xf] %v4313
        %4442 = vst [vmem:[%s494 + $0xec] sm:$0xf] %v4314
        %4443 = vst [vmem:[%s494 + $0xf0] sm:$0xf] %v4315
        %4444 = vst [vmem:[%s494 + $0xf4] sm:$0xf] %v4316
        %4445 = vst [vmem:[%s494 + $0xf8] sm:$0xf] %v4317
        %4446 = vst [vmem:[%s494 + $0xfc] sm:$0xf] %v4318
        %v4447 = vmax.f32 %v1249, 0.0
        %v4448 = vmax.f32 %v1253, 0.0
        %v4449 = vmax.f32 %v1259, 0.0
        %v4450 = vmax.f32 %v1263, 0.0
        %v4451 = vmax.f32 %v1269, 0.0
        %v4452 = vmax.f32 %v1273, 0.0
        %v4453 = vmax.f32 %v1279, 0.0
        %v4454 = vmax.f32 %v1283, 0.0
        %v4455 = vmax.f32 %v1289, 0.0
        %v4456 = vmax.f32 %v1293, 0.0
        %v4457 = vmax.f32 %v1299, 0.0
        %v4458 = vmax.f32 %v1303, 0.0
        %v4459 = vmax.f32 %v1309, 0.0
        %v4460 = vmax.f32 %v1313, 0.0
        %v4461 = vmax.f32 %v1319, 0.0
        %v4462 = vmax.f32 %v1323, 0.0
        %v4463 = vmax.f32 %v1329, 0.0
        %v4464 = vmax.f32 %v1333, 0.0
        %v4465 = vmax.f32 %v1339, 0.0
        %v4466 = vmax.f32 %v1343, 0.0
        %v4467 = vmax.f32 %v1349, 0.0
        %v4468 = vmax.f32 %v1353, 0.0
        %v4469 = vmax.f32 %v1359, 0.0
        %v4470 = vmax.f32 %v1363, 0.0
        %v4471 = vmax.f32 %v1369, 0.0
        %v4472 = vmax.f32 %v1373, 0.0
        %v4473 = vmax.f32 %v1379, 0.0
        %v4474 = vmax.f32 %v1383, 0.0
        %v4475 = vmax.f32 %v1389, 0.0
        %v4476 = vmax.f32 %v1393, 0.0
        %v4477 = vmax.f32 %v1399, 0.0
        %v4478 = vmax.f32 %v1403, 0.0
        %v4479 = vmax.f32 %v1409, 0.0
        %v4480 = vmax.f32 %v1413, 0.0
        %v4481 = vmax.f32 %v1419, 0.0
        %v4482 = vmax.f32 %v1423, 0.0
        %v4483 = vmax.f32 %v1429, 0.0
        %v4484 = vmax.f32 %v1433, 0.0
        %v4485 = vmax.f32 %v1439, 0.0
        %v4486 = vmax.f32 %v1443, 0.0
        %v4487 = vmax.f32 %v1449, 0.0
        %v4488 = vmax.f32 %v1453, 0.0
        %v4489 = vmax.f32 %v1459, 0.0
        %v4490 = vmax.f32 %v1463, 0.0
        %v4491 = vmax.f32 %v1469, 0.0
        %v4492 = vmax.f32 %v1473, 0.0
        %v4493 = vmax.f32 %v1479, 0.0
        %v4494 = vmax.f32 %v1483, 0.0
        %v4495 = vmax.f32 %v1489, 0.0
        %v4496 = vmax.f32 %v1493, 0.0
        %v4497 = vmax.f32 %v1499, 0.0
        %v4498 = vmax.f32 %v1503, 0.0
        %v4499 = vmax.f32 %v1509, 0.0
        %v4500 = vmax.f32 %v1513, 0.0
        %v4501 = vmax.f32 %v1519, 0.0
        %v4502 = vmax.f32 %v1523, 0.0
        %v4503 = vmax.f32 %v1529, 0.0
        %v4504 = vmax.f32 %v1533, 0.0
        %v4505 = vmax.f32 %v1539, 0.0
        %v4506 = vmax.f32 %v1543, 0.0
        %v4507 = vmax.f32 %v1549, 0.0
        %v4508 = vmax.f32 %v1553, 0.0
        %v4509 = vmax.f32 %v1559, 0.0
        %v4510 = vmax.f32 %v1563, 0.0
        %v4511 = vmul.f32 %v4447, %v784
        %v4512 = vmul.f32 %v4448, %v785
        %v4513 = vmul.f32 %v4449, %v786
        %v4514 = vmul.f32 %v4450, %v787
        %v4515 = vmul.f32 %v4451, %v788
        %v4516 = vmul.f32 %v4452, %v789
        %v4517 = vmul.f32 %v4453, %v790
        %v4518 = vmul.f32 %v4454, %v791
        %v4519 = vmul.f32 %v4455, %v792
        %v4520 = vmul.f32 %v4456, %v793
        %v4521 = vmul.f32 %v4457, %v794
        %v4522 = vmul.f32 %v4458, %v795
        %v4523 = vmul.f32 %v4459, %v796
        %v4524 = vmul.f32 %v4460, %v797
        %v4525 = vmul.f32 %v4461, %v798
        %v4526 = vmul.f32 %v4462, %v799
        %v4527 = vmul.f32 %v4463, %v800
        %v4528 = vmul.f32 %v4464, %v801
        %v4529 = vmul.f32 %v4465, %v802
        %v4530 = vmul.f32 %v4466, %v803
        %v4531 = vmul.f32 %v4467, %v804
        %v4532 = vmul.f32 %v4468, %v805
        %v4533 = vmul.f32 %v4469, %v806
        %v4534 = vmul.f32 %v4470, %v807
        %v4535 = vmul.f32 %v4471, %v808
        %v4536 = vmul.f32 %v4472, %v809
        %v4537 = vmul.f32 %v4473, %v810
        %v4538 = vmul.f32 %v4474, %v811
        %v4539 = vmul.f32 %v4475, %v812
        %v4540 = vmul.f32 %v4476, %v813
        %v4541 = vmul.f32 %v4477, %v814
        %v4542 = vmul.f32 %v4478, %v815
        %v4543 = vmul.f32 %v4479, %v816
        %v4544 = vmul.f32 %v4480, %v817
        %v4545 = vmul.f32 %v4481, %v818
        %v4546 = vmul.f32 %v4482, %v819
        %v4547 = vmul.f32 %v4483, %v820
        %v4548 = vmul.f32 %v4484, %v821
        %v4549 = vmul.f32 %v4485, %v822
        %v4550 = vmul.f32 %v4486, %v823
        %v4551 = vmul.f32 %v4487, %v824
        %v4552 = vmul.f32 %v4488, %v825
        %v4553 = vmul.f32 %v4489, %v826
        %v4554 = vmul.f32 %v4490, %v827
        %v4555 = vmul.f32 %v4491, %v828
        %v4556 = vmul.f32 %v4492, %v829
        %v4557 = vmul.f32 %v4493, %v830
        %v4558 = vmul.f32 %v4494, %v831
        %v4559 = vmul.f32 %v4495, %v832
        %v4560 = vmul.f32 %v4496, %v833
        %v4561 = vmul.f32 %v4497, %v834
        %v4562 = vmul.f32 %v4498, %v835
        %v4563 = vmul.f32 %v4499, %v836
        %v4564 = vmul.f32 %v4500, %v837
        %v4565 = vmul.f32 %v4501, %v838
        %v4566 = vmul.f32 %v4502, %v839
        %v4567 = vmul.f32 %v4503, %v840
        %v4568 = vmul.f32 %v4504, %v841
        %v4569 = vmul.f32 %v4505, %v842
        %v4570 = vmul.f32 %v4506, %v843
        %v4571 = vmul.f32 %v4507, %v844
        %v4572 = vmul.f32 %v4508, %v845
        %v4573 = vmul.f32 %v4509, %v846
        %v4574 = vmul.f32 %v4510, %v847
        %v4575 = vpack.c.bf16 %v4512, %v4511
        %v4576 = vpack.c.bf16 %v4514, %v4513
        %v4577 = vpack.c.bf16 %v4516, %v4515
        %v4578 = vpack.c.bf16 %v4518, %v4517
        %v4579 = vpack.c.bf16 %v4520, %v4519
        %v4580 = vpack.c.bf16 %v4522, %v4521
        %v4581 = vpack.c.bf16 %v4524, %v4523
        %v4582 = vpack.c.bf16 %v4526, %v4525
        %v4583 = vpack.c.bf16 %v4528, %v4527
        %v4584 = vpack.c.bf16 %v4530, %v4529
        %v4585 = vpack.c.bf16 %v4532, %v4531
        %v4586 = vpack.c.bf16 %v4534, %v4533
        %v4587 = vpack.c.bf16 %v4536, %v4535
        %v4588 = vpack.c.bf16 %v4538, %v4537
        %v4589 = vpack.c.bf16 %v4540, %v4539
        %v4590 = vpack.c.bf16 %v4542, %v4541
        %v4591 = vpack.c.bf16 %v4544, %v4543
        %v4592 = vpack.c.bf16 %v4546, %v4545
        %v4593 = vpack.c.bf16 %v4548, %v4547
        %v4594 = vpack.c.bf16 %v4550, %v4549
        %v4595 = vpack.c.bf16 %v4552, %v4551
        %v4596 = vpack.c.bf16 %v4554, %v4553
        %v4597 = vpack.c.bf16 %v4556, %v4555
        %v4598 = vpack.c.bf16 %v4558, %v4557
        %v4599 = vpack.c.bf16 %v4560, %v4559
        %v4600 = vpack.c.bf16 %v4562, %v4561
        %v4601 = vpack.c.bf16 %v4564, %v4563
        %v4602 = vpack.c.bf16 %v4566, %v4565
        %v4603 = vpack.c.bf16 %v4568, %v4567
        %v4604 = vpack.c.bf16 %v4570, %v4569
        %v4605 = vpack.c.bf16 %v4572, %v4571
        %v4606 = vpack.c.bf16 %v4574, %v4573
        %v4639 = vunpack.c.l.b16 %v4575
        %v4640 = vunpack.c.h.b16 %v4575
        %v4641 = vunpack.c.l.b16 %v4576
        %v4642 = vunpack.c.h.b16 %v4576
        %v4643 = vunpack.c.l.b16 %v4577
        %v4644 = vunpack.c.h.b16 %v4577
        %v4645 = vunpack.c.l.b16 %v4578
        %v4646 = vunpack.c.h.b16 %v4578
        %v4647 = vunpack.c.l.b16 %v4579
        %v4648 = vunpack.c.h.b16 %v4579
        %v4649 = vunpack.c.l.b16 %v4580
        %v4650 = vunpack.c.h.b16 %v4580
        %v4651 = vunpack.c.l.b16 %v4581
        %v4652 = vunpack.c.h.b16 %v4581
        %v4653 = vunpack.c.l.b16 %v4582
        %v4654 = vunpack.c.h.b16 %v4582
        %v4655 = vunpack.c.l.b16 %v4583
        %v4656 = vunpack.c.h.b16 %v4583
        %v4657 = vunpack.c.l.b16 %v4584
        %v4658 = vunpack.c.h.b16 %v4584
        %v4659 = vunpack.c.l.b16 %v4585
        %v4660 = vunpack.c.h.b16 %v4585
        %v4661 = vunpack.c.l.b16 %v4586
        %v4662 = vunpack.c.h.b16 %v4586
        %v4663 = vunpack.c.l.b16 %v4587
        %v4664 = vunpack.c.h.b16 %v4587
        %v4665 = vunpack.c.l.b16 %v4588
        %v4666 = vunpack.c.h.b16 %v4588
        %v4667 = vunpack.c.l.b16 %v4589
        %v4668 = vunpack.c.h.b16 %v4589
        %v4669 = vunpack.c.l.b16 %v4590
        %v4670 = vunpack.c.h.b16 %v4590
        %v4671 = vunpack.c.l.b16 %v4591
        %v4672 = vunpack.c.h.b16 %v4591
        %v4673 = vunpack.c.l.b16 %v4592
        %v4674 = vunpack.c.h.b16 %v4592
        %v4675 = vunpack.c.l.b16 %v4593
        %v4676 = vunpack.c.h.b16 %v4593
        %v4677 = vunpack.c.l.b16 %v4594
        %v4678 = vunpack.c.h.b16 %v4594
        %v4679 = vunpack.c.l.b16 %v4595
        %v4680 = vunpack.c.h.b16 %v4595
        %v4681 = vunpack.c.l.b16 %v4596
        %v4682 = vunpack.c.h.b16 %v4596
        %v4683 = vunpack.c.l.b16 %v4597
        %v4684 = vunpack.c.h.b16 %v4597
        %v4685 = vunpack.c.l.b16 %v4598
        %v4686 = vunpack.c.h.b16 %v4598
        %v4687 = vunpack.c.l.b16 %v4599
        %v4688 = vunpack.c.h.b16 %v4599
        %v4689 = vunpack.c.l.b16 %v4600
        %v4690 = vunpack.c.h.b16 %v4600
        %v4691 = vunpack.c.l.b16 %v4601
        %v4692 = vunpack.c.h.b16 %v4601
        %v4693 = vunpack.c.l.b16 %v4602
        %v4694 = vunpack.c.h.b16 %v4602
        %v4695 = vunpack.c.l.b16 %v4603
        %v4696 = vunpack.c.h.b16 %v4603
        %v4697 = vunpack.c.l.b16 %v4604
        %v4698 = vunpack.c.h.b16 %v4604
        %v4699 = vunpack.c.l.b16 %v4605
        %v4700 = vunpack.c.h.b16 %v4605
        %v4701 = vunpack.c.l.b16 %v4606
        %v4702 = vunpack.c.h.b16 %v4606
        %v4703 = vpack.c.b16 %v4639, %v4639
        %v4704 = vpack.c.b16 %v4640, %v4640
        %v4705 = vpack.c.b16 %v4641, %v4641
        %v4706 = vpack.c.b16 %v4642, %v4642
        %v4707 = vpack.c.b16 %v4643, %v4643
        %v4708 = vpack.c.b16 %v4644, %v4644
        %v4709 = vpack.c.b16 %v4645, %v4645
        %v4710 = vpack.c.b16 %v4646, %v4646
        %v4711 = vpack.c.b16 %v4647, %v4647
        %v4712 = vpack.c.b16 %v4648, %v4648
        %v4713 = vpack.c.b16 %v4649, %v4649
        %v4714 = vpack.c.b16 %v4650, %v4650
        %v4715 = vpack.c.b16 %v4651, %v4651
        %v4716 = vpack.c.b16 %v4652, %v4652
        %v4717 = vpack.c.b16 %v4653, %v4653
        %v4718 = vpack.c.b16 %v4654, %v4654
        %v4719 = vpack.c.b16 %v4655, %v4655
        %v4720 = vpack.c.b16 %v4656, %v4656
        %v4721 = vpack.c.b16 %v4657, %v4657
        %v4722 = vpack.c.b16 %v4658, %v4658
        %v4723 = vpack.c.b16 %v4659, %v4659
        %v4724 = vpack.c.b16 %v4660, %v4660
        %v4725 = vpack.c.b16 %v4661, %v4661
        %v4726 = vpack.c.b16 %v4662, %v4662
        %v4727 = vpack.c.b16 %v4663, %v4663
        %v4728 = vpack.c.b16 %v4664, %v4664
        %v4729 = vpack.c.b16 %v4665, %v4665
        %v4730 = vpack.c.b16 %v4666, %v4666
        %v4731 = vpack.c.b16 %v4667, %v4667
        %v4732 = vpack.c.b16 %v4668, %v4668
        %v4733 = vpack.c.b16 %v4669, %v4669
        %v4734 = vpack.c.b16 %v4670, %v4670
        %v4735 = vpack.c.b16 %v4671, %v4671
        %v4736 = vpack.c.b16 %v4672, %v4672
        %v4737 = vpack.c.b16 %v4673, %v4673
        %v4738 = vpack.c.b16 %v4674, %v4674
        %v4739 = vpack.c.b16 %v4675, %v4675
        %v4740 = vpack.c.b16 %v4676, %v4676
        %v4741 = vpack.c.b16 %v4677, %v4677
        %v4742 = vpack.c.b16 %v4678, %v4678
        %v4743 = vpack.c.b16 %v4679, %v4679
        %v4744 = vpack.c.b16 %v4680, %v4680
        %v4745 = vpack.c.b16 %v4681, %v4681
        %v4746 = vpack.c.b16 %v4682, %v4682
        %v4747 = vpack.c.b16 %v4683, %v4683
        %v4748 = vpack.c.b16 %v4684, %v4684
        %v4749 = vpack.c.b16 %v4685, %v4685
        %v4750 = vpack.c.b16 %v4686, %v4686
        %v4751 = vpack.c.b16 %v4687, %v4687
        %v4752 = vpack.c.b16 %v4688, %v4688
        %v4753 = vpack.c.b16 %v4689, %v4689
        %v4754 = vpack.c.b16 %v4690, %v4690
        %v4755 = vpack.c.b16 %v4691, %v4691
        %v4756 = vpack.c.b16 %v4692, %v4692
        %v4757 = vpack.c.b16 %v4693, %v4693
        %v4758 = vpack.c.b16 %v4694, %v4694
        %v4759 = vpack.c.b16 %v4695, %v4695
        %v4760 = vpack.c.b16 %v4696, %v4696
        %v4761 = vpack.c.b16 %v4697, %v4697
        %v4762 = vpack.c.b16 %v4698, %v4698
        %v4763 = vpack.c.b16 %v4699, %v4699
        %v4764 = vpack.c.b16 %v4700, %v4700
        %v4765 = vpack.c.b16 %v4701, %v4701
        %v4766 = vpack.c.b16 %v4702, %v4702
        %4831 = vst [vmem:[%s501] sm:$0xf] %v4703
        %4832 = vst [vmem:[%s501 + $0x4] sm:$0xf] %v4704
        %4833 = vst [vmem:[%s501 + $0x8] sm:$0xf] %v4705
        %4834 = vst [vmem:[%s501 + $0xc] sm:$0xf] %v4706
        %4835 = vst [vmem:[%s501 + $0x10] sm:$0xf] %v4707
        %4836 = vst [vmem:[%s501 + $0x14] sm:$0xf] %v4708
        %4837 = vst [vmem:[%s501 + $0x18] sm:$0xf] %v4709
        %4838 = vst [vmem:[%s501 + $0x1c] sm:$0xf] %v4710
        %4839 = vst [vmem:[%s501 + $0x20] sm:$0xf] %v4711
        %4840 = vst [vmem:[%s501 + $0x24] sm:$0xf] %v4712
        %4841 = vst [vmem:[%s501 + $0x28] sm:$0xf] %v4713
        %4842 = vst [vmem:[%s501 + $0x2c] sm:$0xf] %v4714
        %4843 = vst [vmem:[%s501 + $0x30] sm:$0xf] %v4715
        %4844 = vst [vmem:[%s501 + $0x34] sm:$0xf] %v4716
        %4845 = vst [vmem:[%s501 + $0x38] sm:$0xf] %v4717
        %4846 = vst [vmem:[%s501 + $0x3c] sm:$0xf] %v4718
        %4847 = vst [vmem:[%s501 + $0x40] sm:$0xf] %v4719
        %4848 = vst [vmem:[%s501 + $0x44] sm:$0xf] %v4720
        %4849 = vst [vmem:[%s501 + $0x48] sm:$0xf] %v4721
        %4850 = vst [vmem:[%s501 + $0x4c] sm:$0xf] %v4722
        %4851 = vst [vmem:[%s501 + $0x50] sm:$0xf] %v4723
        %4852 = vst [vmem:[%s501 + $0x54] sm:$0xf] %v4724
        %4853 = vst [vmem:[%s501 + $0x58] sm:$0xf] %v4725
        %4854 = vst [vmem:[%s501 + $0x5c] sm:$0xf] %v4726
        %4855 = vst [vmem:[%s501 + $0x60] sm:$0xf] %v4727
        %4856 = vst [vmem:[%s501 + $0x64] sm:$0xf] %v4728
        %4857 = vst [vmem:[%s501 + $0x68] sm:$0xf] %v4729
        %4858 = vst [vmem:[%s501 + $0x6c] sm:$0xf] %v4730
        %4859 = vst [vmem:[%s501 + $0x70] sm:$0xf] %v4731
        %4860 = vst [vmem:[%s501 + $0x74] sm:$0xf] %v4732
        %4861 = vst [vmem:[%s501 + $0x78] sm:$0xf] %v4733
        %4862 = vst [vmem:[%s501 + $0x7c] sm:$0xf] %v4734
        %4863 = vst [vmem:[%s501 + $0x80] sm:$0xf] %v4735
        %4864 = vst [vmem:[%s501 + $0x84] sm:$0xf] %v4736
        %4865 = vst [vmem:[%s501 + $0x88] sm:$0xf] %v4737
        %4866 = vst [vmem:[%s501 + $0x8c] sm:$0xf] %v4738
        %4867 = vst [vmem:[%s501 + $0x90] sm:$0xf] %v4739
        %4868 = vst [vmem:[%s501 + $0x94] sm:$0xf] %v4740
        %4869 = vst [vmem:[%s501 + $0x98] sm:$0xf] %v4741
        %4870 = vst [vmem:[%s501 + $0x9c] sm:$0xf] %v4742
        %4871 = vst [vmem:[%s501 + $0xa0] sm:$0xf] %v4743
        %4872 = vst [vmem:[%s501 + $0xa4] sm:$0xf] %v4744
        %4873 = vst [vmem:[%s501 + $0xa8] sm:$0xf] %v4745
        %4874 = vst [vmem:[%s501 + $0xac] sm:$0xf] %v4746
        %4875 = vst [vmem:[%s501 + $0xb0] sm:$0xf] %v4747
        %4876 = vst [vmem:[%s501 + $0xb4] sm:$0xf] %v4748
        %4877 = vst [vmem:[%s501 + $0xb8] sm:$0xf] %v4749
        %4878 = vst [vmem:[%s501 + $0xbc] sm:$0xf] %v4750
        %4879 = vst [vmem:[%s501 + $0xc0] sm:$0xf] %v4751
        %4880 = vst [vmem:[%s501 + $0xc4] sm:$0xf] %v4752
        %4881 = vst [vmem:[%s501 + $0xc8] sm:$0xf] %v4753
        %4882 = vst [vmem:[%s501 + $0xcc] sm:$0xf] %v4754
        %4883 = vst [vmem:[%s501 + $0xd0] sm:$0xf] %v4755
        %4884 = vst [vmem:[%s501 + $0xd4] sm:$0xf] %v4756
        %4885 = vst [vmem:[%s501 + $0xd8] sm:$0xf] %v4757
        %4886 = vst [vmem:[%s501 + $0xdc] sm:$0xf] %v4758
        %4887 = vst [vmem:[%s501 + $0xe0] sm:$0xf] %v4759
        %4888 = vst [vmem:[%s501 + $0xe4] sm:$0xf] %v4760
        %4889 = vst [vmem:[%s501 + $0xe8] sm:$0xf] %v4761
        %4890 = vst [vmem:[%s501 + $0xec] sm:$0xf] %v4762
        %4891 = vst [vmem:[%s501 + $0xf0] sm:$0xf] %v4763
        %4892 = vst [vmem:[%s501 + $0xf4] sm:$0xf] %v4764
        %4893 = vst [vmem:[%s501 + $0xf8] sm:$0xf] %v4765
        %4894 = vst [vmem:[%s501 + $0xfc] sm:$0xf] %v4766
        %v4895 = vpack.c.bf16 %v3680, %v3679
        %v4896 = vpack.c.bf16 %v3682, %v3681
        %v4897 = vpack.c.bf16 %v3684, %v3683
        %v4898 = vpack.c.bf16 %v3686, %v3685
        %v4899 = vpack.c.bf16 %v3688, %v3687
        %v4900 = vpack.c.bf16 %v3690, %v3689
        %v4901 = vpack.c.bf16 %v3692, %v3691
        %v4902 = vpack.c.bf16 %v3694, %v3693
        %v4903 = vpack.c.bf16 %v3696, %v3695
        %v4904 = vpack.c.bf16 %v3698, %v3697
        %v4905 = vpack.c.bf16 %v3700, %v3699
        %v4906 = vpack.c.bf16 %v3702, %v3701
        %v4907 = vpack.c.bf16 %v3704, %v3703
        %v4908 = vpack.c.bf16 %v3706, %v3705
        %v4909 = vpack.c.bf16 %v3708, %v3707
        %v4910 = vpack.c.bf16 %v3710, %v3709
        %v4911 = vpack.c.bf16 %v3712, %v3711
        %v4912 = vpack.c.bf16 %v3714, %v3713
        %v4913 = vpack.c.bf16 %v3716, %v3715
        %v4914 = vpack.c.bf16 %v3718, %v3717
        %v4915 = vpack.c.bf16 %v3720, %v3719
        %v4916 = vpack.c.bf16 %v3722, %v3721
        %v4917 = vpack.c.bf16 %v3724, %v3723
        %v4918 = vpack.c.bf16 %v3726, %v3725
        %v4919 = vpack.c.bf16 %v3728, %v3727
        %v4920 = vpack.c.bf16 %v3730, %v3729
        %v4921 = vpack.c.bf16 %v3732, %v3731
        %v4922 = vpack.c.bf16 %v3734, %v3733
        %v4923 = vpack.c.bf16 %v3736, %v3735
        %v4924 = vpack.c.bf16 %v3738, %v3737
        %v4925 = vpack.c.bf16 %v3740, %v3739
        %v4926 = vpack.c.bf16 %v3742, %v3741
        %4927 = vxpose.xlu0.c.b16.start [1/8] %v4895, 128
        %4928 = vxpose.xlu0.c.b16.cont [2/8] %v4896, 128
        %4929 = vxpose.xlu0.c.b16.cont [3/8] %v4897, 128
        %4930 = vxpose.xlu0.c.b16.cont [4/8] %v4898, 128
        %4931 = vxpose.xlu0.c.b16.cont [5/8] %v4899, 128
        %4932 = vxpose.xlu0.c.b16.cont [6/8] %v4900, 128
        %4933 = vxpose.xlu0.c.b16.cont [7/8] %v4901, 128
        %4934 = vxpose.xlu0.c.b16.end [8/8] %v4902, 128
        %v4935 = vpop.trf.xlu0
        %v4936 = vpop.trf.xlu0
        %v4937 = vpop.trf.xlu0
        %v4938 = vpop.trf.xlu0
        %v4939 = vpop.trf.xlu0
        %v4940 = vpop.trf.xlu0
        %v4941 = vpop.trf.xlu0
        %v4942 = vpop.trf.xlu0
        %4943 = vxpose.xlu0.c.b16.start [1/8] %v4903, 128
        %4944 = vxpose.xlu0.c.b16.cont [2/8] %v4904, 128
        %4945 = vxpose.xlu0.c.b16.cont [3/8] %v4905, 128
        %4946 = vxpose.xlu0.c.b16.cont [4/8] %v4906, 128
        %4947 = vxpose.xlu0.c.b16.cont [5/8] %v4907, 128
        %4948 = vxpose.xlu0.c.b16.cont [6/8] %v4908, 128
        %4949 = vxpose.xlu0.c.b16.cont [7/8] %v4909, 128
        %4950 = vxpose.xlu0.c.b16.end [8/8] %v4910, 128
        %v4951 = vpop.trf.xlu0
        %v4952 = vpop.trf.xlu0
        %v4953 = vpop.trf.xlu0
        %v4954 = vpop.trf.xlu0
        %v4955 = vpop.trf.xlu0
        %v4956 = vpop.trf.xlu0
        %v4957 = vpop.trf.xlu0
        %v4958 = vpop.trf.xlu0
        %4959 = vxpose.xlu0.c.b16.start [1/8] %v4911, 128
        %4960 = vxpose.xlu0.c.b16.cont [2/8] %v4912, 128
        %4961 = vxpose.xlu0.c.b16.cont [3/8] %v4913, 128
        %4962 = vxpose.xlu0.c.b16.cont [4/8] %v4914, 128
        %4963 = vxpose.xlu0.c.b16.cont [5/8] %v4915, 128
        %4964 = vxpose.xlu0.c.b16.cont [6/8] %v4916, 128
        %4965 = vxpose.xlu0.c.b16.cont [7/8] %v4917, 128
        %4966 = vxpose.xlu0.c.b16.end [8/8] %v4918, 128
        %v4967 = vpop.trf.xlu0
        %v4968 = vpop.trf.xlu0
        %v4969 = vpop.trf.xlu0
        %v4970 = vpop.trf.xlu0
        %v4971 = vpop.trf.xlu0
        %v4972 = vpop.trf.xlu0
        %v4973 = vpop.trf.xlu0
        %v4974 = vpop.trf.xlu0
        %4975 = vxpose.xlu0.c.b16.start [1/8] %v4919, 128
        %4976 = vxpose.xlu0.c.b16.cont [2/8] %v4920, 128
        %4977 = vxpose.xlu0.c.b16.cont [3/8] %v4921, 128
        %4978 = vxpose.xlu0.c.b16.cont [4/8] %v4922, 128
        %4979 = vxpose.xlu0.c.b16.cont [5/8] %v4923, 128
        %4980 = vxpose.xlu0.c.b16.cont [6/8] %v4924, 128
        %4981 = vxpose.xlu0.c.b16.cont [7/8] %v4925, 128
        %4982 = vxpose.xlu0.c.b16.end [8/8] %v4926, 128
        %v4983 = vpop.trf.xlu0
        %v4984 = vpop.trf.xlu0
        %v4985 = vpop.trf.xlu0
        %v4986 = vpop.trf.xlu0
        %v4987 = vpop.trf.xlu0
        %v4988 = vpop.trf.xlu0
        %v4989 = vpop.trf.xlu0
        %v4990 = vpop.trf.xlu0
        %4991 = vmatprep.subr.bf16.mxu0 0
        %4992 = vmatpush1.bf16.msra.mxu0 %v4134
        %4993 = vmatprep.subr.bf16.mxu0 0
        %4994 = vmatpush1.bf16.msra.mxu0 %v4133
        %4995 = vmatprep.subr.bf16.mxu0 0
        %4996 = vmatpush1.bf16.msra.mxu0 %v4132
        %4997 = vmatprep.subr.bf16.mxu0 0
        %4998 = vmatpush1.bf16.msra.mxu0 %v4131
        %4999 = vmatprep.subr.bf16.mxu0 0
        %5000 = vmatpush1.bf16.msra.mxu0 %v4130
        %5001 = vmatprep.subr.bf16.mxu0 0
        %5002 = vmatpush1.bf16.msra.mxu0 %v4129
        %5003 = vmatprep.subr.bf16.mxu0 0
        %5004 = vmatpush1.bf16.msra.mxu0 %v4128
        %5005 = vmatprep.subr.bf16.mxu0 0
        %5006 = vmatpush1.bf16.msra.mxu0 %v4127
        %5007 = vmatprep.subr.bf16.mxu0 0
        %5008 = vmatpush2.bf16.msra.mxu0 %v4142
        %5009 = vmatprep.subr.bf16.mxu0 0
        %5010 = vmatpush2.bf16.msra.mxu0 %v4141
        %5011 = vmatprep.subr.bf16.mxu0 0
        %5012 = vmatpush2.bf16.msra.mxu0 %v4140
        %5013 = vmatprep.subr.bf16.mxu0 0
        %5014 = vmatpush2.bf16.msra.mxu0 %v4139
        %5015 = vmatprep.subr.bf16.mxu0 0
        %5016 = vmatpush2.bf16.msra.mxu0 %v4138
        %5017 = vmatprep.subr.bf16.mxu0 0
        %5018 = vmatpush2.bf16.msra.mxu0 %v4137
        %5019 = vmatprep.subr.bf16.mxu0 0
        %5020 = vmatpush2.bf16.msra.mxu0 %v4136
        %5021 = vmatprep.subr.bf16.mxu0 0
        %5022 = vmatpush2.bf16.msra.mxu0 %v4135
        %5023 = vmatprep.mubr.bf16.mxu0 %v4951
        %5024 = vmatmul.mubr.bf16.gmra.mxu0 %v4935
        %v5025 = vpop.f32.mrf.mxu0
        %v5026 = vadd.f32 0.0, %v5025
        %v5027 = vpop.f32.mrf.mxu0
        %v5028 = vpop.f32.mrf.mxu0
        %v5029 = vadd.f32 0.0, %v5028
        %v5030 = vpop.f32.mrf.mxu0
        %5031 = vmatprep.mubr.bf16.mxu0 %v4952
        %5032 = vmatmul.mubr.bf16.gmra.mxu0 %v4936
        %v5033 = vpop.f32.mrf.mxu0
        %v5034 = vadd.f32 0.0, %v5033
        %v5035 = vpop.f32.mrf.mxu0
        %v5036 = vpop.f32.mrf.mxu0
        %v5037 = vadd.f32 0.0, %v5036
        %v5038 = vpop.f32.mrf.mxu0
        %5039 = vmatprep.mubr.bf16.mxu0 %v4953
        %5040 = vmatmul.mubr.bf16.gmra.mxu0 %v4937
        %v5041 = vpop.f32.mrf.mxu0
        %v5042 = vadd.f32 0.0, %v5041
        %v5043 = vpop.f32.mrf.mxu0
        %v5044 = vpop.f32.mrf.mxu0
        %v5045 = vadd.f32 0.0, %v5044
        %v5046 = vpop.f32.mrf.mxu0
        %5047 = vmatprep.mubr.bf16.mxu0 %v4954
        %5048 = vmatmul.mubr.bf16.gmra.mxu0 %v4938
        %v5049 = vpop.f32.mrf.mxu0
        %v5050 = vadd.f32 0.0, %v5049
        %v5051 = vpop.f32.mrf.mxu0
        %v5052 = vpop.f32.mrf.mxu0
        %v5053 = vadd.f32 0.0, %v5052
        %v5054 = vpop.f32.mrf.mxu0
        %5055 = vmatprep.mubr.bf16.mxu0 %v4955
        %5056 = vmatmul.mubr.bf16.gmra.mxu0 %v4939
        %v5057 = vpop.f32.mrf.mxu0
        %v5058 = vadd.f32 0.0, %v5057
        %v5059 = vpop.f32.mrf.mxu0
        %v5060 = vpop.f32.mrf.mxu0
        %v5061 = vadd.f32 0.0, %v5060
        %v5062 = vpop.f32.mrf.mxu0
        %5063 = vmatprep.mubr.bf16.mxu0 %v4956
        %5064 = vmatmul.mubr.bf16.gmra.mxu0 %v4940
        %v5065 = vpop.f32.mrf.mxu0
        %v5066 = vadd.f32 0.0, %v5065
        %v5067 = vpop.f32.mrf.mxu0
        %v5068 = vpop.f32.mrf.mxu0
        %v5069 = vadd.f32 0.0, %v5068
        %v5070 = vpop.f32.mrf.mxu0
        %5071 = vmatprep.mubr.bf16.mxu0 %v4957
        %5072 = vmatmul.mubr.bf16.gmra.mxu0 %v4941
        %v5073 = vpop.f32.mrf.mxu0
        %v5074 = vadd.f32 0.0, %v5073
        %v5075 = vpop.f32.mrf.mxu0
        %v5076 = vpop.f32.mrf.mxu0
        %v5077 = vadd.f32 0.0, %v5076
        %v5078 = vpop.f32.mrf.mxu0
        %5079 = vmatprep.mubr.bf16.mxu0 %v4958
        %5080 = vmatmul.mubr.bf16.gmra.mxu0 %v4942
        %v5081 = vpop.f32.mrf.mxu0
        %v5082 = vadd.f32 0.0, %v5081
        %v5083 = vpop.f32.mrf.mxu0
        %v5084 = vpop.f32.mrf.mxu0
        %v5085 = vadd.f32 0.0, %v5084
        %v5086 = vpop.f32.mrf.mxu0
        %5087 = vdwg.mxu0
        %5088 = vmatprep.subr.bf16.mxu0 0
        %5089 = vmatpush1.bf16.msra.mxu0 %v4150
        %5090 = vmatprep.subr.bf16.mxu0 0
        %5091 = vmatpush1.bf16.msra.mxu0 %v4149
        %5092 = vmatprep.subr.bf16.mxu0 0
        %5093 = vmatpush1.bf16.msra.mxu0 %v4148
        %5094 = vmatprep.subr.bf16.mxu0 0
        %5095 = vmatpush1.bf16.msra.mxu0 %v4147
        %5096 = vmatprep.subr.bf16.mxu0 0
        %5097 = vmatpush1.bf16.msra.mxu0 %v4146
        %5098 = vmatprep.subr.bf16.mxu0 0
        %5099 = vmatpush1.bf16.msra.mxu0 %v4145
        %5100 = vmatprep.subr.bf16.mxu0 0
        %5101 = vmatpush1.bf16.msra.mxu0 %v4144
        %5102 = vmatprep.subr.bf16.mxu0 0
        %5103 = vmatpush1.bf16.msra.mxu0 %v4143
        %5104 = vmatprep.subr.bf16.mxu0 0
        %5105 = vmatpush2.bf16.msra.mxu0 %v4158
        %5106 = vmatprep.subr.bf16.mxu0 0
        %5107 = vmatpush2.bf16.msra.mxu0 %v4157
        %5108 = vmatprep.subr.bf16.mxu0 0
        %5109 = vmatpush2.bf16.msra.mxu0 %v4156
        %5110 = vmatprep.subr.bf16.mxu0 0
        %5111 = vmatpush2.bf16.msra.mxu0 %v4155
        %5112 = vmatprep.subr.bf16.mxu0 0
        %5113 = vmatpush2.bf16.msra.mxu0 %v4154
        %5114 = vmatprep.subr.bf16.mxu0 0
        %5115 = vmatpush2.bf16.msra.mxu0 %v4153
        %5116 = vmatprep.subr.bf16.mxu0 0
        %5117 = vmatpush2.bf16.msra.mxu0 %v4152
        %5118 = vmatprep.subr.bf16.mxu0 0
        %5119 = vmatpush2.bf16.msra.mxu0 %v4151
        %5120 = vmatprep.mubr.bf16.mxu0 %v4983
        %5121 = vmatmul.mubr.bf16.gmra.mxu0 %v4967
        %v5122 = vpop.f32.mrf.mxu0
        %v5123 = vadd.f32 %v5026, %v5122
        %v5124 = vpop.f32.mrf.mxu0
        %v5125 = vpop.f32.mrf.mxu0
        %v5126 = vadd.f32 %v5029, %v5125
        %v5127 = vpop.f32.mrf.mxu0
        %5128 = vmatprep.mubr.bf16.mxu0 %v4984
        %5129 = vmatmul.mubr.bf16.gmra.mxu0 %v4968
        %v5130 = vpop.f32.mrf.mxu0
        %v5131 = vadd.f32 %v5034, %v5130
        %v5132 = vpop.f32.mrf.mxu0
        %v5133 = vpop.f32.mrf.mxu0
        %v5134 = vadd.f32 %v5037, %v5133
        %v5135 = vpop.f32.mrf.mxu0
        %5136 = vmatprep.mubr.bf16.mxu0 %v4985
        %5137 = vmatmul.mubr.bf16.gmra.mxu0 %v4969
        %v5138 = vpop.f32.mrf.mxu0
        %v5139 = vadd.f32 %v5042, %v5138
        %v5140 = vpop.f32.mrf.mxu0
        %v5141 = vpop.f32.mrf.mxu0
        %v5142 = vadd.f32 %v5045, %v5141
        %v5143 = vpop.f32.mrf.mxu0
        %5144 = vmatprep.mubr.bf16.mxu0 %v4986
        %5145 = vmatmul.mubr.bf16.gmra.mxu0 %v4970
        %v5146 = vpop.f32.mrf.mxu0
        %v5147 = vadd.f32 %v5050, %v5146
        %v5148 = vpop.f32.mrf.mxu0
        %v5149 = vpop.f32.mrf.mxu0
        %v5150 = vadd.f32 %v5053, %v5149
        %v5151 = vpop.f32.mrf.mxu0
        %5152 = vmatprep.mubr.bf16.mxu0 %v4987
        %5153 = vmatmul.mubr.bf16.gmra.mxu0 %v4971
        %v5154 = vpop.f32.mrf.mxu0
        %v5155 = vadd.f32 %v5058, %v5154
        %v5156 = vpop.f32.mrf.mxu0
        %v5157 = vpop.f32.mrf.mxu0
        %v5158 = vadd.f32 %v5061, %v5157
        %v5159 = vpop.f32.mrf.mxu0
        %5160 = vmatprep.mubr.bf16.mxu0 %v4988
        %5161 = vmatmul.mubr.bf16.gmra.mxu0 %v4972
        %v5162 = vpop.f32.mrf.mxu0
        %v5163 = vadd.f32 %v5066, %v5162
        %v5164 = vpop.f32.mrf.mxu0
        %v5165 = vpop.f32.mrf.mxu0
        %v5166 = vadd.f32 %v5069, %v5165
        %v5167 = vpop.f32.mrf.mxu0
        %5168 = vmatprep.mubr.bf16.mxu0 %v4989
        %5169 = vmatmul.mubr.bf16.gmra.mxu0 %v4973
        %v5170 = vpop.f32.mrf.mxu0
        %v5171 = vadd.f32 %v5074, %v5170
        %v5172 = vpop.f32.mrf.mxu0
        %v5173 = vpop.f32.mrf.mxu0
        %v5174 = vadd.f32 %v5077, %v5173
        %v5175 = vpop.f32.mrf.mxu0
        %5176 = vmatprep.mubr.bf16.mxu0 %v4990
        %5177 = vmatmul.mubr.bf16.gmra.mxu0 %v4974
        %v5178 = vpop.f32.mrf.mxu0
        %v5179 = vadd.f32 %v5082, %v5178
        %v5180 = vpop.f32.mrf.mxu0
        %v5181 = vpop.f32.mrf.mxu0
        %v5182 = vadd.f32 %v5085, %v5181
        %v5183 = vpop.f32.mrf.mxu0
        %5184 = vdwg.mxu0
        %5185 = vst [vmem:[%s508] sm:$0xff] %v5123
        %5186 = vst [vmem:[%s508 + $0x8] sm:$0xff] %v5126
        %5187 = vst [vmem:[%s508 + $0x10] sm:$0xff] %v5131
        %5188 = vst [vmem:[%s508 + $0x18] sm:$0xff] %v5134
        %5189 = vst [vmem:[%s508 + $0x20] sm:$0xff] %v5139
        %5190 = vst [vmem:[%s508 + $0x28] sm:$0xff] %v5142
        %5191 = vst [vmem:[%s508 + $0x30] sm:$0xff] %v5147
        %5192 = vst [vmem:[%s508 + $0x38] sm:$0xff] %v5150
        %5193 = vst [vmem:[%s508 + $0x40] sm:$0xff] %v5155
        %5194 = vst [vmem:[%s508 + $0x48] sm:$0xff] %v5158
        %5195 = vst [vmem:[%s508 + $0x50] sm:$0xff] %v5163
        %5196 = vst [vmem:[%s508 + $0x58] sm:$0xff] %v5166
        %5197 = vst [vmem:[%s508 + $0x60] sm:$0xff] %v5171
        %5198 = vst [vmem:[%s508 + $0x68] sm:$0xff] %v5174
        %5199 = vst [vmem:[%s508 + $0x70] sm:$0xff] %v5179
        %5200 = vst [vmem:[%s508 + $0x78] sm:$0xff] %v5182
        %v5201 = vadd.f32 %v3679, %v3680
        %v5202 = vadd.f32 %v5201, %v3681
        %v5203 = vadd.f32 %v5202, %v3682
        %v5204 = vadd.f32 %v5203, %v3683
        %v5205 = vadd.f32 %v5204, %v3684
        %v5206 = vadd.f32 %v5205, %v3685
        %v5207 = vadd.f32 %v5206, %v3686
        %v5208 = vadd.f32 %v5207, %v3687
        %v5209 = vadd.f32 %v5208, %v3688
        %v5210 = vadd.f32 %v5209, %v3689
        %v5211 = vadd.f32 %v5210, %v3690
        %v5212 = vadd.f32 %v5211, %v3691
        %v5213 = vadd.f32 %v5212, %v3692
        %v5214 = vadd.f32 %v5213, %v3693
        %v5215 = vadd.f32 %v5214, %v3694
        %v5216 = vadd.f32 %v5215, %v3695
        %v5217 = vadd.f32 %v5216, %v3696
        %v5218 = vadd.f32 %v5217, %v3697
        %v5219 = vadd.f32 %v5218, %v3698
        %v5220 = vadd.f32 %v5219, %v3699
        %v5221 = vadd.f32 %v5220, %v3700
        %v5222 = vadd.f32 %v5221, %v3701
        %v5223 = vadd.f32 %v5222, %v3702
        %v5224 = vadd.f32 %v5223, %v3703
        %v5225 = vadd.f32 %v5224, %v3704
        %v5226 = vadd.f32 %v5225, %v3705
        %v5227 = vadd.f32 %v5226, %v3706
        %v5228 = vadd.f32 %v5227, %v3707
        %v5229 = vadd.f32 %v5228, %v3708
        %v5230 = vadd.f32 %v5229, %v3709
        %v5231 = vadd.f32 %v5230, %v3710
        %v5232 = vadd.f32 %v5231, %v3711
        %v5233 = vadd.f32 %v5232, %v3712
        %v5234 = vadd.f32 %v5233, %v3713
        %v5235 = vadd.f32 %v5234, %v3714
        %v5236 = vadd.f32 %v5235, %v3715
        %v5237 = vadd.f32 %v5236, %v3716
        %v5238 = vadd.f32 %v5237, %v3717
        %v5239 = vadd.f32 %v5238, %v3718
        %v5240 = vadd.f32 %v5239, %v3719
        %v5241 = vadd.f32 %v5240, %v3720
        %v5242 = vadd.f32 %v5241, %v3721
        %v5243 = vadd.f32 %v5242, %v3722
        %v5244 = vadd.f32 %v5243, %v3723
        %v5245 = vadd.f32 %v5244, %v3724
        %v5246 = vadd.f32 %v5245, %v3725
        %v5247 = vadd.f32 %v5246, %v3726
        %v5248 = vadd.f32 %v5247, %v3727
        %v5249 = vadd.f32 %v5248, %v3728
        %v5250 = vadd.f32 %v5249, %v3729
        %v5251 = vadd.f32 %v5250, %v3730
        %v5252 = vadd.f32 %v5251, %v3731
        %v5253 = vadd.f32 %v5252, %v3732
        %v5254 = vadd.f32 %v5253, %v3733
        %v5255 = vadd.f32 %v5254, %v3734
        %v5256 = vadd.f32 %v5255, %v3735
        %v5257 = vadd.f32 %v5256, %v3736
        %v5258 = vadd.f32 %v5257, %v3737
        %v5259 = vadd.f32 %v5258, %v3738
        %v5260 = vadd.f32 %v5259, %v3739
        %v5261 = vadd.f32 %v5260, %v3740
        %v5262 = vadd.f32 %v5261, %v3741
        %v5263 = vadd.f32 %v5262, %v3742
        %v5264 = vrot.slane %v5263, 4
        %v5265 = vadd.f32 %v5263, %v5264
        %v5266 = vrot.slane %v5265, 2
        %v5267 = vadd.f32 %v5265, %v5266
        %v5268 = vrot.slane %v5267, 1
        %v5269 = vadd.f32 %v5267, %v5268
        %v5270 = vmul.f32 %v3615, %v3615
        %v5271 = vmul.f32 %v3616, %v3616
        %v5272 = vmul.f32 %v3617, %v3617
        %v5273 = vmul.f32 %v3618, %v3618
        %v5274 = vmul.f32 %v3619, %v3619
        %v5275 = vmul.f32 %v3620, %v3620
        %v5276 = vmul.f32 %v3621, %v3621
        %v5277 = vmul.f32 %v3622, %v3622
        %v5278 = vmul.f32 %v3623, %v3623
        %v5279 = vmul.f32 %v3624, %v3624
        %v5280 = vmul.f32 %v3625, %v3625
        %v5281 = vmul.f32 %v3626, %v3626
        %v5282 = vmul.f32 %v3627, %v3627
        %v5283 = vmul.f32 %v3628, %v3628
        %v5284 = vmul.f32 %v3629, %v3629
        %v5285 = vmul.f32 %v3630, %v3630
        %v5286 = vmul.f32 %v3631, %v3631
        %v5287 = vmul.f32 %v3632, %v3632
        %v5288 = vmul.f32 %v3633, %v3633
        %v5289 = vmul.f32 %v3634, %v3634
        %v5290 = vmul.f32 %v3635, %v3635
        %v5291 = vmul.f32 %v3636, %v3636
        %v5292 = vmul.f32 %v3637, %v3637
        %v5293 = vmul.f32 %v3638, %v3638
        %v5294 = vmul.f32 %v3639, %v3639
        %v5295 = vmul.f32 %v3640, %v3640
        %v5296 = vmul.f32 %v3641, %v3641
        %v5297 = vmul.f32 %v3642, %v3642
        %v5298 = vmul.f32 %v3643, %v3643
        %v5299 = vmul.f32 %v3644, %v3644
        %v5300 = vmul.f32 %v3645, %v3645
        %v5301 = vmul.f32 %v3646, %v3646
        %v5302 = vmul.f32 %v3647, %v3647
        %v5303 = vmul.f32 %v3648, %v3648
        %v5304 = vmul.f32 %v3649, %v3649
        %v5305 = vmul.f32 %v3650, %v3650
        %v5306 = vmul.f32 %v3651, %v3651
        %v5307 = vmul.f32 %v3652, %v3652
        %v5308 = vmul.f32 %v3653, %v3653
        %v5309 = vmul.f32 %v3654, %v3654
        %v5310 = vmul.f32 %v3655, %v3655
        %v5311 = vmul.f32 %v3656, %v3656
        %v5312 = vmul.f32 %v3657, %v3657
        %v5313 = vmul.f32 %v3658, %v3658
        %v5314 = vmul.f32 %v3659, %v3659
        %v5315 = vmul.f32 %v3660, %v3660
        %v5316 = vmul.f32 %v3661, %v3661
        %v5317 = vmul.f32 %v3662, %v3662
        %v5318 = vmul.f32 %v3663, %v3663
        %v5319 = vmul.f32 %v3664, %v3664
        %v5320 = vmul.f32 %v3665, %v3665
        %v5321 = vmul.f32 %v3666, %v3666
        %v5322 = vmul.f32 %v3667, %v3667
        %v5323 = vmul.f32 %v3668, %v3668
        %v5324 = vmul.f32 %v3669, %v3669
        %v5325 = vmul.f32 %v3670, %v3670
        %v5326 = vmul.f32 %v3671, %v3671
        %v5327 = vmul.f32 %v3672, %v3672
        %v5328 = vmul.f32 %v3673, %v3673
        %v5329 = vmul.f32 %v3674, %v3674
        %v5330 = vmul.f32 %v3675, %v3675
        %v5331 = vmul.f32 %v3676, %v3676
        %v5332 = vmul.f32 %v3677, %v3677
        %v5333 = vmul.f32 %v3678, %v3678
        %v5334 = vadd.f32 %v5270, %v5271
        %v5335 = vadd.f32 %v5334, %v5272
        %v5336 = vadd.f32 %v5335, %v5273
        %v5337 = vadd.f32 %v5336, %v5274
        %v5338 = vadd.f32 %v5337, %v5275
        %v5339 = vadd.f32 %v5338, %v5276
        %v5340 = vadd.f32 %v5339, %v5277
        %v5341 = vadd.f32 %v5340, %v5278
        %v5342 = vadd.f32 %v5341, %v5279
        %v5343 = vadd.f32 %v5342, %v5280
        %v5344 = vadd.f32 %v5343, %v5281
        %v5345 = vadd.f32 %v5344, %v5282
        %v5346 = vadd.f32 %v5345, %v5283
        %v5347 = vadd.f32 %v5346, %v5284
        %v5348 = vadd.f32 %v5347, %v5285
        %v5349 = vadd.f32 %v5348, %v5286
        %v5350 = vadd.f32 %v5349, %v5287
        %v5351 = vadd.f32 %v5350, %v5288
        %v5352 = vadd.f32 %v5351, %v5289
        %v5353 = vadd.f32 %v5352, %v5290
        %v5354 = vadd.f32 %v5353, %v5291
        %v5355 = vadd.f32 %v5354, %v5292
        %v5356 = vadd.f32 %v5355, %v5293
        %v5357 = vadd.f32 %v5356, %v5294
        %v5358 = vadd.f32 %v5357, %v5295
        %v5359 = vadd.f32 %v5358, %v5296
        %v5360 = vadd.f32 %v5359, %v5297
        %v5361 = vadd.f32 %v5360, %v5298
        %v5362 = vadd.f32 %v5361, %v5299
        %v5363 = vadd.f32 %v5362, %v5300
        %v5364 = vadd.f32 %v5363, %v5301
        %v5365 = vadd.f32 %v5364, %v5302
        %v5366 = vadd.f32 %v5365, %v5303
        %v5367 = vadd.f32 %v5366, %v5304
        %v5368 = vadd.f32 %v5367, %v5305
        %v5369 = vadd.f32 %v5368, %v5306
        %v5370 = vadd.f32 %v5369, %v5307
        %v5371 = vadd.f32 %v5370, %v5308
        %v5372 = vadd.f32 %v5371, %v5309
        %v5373 = vadd.f32 %v5372, %v5310
        %v5374 = vadd.f32 %v5373, %v5311
        %v5375 = vadd.f32 %v5374, %v5312
        %v5376 = vadd.f32 %v5375, %v5313
        %v5377 = vadd.f32 %v5376, %v5314
        %v5378 = vadd.f32 %v5377, %v5315
        %v5379 = vadd.f32 %v5378, %v5316
        %v5380 = vadd.f32 %v5379, %v5317
        %v5381 = vadd.f32 %v5380, %v5318
        %v5382 = vadd.f32 %v5381, %v5319
        %v5383 = vadd.f32 %v5382, %v5320
        %v5384 = vadd.f32 %v5383, %v5321
        %v5385 = vadd.f32 %v5384, %v5322
        %v5386 = vadd.f32 %v5385, %v5323
        %v5387 = vadd.f32 %v5386, %v5324
        %v5388 = vadd.f32 %v5387, %v5325
        %v5389 = vadd.f32 %v5388, %v5326
        %v5390 = vadd.f32 %v5389, %v5327
        %v5391 = vadd.f32 %v5390, %v5328
        %v5392 = vadd.f32 %v5391, %v5329
        %v5393 = vadd.f32 %v5392, %v5330
        %v5394 = vadd.f32 %v5393, %v5331
        %v5395 = vadd.f32 %v5394, %v5332
        %v5396 = vadd.f32 %v5395, %v5333
        %v5397 = vrot.slane %v5396, 4
        %v5398 = vadd.f32 %v5396, %v5397
        %v5399 = vrot.slane %v5398, 2
        %v5400 = vadd.f32 %v5398, %v5399
        %v5401 = vrot.slane %v5400, 1
        %v5402 = vadd.f32 %v5400, %v5401
        %v5403 = vmul.f32 %v3679, %v3679
        %v5404 = vmul.f32 %v3680, %v3680
        %v5405 = vmul.f32 %v3681, %v3681
        %v5406 = vmul.f32 %v3682, %v3682
        %v5407 = vmul.f32 %v3683, %v3683
        %v5408 = vmul.f32 %v3684, %v3684
        %v5409 = vmul.f32 %v3685, %v3685
        %v5410 = vmul.f32 %v3686, %v3686
        %v5411 = vmul.f32 %v3687, %v3687
        %v5412 = vmul.f32 %v3688, %v3688
        %v5413 = vmul.f32 %v3689, %v3689
        %v5414 = vmul.f32 %v3690, %v3690
        %v5415 = vmul.f32 %v3691, %v3691
        %v5416 = vmul.f32 %v3692, %v3692
        %v5417 = vmul.f32 %v3693, %v3693
        %v5418 = vmul.f32 %v3694, %v3694
        %v5419 = vmul.f32 %v3695, %v3695
        %v5420 = vmul.f32 %v3696, %v3696
        %v5421 = vmul.f32 %v3697, %v3697
        %v5422 = vmul.f32 %v3698, %v3698
        %v5423 = vmul.f32 %v3699, %v3699
        %v5424 = vmul.f32 %v3700, %v3700
        %v5425 = vmul.f32 %v3701, %v3701
        %v5426 = vmul.f32 %v3702, %v3702
        %v5427 = vmul.f32 %v3703, %v3703
        %v5428 = vmul.f32 %v3704, %v3704
        %v5429 = vmul.f32 %v3705, %v3705
        %v5430 = vmul.f32 %v3706, %v3706
        %v5431 = vmul.f32 %v3707, %v3707
        %v5432 = vmul.f32 %v3708, %v3708
        %v5433 = vmul.f32 %v3709, %v3709
        %v5434 = vmul.f32 %v3710, %v3710
        %v5435 = vmul.f32 %v3711, %v3711
        %v5436 = vmul.f32 %v3712, %v3712
        %v5437 = vmul.f32 %v3713, %v3713
        %v5438 = vmul.f32 %v3714, %v3714
        %v5439 = vmul.f32 %v3715, %v3715
        %v5440 = vmul.f32 %v3716, %v3716
        %v5441 = vmul.f32 %v3717, %v3717
        %v5442 = vmul.f32 %v3718, %v3718
        %v5443 = vmul.f32 %v3719, %v3719
        %v5444 = vmul.f32 %v3720, %v3720
        %v5445 = vmul.f32 %v3721, %v3721
        %v5446 = vmul.f32 %v3722, %v3722
        %v5447 = vmul.f32 %v3723, %v3723
        %v5448 = vmul.f32 %v3724, %v3724
        %v5449 = vmul.f32 %v3725, %v3725
        %v5450 = vmul.f32 %v3726, %v3726
        %v5451 = vmul.f32 %v3727, %v3727
        %v5452 = vmul.f32 %v3728, %v3728
        %v5453 = vmul.f32 %v3729, %v3729
        %v5454 = vmul.f32 %v3730, %v3730
        %v5455 = vmul.f32 %v3731, %v3731
        %v5456 = vmul.f32 %v3732, %v3732
        %v5457 = vmul.f32 %v3733, %v3733
        %v5458 = vmul.f32 %v3734, %v3734
        %v5459 = vmul.f32 %v3735, %v3735
        %v5460 = vmul.f32 %v3736, %v3736
        %v5461 = vmul.f32 %v3737, %v3737
        %v5462 = vmul.f32 %v3738, %v3738
        %v5463 = vmul.f32 %v3739, %v3739
        %v5464 = vmul.f32 %v3740, %v3740
        %v5465 = vmul.f32 %v3741, %v3741
        %v5466 = vmul.f32 %v3742, %v3742
        %v5467 = vadd.f32 %v5403, %v5404
        %v5468 = vadd.f32 %v5467, %v5405
        %v5469 = vadd.f32 %v5468, %v5406
        %v5470 = vadd.f32 %v5469, %v5407
        %v5471 = vadd.f32 %v5470, %v5408
        %v5472 = vadd.f32 %v5471, %v5409
        %v5473 = vadd.f32 %v5472, %v5410
        %v5474 = vadd.f32 %v5473, %v5411
        %v5475 = vadd.f32 %v5474, %v5412
        %v5476 = vadd.f32 %v5475, %v5413
        %v5477 = vadd.f32 %v5476, %v5414
        %v5478 = vadd.f32 %v5477, %v5415
        %v5479 = vadd.f32 %v5478, %v5416
        %v5480 = vadd.f32 %v5479, %v5417
        %v5481 = vadd.f32 %v5480, %v5418
        %v5482 = vadd.f32 %v5481, %v5419
        %v5483 = vadd.f32 %v5482, %v5420
        %v5484 = vadd.f32 %v5483, %v5421
        %v5485 = vadd.f32 %v5484, %v5422
        %v5486 = vadd.f32 %v5485, %v5423
        %v5487 = vadd.f32 %v5486, %v5424
        %v5488 = vadd.f32 %v5487, %v5425
        %v5489 = vadd.f32 %v5488, %v5426
        %v5490 = vadd.f32 %v5489, %v5427
        %v5491 = vadd.f32 %v5490, %v5428
        %v5492 = vadd.f32 %v5491, %v5429
        %v5493 = vadd.f32 %v5492, %v5430
        %v5494 = vadd.f32 %v5493, %v5431
        %v5495 = vadd.f32 %v5494, %v5432
        %v5496 = vadd.f32 %v5495, %v5433
        %v5497 = vadd.f32 %v5496, %v5434
        %v5498 = vadd.f32 %v5497, %v5435
        %v5499 = vadd.f32 %v5498, %v5436
        %v5500 = vadd.f32 %v5499, %v5437
        %v5501 = vadd.f32 %v5500, %v5438
        %v5502 = vadd.f32 %v5501, %v5439
        %v5503 = vadd.f32 %v5502, %v5440
        %v5504 = vadd.f32 %v5503, %v5441
        %v5505 = vadd.f32 %v5504, %v5442
        %v5506 = vadd.f32 %v5505, %v5443
        %v5507 = vadd.f32 %v5506, %v5444
        %v5508 = vadd.f32 %v5507, %v5445
        %v5509 = vadd.f32 %v5508, %v5446
        %v5510 = vadd.f32 %v5509, %v5447
        %v5511 = vadd.f32 %v5510, %v5448
        %v5512 = vadd.f32 %v5511, %v5449
        %v5513 = vadd.f32 %v5512, %v5450
        %v5514 = vadd.f32 %v5513, %v5451
        %v5515 = vadd.f32 %v5514, %v5452
        %v5516 = vadd.f32 %v5515, %v5453
        %v5517 = vadd.f32 %v5516, %v5454
        %v5518 = vadd.f32 %v5517, %v5455
        %v5519 = vadd.f32 %v5518, %v5456
        %v5520 = vadd.f32 %v5519, %v5457
        %v5521 = vadd.f32 %v5520, %v5458
        %v5522 = vadd.f32 %v5521, %v5459
        %v5523 = vadd.f32 %v5522, %v5460
        %v5524 = vadd.f32 %v5523, %v5461
        %v5525 = vadd.f32 %v5524, %v5462
        %v5526 = vadd.f32 %v5525, %v5463
        %v5527 = vadd.f32 %v5526, %v5464
        %v5528 = vadd.f32 %v5527, %v5465
        %v5529 = vadd.f32 %v5528, %v5466
        %v5530 = vrot.slane %v5529, 4
        %v5531 = vadd.f32 %v5529, %v5530
        %v5532 = vrot.slane %v5531, 2
        %v5533 = vadd.f32 %v5531, %v5532
        %v5534 = vrot.slane %v5533, 1
        %v5535 = vadd.f32 %v5533, %v5534
        %vm5536 = vcmask 1040384
        %v5537 = vsel %vm5536, %v5269, %v5402
        %vm5538 = vcmask 1041408
        %v5539 = vsel %vm5538, %v5537, %v5535
        %5540 = vst [vmem:[%s523] sm:$0x7] %v5539
        %s5541 = sand.u32 %s198, 1
        %s5542 = scalar_lea.sflag [#allocation4], %s5541
        %s5543 = sand.u32 %s198, 1
        %s5544 = smul.addr %s5543, 256
        %s5545 = scalar_lea.vmem [#allocation10], %s5544
        %s5546 = sand.u32 %s38, 1
        %s5547 = scalar_lea.sflag [#allocation12], %s5546
        %s5548 = sand.u32 %s224, 1
        %s5549 = smul.addr %s5548, 256
        %s5550 = scalar_lea.vmem [#allocation11], %s5549
        %s5551 = sand.u32 %s38, 1
        %s5552 = scalar_lea.sflag [#allocation12], %s5551
        %s5553 = sand.u32 %s250, 1
        %s5554 = smul.addr %s5553, 256
        %s5555 = scalar_lea.vmem [#allocation13], %s5554
        %s5556 = sand.u32 %s38, 1
        %s5557 = scalar_lea.sflag [#allocation15], %s5556
        %s5558 = sand.u32 %s276, 1
        %s5559 = smul.addr %s5558, 256
        %s5560 = scalar_lea.vmem [#allocation14], %s5559
        %s5561 = sand.u32 %s38, 1
        %s5562 = scalar_lea.sflag [#allocation15], %s5561
        %s5563 = sand.u32 %s302, 1
        %s5564 = smul.addr %s5563, 128
        %s5565 = scalar_lea.vmem [#allocation16], %s5564
        %p5566 = scmp.lt.s32.totalorder %s38, 1
        %s5567 = scalar_select %p5566, %s38, 1
        %s5568 = smul.addr %s5567, 4
        %s5569 = scalar_lea.vmem %s12, %s5568
        // Predicated region
        $region65: #{tpu_custom_call.1} parent=47 // pred_check
          %p5570 = pneg %p208
        $region66: #{tpu_custom_call.1} parent=47 // pred_check_branch
          %5572 = sbr.rel (%p5570) target = $region68
        $region67: #{tpu_custom_call.1} parent=47 // pred_region
          %s5573 = smul.u32 64, %s38
          %s5575 = ssub.s32 4096, 4096
          %5576 = vsyncadd %s5542, %s5575
          %s5577 = smul.addr %s5573, 64
          %s5578 = scalar_lea.hbm %s7, %s5577
          %s5579 = sshll.u32 %s5545, 4
          %s5580 = int_to_ptr.vmem [resolvable:$true] %s5579
          %5585 = dma.vmem_to_hbm [thread:$0]  %s5580, 4096, %s5578, %s5542, 64, 64, 4
        $region68: #{tpu_custom_call.1} parent=47 // pred_fallthru
          _
        // Predicated region
        $region69: #{tpu_custom_call.1} parent=47 // pred_check
          %p5586 = pneg %p234
        $region70: #{tpu_custom_call.1} parent=47 // pred_check_branch
          %5588 = sbr.rel (%p5586) target = $region72
        $region71: #{tpu_custom_call.1} parent=47 // pred_region
          %s5589 = smul.u32 64, %s38
          %s5591 = ssub.s32 4096, 4096
          %5592 = vsyncadd %s5547, %s5591
          %s5593 = smul.addr %s5589, 64
          %s5594 = scalar_lea.hbm %s8, %s5593
          %s5595 = sshll.u32 %s5550, 4
          %s5596 = int_to_ptr.vmem [resolvable:$true] %s5595
          %5601 = dma.vmem_to_hbm [thread:$0]  %s5596, 4096, %s5594, %s5547, 64, 64, 4
        $region72: #{tpu_custom_call.1} parent=47 // pred_fallthru
          _
        // Predicated region
        $region73: #{tpu_custom_call.1} parent=47 // pred_check
          %p5602 = pneg %p260
        $region74: #{tpu_custom_call.1} parent=47 // pred_check_branch
          %5604 = sbr.rel (%p5602) target = $region76
        $region75: #{tpu_custom_call.1} parent=47 // pred_region
          %s5605 = smul.u32 64, %s38
          %s5607 = ssub.s32 4096, 4096
          %5608 = vsyncadd %s5552, %s5607
          %s5609 = smul.addr %s5605, 64
          %s5610 = scalar_lea.hbm %s9, %s5609
          %s5611 = sshll.u32 %s5555, 4
          %s5612 = int_to_ptr.vmem [resolvable:$true] %s5611
          %5617 = dma.vmem_to_hbm [thread:$0]  %s5612, 4096, %s5610, %s5552, 64, 64, 4
        $region76: #{tpu_custom_call.1} parent=47 // pred_fallthru
          _
        // Predicated region
        $region77: #{tpu_custom_call.1} parent=47 // pred_check
          %p5618 = pneg %p286
        $region78: #{tpu_custom_call.1} parent=47 // pred_check_branch
          %5620 = sbr.rel (%p5618) target = $region80
        $region79: #{tpu_custom_call.1} parent=47 // pred_region
          %s5621 = smul.u32 64, %s38
          %s5623 = ssub.s32 4096, 4096
          %5624 = vsyncadd %s5557, %s5623
          %s5625 = smul.addr %s5621, 64
          %s5626 = scalar_lea.hbm %s10, %s5625
          %s5627 = sshll.u32 %s5560, 4
          %s5628 = int_to_ptr.vmem [resolvable:$true] %s5627
          %5633 = dma.vmem_to_hbm [thread:$0]  %s5628, 4096, %s5626, %s5557, 64, 64, 4
        $region80: #{tpu_custom_call.1} parent=47 // pred_fallthru
          _
        // Predicated region
        $region81: #{tpu_custom_call.1} parent=47 // pred_check
          %p5634 = pneg %p312
        $region82: #{tpu_custom_call.1} parent=47 // pred_check_branch
          %5636 = sbr.rel (%p5634) target = $region84
        $region83: #{tpu_custom_call.1} parent=47 // pred_region
          %s5638 = ssub.s32 2048, 2048
          %5639 = vsyncadd %s5562, %s5638
          %s5640 = smul.addr %s38, 16
          %s5641 = smul.addr %s5640, 128
          %s5642 = scalar_lea.hbm %s11, %s5641
          %s5643 = sshll.u32 %s5565, 4
          %s5644 = int_to_ptr.vmem [resolvable:$true] %s5643
          %5649 = dma.vmem_to_hbm [thread:$0]  %s5644, 2048, %s5642, %s5562, 128, 128, 8
        $region84: #{tpu_custom_call.1} parent=47 // pred_fallthru
          _
        // Predicated region
        $region85: #{tpu_custom_call.1} parent=47 // pred_check
          %p5650 = pneg %p338
        $region86: #{tpu_custom_call.1} parent=47 // pred_check_branch
          %5652 = sbr.rel (%p5650) target = $region88
        $region87: #{tpu_custom_call.1} parent=47 // pred_region
          _
        $region88: #{tpu_custom_call.1} parent=47 // pred_fallthru
          _
      $region48: #{tpu_custom_call.1} parent=5 // pred_fallthru
        _
      %p5653 = scmp.le.s32.totalorder 2, %s33
      // Predicated region
      $region89: #{tpu_custom_call.1} parent=5 // pred_check
        %p5654 = pneg %p5653
      $region90: #{tpu_custom_call.1} parent=5 // pred_check_branch
        %5656 = sbr.rel (%p5654) target = $region92
      $region91: #{tpu_custom_call.1} parent=5 // pred_region
        %s5657 = ssub.s32 %s33, 2
        // Predicated region
        $region93: #{tpu_custom_call.1} parent=91 // pred_check
          %p5658 = pneg %p214
        $region94: #{tpu_custom_call.1} parent=91 // pred_check_branch
          %5660 = sbr.rel (%p5658) target = $region96
        $region95: #{tpu_custom_call.1} parent=91 // pred_region
          %s5661 = sand.u32 %s199, 1
          %s5662 = scalar_lea.sflag [#allocation4], %s5661
          %s5663 = sand.u32 %s199, 1
          %s5664 = smul.addr %s5663, 256
          %s5665 = scalar_lea.vmem [#allocation10], %s5664
          %5666 = dma.done %s5662, 4096
        $region96: #{tpu_custom_call.1} parent=91 // pred_fallthru
          _
        // Predicated region
        $region97: #{tpu_custom_call.1} parent=91 // pred_check
          %p5667 = pneg %p240
        $region98: #{tpu_custom_call.1} parent=91 // pred_check_branch
          %5669 = sbr.rel (%p5667) target = $region100
        $region99: #{tpu_custom_call.1} parent=91 // pred_region
          %s5670 = sand.u32 %s39, 1
          %s5671 = scalar_lea.sflag [#allocation12], %s5670
          %s5672 = sand.u32 %s225, 1
          %s5673 = smul.addr %s5672, 256
          %s5674 = scalar_lea.vmem [#allocation11], %s5673
          %5675 = dma.done %s5671, 4096
        $region100: #{tpu_custom_call.1} parent=91 // pred_fallthru
          _
        // Predicated region
        $region101: #{tpu_custom_call.1} parent=91 // pred_check
          %p5676 = pneg %p266
        $region102: #{tpu_custom_call.1} parent=91 // pred_check_branch
          %5678 = sbr.rel (%p5676) target = $region104
        $region103: #{tpu_custom_call.1} parent=91 // pred_region
          %s5679 = sand.u32 %s39, 1
          %s5680 = scalar_lea.sflag [#allocation12], %s5679
          %s5681 = sand.u32 %s251, 1
          %s5682 = smul.addr %s5681, 256
          %s5683 = scalar_lea.vmem [#allocation13], %s5682
          %5684 = dma.done %s5680, 4096
        $region104: #{tpu_custom_call.1} parent=91 // pred_fallthru
          _
        // Predicated region
        $region105: #{tpu_custom_call.1} parent=91 // pred_check
          %p5685 = pneg %p292
        $region106: #{tpu_custom_call.1} parent=91 // pred_check_branch
          %5687 = sbr.rel (%p5685) target = $region108
        $region107: #{tpu_custom_call.1} parent=91 // pred_region
          %s5688 = sand.u32 %s39, 1
          %s5689 = scalar_lea.sflag [#allocation15], %s5688
          %s5690 = sand.u32 %s277, 1
          %s5691 = smul.addr %s5690, 256
          %s5692 = scalar_lea.vmem [#allocation14], %s5691
          %5693 = dma.done %s5689, 4096
        $region108: #{tpu_custom_call.1} parent=91 // pred_fallthru
          _
        // Predicated region
        $region109: #{tpu_custom_call.1} parent=91 // pred_check
          %p5694 = pneg %p318
        $region110: #{tpu_custom_call.1} parent=91 // pred_check_branch
          %5696 = sbr.rel (%p5694) target = $region112
        $region111: #{tpu_custom_call.1} parent=91 // pred_region
          %s5697 = sand.u32 %s39, 1
          %s5698 = scalar_lea.sflag [#allocation15], %s5697
          %s5699 = sand.u32 %s303, 1
          %s5700 = smul.addr %s5699, 128
          %s5701 = scalar_lea.vmem [#allocation16], %s5700
          %5702 = dma.done %s5698, 2048
        $region112: #{tpu_custom_call.1} parent=91 // pred_fallthru
          _
        // Predicated region
        $region113: #{tpu_custom_call.1} parent=91 // pred_check
          %p5703 = pneg %p344
        $region114: #{tpu_custom_call.1} parent=91 // pred_check_branch
          %5705 = sbr.rel (%p5703) target = $region116
        $region115: #{tpu_custom_call.1} parent=91 // pred_region
          %p5706 = scmp.lt.s32.totalorder %s39, 1
          %s5707 = scalar_select %p5706, %s39, 1
          %s5708 = smul.addr %s5707, 4
          %s5709 = scalar_lea.vmem %s12, %s5708
        $region116: #{tpu_custom_call.1} parent=91 // pred_fallthru
          _
      $region92: #{tpu_custom_call.1} parent=5 // pred_fallthru
        _
    $region6: #{tpu_custom_call.1} parent=1 // loop_footer
      %s37 = sadd.s32 1, %s33
    $region7: #{tpu_custom_call.1} parent=1 // loop_footer_branch
      %32 = sbr.rel target = $region3
    $region8: #{tpu_custom_call.1} parent=1 // loop_exit
      _
    %5710 = vsyncpa [#allocation3], 1
    %s5711 = scalar_lea.sflag [#allocation3], 1
    %5712 = vsyncpa %s5711, 1
    %5713 = vsyncpa [#allocation6], 1
    %5714 = vsyncpa [#allocation9], 1
    %5715 = vsyncpa [#allocation4], 1
    %s5716 = scalar_lea.sflag [#allocation4], 1
    %5717 = vsyncpa %s5716, 1
    %5718 = vsyncpa [#allocation12], 1
    %s5719 = scalar_lea.sflag [#allocation12], 1
    %5720 = vsyncpa %s5719, 1
    %5721 = vsyncpa [#allocation15], 1
    %s5722 = scalar_lea.sflag [#allocation15], 1
    %5723 = vsyncpa %s5722, 1

</llo_original>
